<compile_context>
chip_gen: v7x
topology: tpu7x:2x2x1
jax: 0.10.0
libtpu: 0.0.40
codegen_flags: <defaults>
</compile_context>

<pallas_src>
import functools

import jax
import jax.numpy as jnp
import numpy as np
from jax.experimental import pallas as pl
from jax.experimental.pallas import tpu as pltpu

# Channel plan of the small U-Net (encoder 8 -> 16 -> bottleneck 32).
_C1, _C2, _CB = 8, 16, 32


# ----------------------------------------------------------------------------
# Fused kernel: the whole forward for one batch element, VMEM resident.
# ----------------------------------------------------------------------------
def _fused_unet_kernel(
    # inputs
    x_ref,                                   # [H, W*Cin]    bf16
    we1_ref, we2_ref, wbt_ref,               # [3, Lin, 8W]  bf16 banded convs
    wd2u_ref, wd2s_ref, wd1u_ref, wd1s_ref,  # [3, 8W, 8W]   bf16 banded convs
    whead_ref,                               # [8W, 2W]      bf16 (1x1 head)
    wcls_ref,                                # [8W, 2]       bf16 (pool+fc)
    scale_ref, shift_ref,                    # [5, 8W]       f32 folded BN
    headb_ref,                               # [1, 2W]       f32
    clsb_ref,                                # [1, 2]        f32
    pcol1_ref, pcol2_ref,                    # [2, ., .]     bf16 col-pool sel
    prow1_ref, prow2_ref,                    # [2, ., .]     bf16 row-pool sel
    up2_ref, up1_ref,                        # [., .]        bf16 row-upsample
    # outputs
    seg_ref,                                 # [H, 2W]       f32
    cls_ref,                                 # [1, 2]        f32
    # VMEM scratch: H-halo buffers (interior stored at aligned row offset 8)
    sx, sp1, sp2, su2, se2, su1, se1,
    *, H, W):
  f32, bf16 = jnp.float32, jnp.bfloat16
  H2, H4 = H // 2, H // 4

  def put(scratch, data, h):
    # Store interior rows at aligned offset 8 and zero ONLY the two halo rows
    # the 3x3 conv reads (row 7 and row 8+h); the rest of the scratch buffer
    # is never read, so it needs no initialization.
    w = scratch.shape[1]
    scratch[7:8, :] = jnp.zeros((1, w), scratch.dtype)
    scratch[8:8 + h, :] = data
    scratch[8 + h:9 + h, :] = jnp.zeros((1, w), scratch.dtype)

  def conv3(scratch, h, wref):
    # 3x3 conv as 3 banded matmuls (one per row tap).  W taps / W padding are
    # folded into the band matrices; H padding comes from the zero halo rows.
    acc = jnp.dot(scratch[7:7 + h, :], wref[0], preferred_element_type=f32)
    acc = acc + jnp.dot(scratch[8:8 + h, :], wref[1], preferred_element_type=f32)
    acc = acc + jnp.dot(scratch[9:9 + h, :], wref[2], preferred_element_type=f32)
    return acc

  def bn_relu(acc, k):
    return jnp.maximum(acc * scale_ref[k:k + 1, :] + shift_ref[k:k + 1, :], 0.0)

  def maxpool(a, pcol, prow):
    # 2x2 / stride-2 max pool via constant 0/1 selection matmuls.
    cm = jnp.maximum(jnp.dot(a, pcol[0], preferred_element_type=f32),
                     jnp.dot(a, pcol[1], preferred_element_type=f32))
    cm = cm.astype(bf16)
    return jnp.maximum(jnp.dot(prow[0], cm, preferred_element_type=f32),
                       jnp.dot(prow[1], cm, preferred_element_type=f32))

  # ---------------- encoder ----------------
  put(sx, x_ref[...], H)
  e1 = bn_relu(conv3(sx, H, we1_ref), 0)                     # [H,  8W]
  e1b = e1.astype(bf16)
  put(se1, e1b, H)                                           # skip connection

  p1 = maxpool(e1b, pcol1_ref, prow1_ref)                    # [H2, 4W]
  put(sp1, p1.astype(bf16), H2)

  e2 = bn_relu(conv3(sp1, H2, we2_ref), 1)                   # [H2, 8W]
  e2b = e2.astype(bf16)
  put(se2, e2b, H2)                                          # skip connection

  p2 = maxpool(e2b, pcol2_ref, prow2_ref)                    # [H4, 4W]
  put(sp2, p2.astype(bf16), H4)

  bott = bn_relu(conv3(sp2, H4, wbt_ref), 2)                 # [H4, 8W]
  bottb = bott.astype(bf16)

  # ------- aux classification head (fused: avg-pool + linear) -------
  pooled = jnp.sum(bott, axis=0, keepdims=True).astype(bf16)  # [1, 8W]
  cls_ref[...] = (jnp.dot(pooled, wcls_ref[...], preferred_element_type=f32)
                  + clsb_ref[...])

  # ---------------- decoder ----------------
  # nearest 2x upsample: rows via constant matmul, columns folded into bands.
  u2 = jnp.dot(up2_ref[...], bottb, preferred_element_type=f32)   # [H2, 8W]
  put(su2, u2.astype(bf16), H2)
  d2 = bn_relu(conv3(su2, H2, wd2u_ref) + conv3(se2, H2, wd2s_ref), 3)
  d2b = d2.astype(bf16)

  u1 = jnp.dot(up1_ref[...], d2b, preferred_element_type=f32)     # [H,  8W]
  put(su1, u1.astype(bf16), H)
  d1 = bn_relu(conv3(su1, H, wd1u_ref) + conv3(se1, H, wd1s_ref), 4)

  # ---------------- segmentation 1x1 head ----------------
  seg_ref[...] = (jnp.dot(d1.astype(bf16), whead_ref[...],
                          preferred_element_type=f32) + headb_ref[...])


# ----------------------------------------------------------------------------
# Host-side constant preparation (weight folding into banded/selection mats)
# ----------------------------------------------------------------------------
def precompute_constants(params, ch_input, H, W):
  assert H % 4 == 0 and W % 4 == 0, (H, W)
  H2, H4, W2, W4 = H // 2, H // 4, W // 2, W // 4
  bf = jnp.bfloat16

  def band(w, w_out, lane_of, w_in, l_in):
    # w: [3,3,Cin,Cout].  Returns [3, l_in, w_out*Cout]: one block-banded
    # matrix per row tap dy.  Out-of-range W taps are dropped (zero padding);
    # nearest-upsampled inputs are handled via `lane_of`.
    _, _, cin, cout = w.shape
    mats = []
    for dy in range(3):
      entries = [(j, dx, lane_of(j + dx - 1))
                 for j in range(w_out) for dx in range(3)
                 if 0 <= j + dx - 1 < w_in]
      n = len(entries)
      j_a = np.array([e[0] for e in entries], np.int32)
      dx_a = np.array([e[1] for e in entries], np.int32)
      st_a = np.array([e[2] for e in entries], np.int32)
      rows = np.broadcast_to(
          st_a[:, None, None] + np.arange(cin)[None, :, None], (n, cin, cout))
      cols = np.broadcast_to(
          j_a[:, None, None] * cout + np.arange(cout)[None, None, :],
          (n, cin, cout))
      vals = w[dy][dx_a]                                       # [n, cin, cout]
      mat = jnp.zeros((l_in, w_out * cout), jnp.float32)
      mat = mat.at[rows.reshape(-1), cols.reshape(-1)].add(vals.reshape(-1))
      mats.append(mat)
    return jnp.stack(mats).astype(bf)

  c = {}
  c['we1'] = band(params['enc1']['w'], W, lambda j: ch_input * j, W, W * ch_input)
  c['we2'] = band(params['enc2']['w'], W2, lambda j: _C1 * j, W2, W2 * _C1)
  c['wbt'] = band(params['bott']['w'], W4, lambda j: _C2 * j, W4, W4 * _C2)
  # decoder convs: input = concat([upsampled, skip], channels) -> split weights
  c['wd2u'] = band(params['dec2']['w'][:, :, :_CB, :], W2,
                   lambda j: (j // 2) * _CB, W2, W4 * _CB)
  c['wd2s'] = band(params['dec2']['w'][:, :, _CB:, :], W2,
                   lambda j: _C2 * j, W2, W2 * _C2)
  c['wd1u'] = band(params['dec1']['w'][:, :, :_C2, :], W,
                   lambda j: (j // 2) * _C2, W, W2 * _C2)
  c['wd1s'] = band(params['dec1']['w'][:, :, _C2:, :], W,
                   lambda j: _C1 * j, W, W * _C1)

  # 1x1 segmentation head (block-diagonal) and avg-pool+linear aux head.
  c['whead'] = jnp.kron(jnp.eye(W, dtype=jnp.float32),
                        params['head_w']).astype(bf)              # [W*C1, 2W]
  c['wcls'] = (jnp.kron(jnp.ones((W4, 1), jnp.float32), params['cls_w'])
               / float(H4 * W4)).astype(bf)                       # [W4*CB, 2]

  # folded (eval-mode) BN per layer, tiled to the lane-dense layout.
  c['scale'] = jnp.stack([
      jnp.tile(params['enc1']['scale'], W),
      jnp.tile(params['enc2']['scale'], W2),
      jnp.tile(params['bott']['scale'], W4),
      jnp.tile(params['dec2']['scale'], W2),
      jnp.tile(params['dec1']['scale'], W)]).astype(jnp.float32)
  c['shift'] = jnp.stack([
      jnp.tile(params['enc1']['shift'], W),
      jnp.tile(params['enc2']['shift'], W2),
      jnp.tile(params['bott']['shift'], W4),
      jnp.tile(params['dec2']['shift'], W2),
      jnp.tile(params['dec1']['shift'], W)]).astype(jnp.float32)
  c['headb'] = jnp.tile(params['head_b'], W).reshape(1, 2 * W).astype(jnp.float32)
  c['clsb'] = params['cls_b'].reshape(1, 2).astype(jnp.float32)

  # 2x2 max-pool selectors and 2x nearest row-upsamplers (constant 0/1 mats).
  def col_sel(w_img, ch):
    se = np.zeros((w_img, w_img // 2), np.float32)
    so = np.zeros((w_img, w_img // 2), np.float32)
    se[2 * np.arange(w_img // 2), np.arange(w_img // 2)] = 1.0
    so[2 * np.arange(w_img // 2) + 1, np.arange(w_img // 2)] = 1.0
    eye = np.eye(ch, dtype=np.float32)
    return jnp.asarray(np.stack([np.kron(se, eye), np.kron(so, eye)]))

  def row_sel(h_img):
    re = np.zeros((h_img // 2, h_img), np.float32)
    ro = np.zeros((h_img // 2, h_img), np.float32)
    re[np.arange(h_img // 2), 2 * np.arange(h_img // 2)] = 1.0
    ro[np.arange(h_img // 2), 2 * np.arange(h_img // 2) + 1] = 1.0
    return jnp.asarray(np.stack([re, ro]))

  def up_rows(h_img):
    u = np.zeros((2 * h_img, h_img), np.float32)
    u[np.arange(2 * h_img), np.arange(2 * h_img) // 2] = 1.0
    return jnp.asarray(u)

  c['pcol1'] = col_sel(W, _C1).astype(bf)       # [2, W*C1,  W2*C1]
  c['pcol2'] = col_sel(W2, _C2).astype(bf)      # [2, W2*C2, W4*C2]
  c['prow1'] = row_sel(H).astype(bf)            # [2, H2, H]
  c['prow2'] = row_sel(H2).astype(bf)           # [2, H4, H2]
  c['up2'] = up_rows(H4).astype(bf)             # [H2, H4]
  c['up1'] = up_rows(H2).astype(bf)             # [H,  H2]
  return c


_CONST_ORDER = ('we1', 'we2', 'wbt', 'wd2u', 'wd2s', 'wd1u', 'wd1s',
                'whead', 'wcls', 'scale', 'shift', 'headb', 'clsb',
                'pcol1', 'pcol2', 'prow1', 'prow2', 'up2', 'up1')


# ----------------------------------------------------------------------------
# Forward (mirrors MultiviewNet.forward: returns (output, labels_emb))
# ----------------------------------------------------------------------------
def multiview_net_forward(x_nchw, consts):
  B, Cin, H, W = x_nchw.shape
  H2, H4, W2, W4 = H // 2, H // 4, W // 2, W // 4

  # NCHW -> lane-dense [B, H, W*Cin] bf16 (layout glue only; no padding).
  x2d = (jnp.transpose(x_nchw, (0, 2, 3, 1))
         .reshape(B, H, W * Cin).astype(jnp.bfloat16))

  const_list = [consts[k] for k in _CONST_ORDER]

  def const_spec(a):
    nd = a.ndim
    # Same block for every grid step -> stays VMEM-resident across the grid.
    return pl.BlockSpec(a.shape, lambda b, nd=nd: (0,) * nd)

  kernel = functools.partial(_fused_unet_kernel, H=H, W=W)
  seg, cls = pl.pallas_call(
      kernel,
      out_shape=(jax.ShapeDtypeStruct((B, H, 2 * W), jnp.float32),
                 jax.ShapeDtypeStruct((B, 1, 2), jnp.float32)),
      grid=(B,),
      in_specs=[pl.BlockSpec((None, H, W * Cin), lambda b: (b, 0, 0))]
               + [const_spec(a) for a in const_list],
      out_specs=[pl.BlockSpec((None, H, 2 * W), lambda b: (b, 0, 0)),
                 pl.BlockSpec((None, 1, 2), lambda b: (b, 0, 0))],
      scratch_shapes=[
          pltpu.VMEM((H + 16, W * Cin), jnp.bfloat16),     # sx  (input halo)
          pltpu.VMEM((H2 + 16, W2 * _C1), jnp.bfloat16),   # sp1
          pltpu.VMEM((H4 + 16, W4 * _C2), jnp.bfloat16),   # sp2
          pltpu.VMEM((H2 + 16, W4 * _CB), jnp.bfloat16),   # su2
          pltpu.VMEM((H2 + 16, W2 * _C2), jnp.bfloat16),   # se2
          pltpu.VMEM((H + 16, W2 * _C2), jnp.bfloat16),    # su1
          pltpu.VMEM((H + 16, W * _C1), jnp.bfloat16),     # se1
      ],
      compiler_params=pltpu.CompilerParams(
          dimension_semantics=("parallel",)),
  )(x2d, *const_list)

  output = jnp.transpose(seg.reshape(B, H, W, 2), (0, 3, 1, 2))   # NCHW
  labels_emb = cls.reshape(B, 2)
  return output, labels_emb


# ----------------------------------------------------------------------------
# Parameters (deterministic, synthetic; conv bias + eval-mode BN folded)
# ----------------------------------------------------------------------------
def init_params(key, ch_input, classes=2):
  def conv_block(k, cin, cout):
    k1, k2, k3 = jax.random.split(k, 3)
    return dict(
        w=jax.random.normal(k1, (3, 3, cin, cout), jnp.float32)
          * (1.0 / jnp.sqrt(9.0 * cin)),
        scale=1.0 + 0.1 * jax.random.normal(k2, (cout,), jnp.float32),
        shift=0.1 * jax.random.normal(k3, (cout,), jnp.float32),
    )

  ks = jax.random.split(key, 8)
  return dict(
      enc1=conv_block(ks[0], ch_input, _C1),
      enc2=conv_block(ks[1], _C1, _C2),
      bott=conv_block(ks[2], _C2, _CB),
      dec2=conv_block(ks[3], _CB + _C2, _C2),
      dec1=conv_block(ks[4], _C2 + _C1, _C1),
      head_w=jax.random.normal(ks[5], (_C1, classes), jnp.float32)
             * (1.0 / jnp.sqrt(float(_C1))),
      head_b=0.01 * jax.random.normal(ks[6], (classes,), jnp.float32),
      cls_w=jax.random.normal(ks[7], (_CB, classes), jnp.float32)
            * (1.0 / jnp.sqrt(float(_CB))),
      cls_b=jnp.zeros((classes,), jnp.float32),
  )


# ----------------------------------------------------------------------------
# Pure-JAX f32 reference of the same net (sanity check only)
# ----------------------------------------------------------------------------
def _reference_forward(x_nchw, params):
  x = jnp.transpose(x_nchw, (0, 2, 3, 1)).astype(jnp.float32)

  def conv_bn_relu(a, p):
    b, h, w, _ = a.shape
    co = p['w'].shape[-1]
    ap = jnp.pad(a, ((0, 0), (1, 1), (1, 1), (0, 0)))
    acc = jnp.zeros((b, h, w, co), jnp.float32)
    for dy in range(3):
      for dx in range(3):
        acc += jnp.einsum('bhwc,cd->bhwd',
                          ap[:, dy:dy + h, dx:dx + w, :], p['w'][dy, dx])
    return jnp.maximum(acc * p['scale'] + p['shift'], 0.0)

  def pool(a):
    b, h, w, cc = a.shape
    return jnp.max(a.reshape(b, h // 2, 2, w // 2, 2, cc), axis=(2, 4))

  def up(a):
    return jnp.repeat(jnp.repeat(a, 2, axis=1), 2, axis=2)

  e1 = conv_bn_relu(x, params['enc1'])
  e2 = conv_bn_relu(pool(e1), params['enc2'])
  bt = conv_bn_relu(pool(e2), params['bott'])
  labels = jnp.mean(bt, axis=(1, 2)) @ params['cls_w'] + params['cls_b']
  d2 = conv_bn_relu(jnp.concatenate([up(bt), e2], -1), params['dec2'])
  d1 = conv_bn_relu(jnp.concatenate([up(d2), e1], -1), params['dec1'])
  seg = jnp.einsum('bhwc,cd->bhwd', d1, params['head_w']) + params['head_b']
  return jnp.transpose(seg, (0, 3, 1, 2)), labels


if __name__ == "__main__":
  B, C_IN, H, W = 2, 4, 16, 16
  key = jax.random.PRNGKey(0)
  kx, kp = jax.random.split(key)
  x = jax.random.normal(kx, (B, C_IN, H, W), jnp.float32)
  params = init_params(kp, C_IN)
  consts = precompute_constants(params, C_IN, H, W)

  fwd = jax.jit(multiview_net_forward)
  output, labels_emb = fwd(x, consts)
  output = jax.block_until_ready(output)
  labels_emb = jax.block_until_ready(labels_emb)

  assert output.shape == (B, 2, H, W), output.shape
  assert labels_emb.shape == (B, 2), labels_emb.shape
  assert bool(jnp.all(jnp.isfinite(output)))
  assert bool(jnp.all(jnp.isfinite(labels_emb)))

  # Sanity check against a plain-JAX f32 reference of the same net
  # (tolerance accounts for bf16 matmul operands inside the kernel).
  ref_out, ref_lab = jax.jit(_reference_forward)(x, params)
  tol_o = 0.05 * float(jnp.max(jnp.abs(ref_out))) + 0.05
  tol_l = 0.05 * float(jnp.max(jnp.abs(ref_lab))) + 0.05
  err_o = float(jnp.max(jnp.abs(output - ref_out)))
  err_l = float(jnp.max(jnp.abs(labels_emb - ref_lab)))
  assert err_o < tol_o, ("segmentation mismatch", err_o, tol_o)
  assert err_l < tol_l, ("labels mismatch", err_l, tol_l)

  print("KERNEL_OK")
</pallas_src>

<mosaic_0001>
module attributes {stable_mosaic.version = 11 : i64} {
  func.func @_fused_unet_kernel(%arg0: i32, %arg1: memref<1x16x64xbf16, #tpu.memory_space<vmem>>, %arg2: memref<3x64x128xbf16, #tpu.memory_space<vmem>>, %arg3: memref<3x64x128xbf16, #tpu.memory_space<vmem>>, %arg4: memref<3x64x128xbf16, #tpu.memory_space<vmem>>, %arg5: memref<3x128x128xbf16, #tpu.memory_space<vmem>>, %arg6: memref<3x128x128xbf16, #tpu.memory_space<vmem>>, %arg7: memref<3x128x128xbf16, #tpu.memory_space<vmem>>, %arg8: memref<3x128x128xbf16, #tpu.memory_space<vmem>>, %arg9: memref<128x32xbf16, #tpu.memory_space<vmem>>, %arg10: memref<128x2xbf16, #tpu.memory_space<vmem>>, %arg11: memref<5x128xf32, #tpu.memory_space<vmem>>, %arg12: memref<5x128xf32, #tpu.memory_space<vmem>>, %arg13: memref<1x32xf32, #tpu.memory_space<vmem>>, %arg14: memref<1x2xf32, #tpu.memory_space<vmem>>, %arg15: memref<2x128x64xbf16, #tpu.memory_space<vmem>>, %arg16: memref<2x128x64xbf16, #tpu.memory_space<vmem>>, %arg17: memref<2x8x16xbf16, #tpu.memory_space<vmem>>, %arg18: memref<2x4x8xbf16, #tpu.memory_space<vmem>>, %arg19: memref<8x4xbf16, #tpu.memory_space<vmem>>, %arg20: memref<16x8xbf16, #tpu.memory_space<vmem>>, %arg21: memref<1x16x32xf32, #tpu.memory_space<vmem>>, %arg22: memref<1x1x2xf32, #tpu.memory_space<vmem>>, %arg23: memref<32x64xbf16, #tpu.memory_space<vmem>>, %arg24: memref<24x64xbf16, #tpu.memory_space<vmem>>, %arg25: memref<20x64xbf16, #tpu.memory_space<vmem>>, %arg26: memref<24x128xbf16, #tpu.memory_space<vmem>>, %arg27: memref<24x128xbf16, #tpu.memory_space<vmem>>, %arg28: memref<32x128xbf16, #tpu.memory_space<vmem>>, %arg29: memref<32x128xbf16, #tpu.memory_space<vmem>>) attributes {dimension_semantics = [#tpu.dimension_semantics<parallel>], iteration_bounds = array<i64: 2>, scalar_prefetch = 0 : i64, scratch_operands = 7 : i64, tpu.core_type = #tpu.core_type<tc>, window_params = [{transform_indices = @transform_0, window_bounds = array<i64: 1, 16, 64>}, {pipeline_mode = #tpu.pipeline_mode<synchronous>, transform_indices = @transform_1, window_bounds = array<i64: 3, 64, 128>}, {pipeline_mode = #tpu.pipeline_mode<synchronous>, transform_indices = @transform_2, window_bounds = array<i64: 3, 64, 128>}, {pipeline_mode = #tpu.pipeline_mode<synchronous>, transform_indices = @transform_3, window_bounds = array<i64: 3, 64, 128>}, {pipeline_mode = #tpu.pipeline_mode<synchronous>, transform_indices = @transform_4, window_bounds = array<i64: 3, 128, 128>}, {pipeline_mode = #tpu.pipeline_mode<synchronous>, transform_indices = @transform_5, window_bounds = array<i64: 3, 128, 128>}, {pipeline_mode = #tpu.pipeline_mode<synchronous>, transform_indices = @transform_6, window_bounds = array<i64: 3, 128, 128>}, {pipeline_mode = #tpu.pipeline_mode<synchronous>, transform_indices = @transform_7, window_bounds = array<i64: 3, 128, 128>}, {pipeline_mode = #tpu.pipeline_mode<synchronous>, transform_indices = @transform_8, window_bounds = array<i64: 128, 32>}, {pipeline_mode = #tpu.pipeline_mode<synchronous>, transform_indices = @transform_9, window_bounds = array<i64: 128, 2>}, {pipeline_mode = #tpu.pipeline_mode<synchronous>, transform_indices = @transform_10, window_bounds = array<i64: 5, 128>}, {pipeline_mode = #tpu.pipeline_mode<synchronous>, transform_indices = @transform_11, window_bounds = array<i64: 5, 128>}, {pipeline_mode = #tpu.pipeline_mode<synchronous>, transform_indices = @transform_12, window_bounds = array<i64: 1, 32>}, {pipeline_mode = #tpu.pipeline_mode<synchronous>, transform_indices = @transform_13, window_bounds = array<i64: 1, 2>}, {pipeline_mode = #tpu.pipeline_mode<synchronous>, transform_indices = @transform_14, window_bounds = array<i64: 2, 128, 64>}, {pipeline_mode = #tpu.pipeline_mode<synchronous>, transform_indices = @transform_15, window_bounds = array<i64: 2, 128, 64>}, {pipeline_mode = #tpu.pipeline_mode<synchronous>, transform_indices = @transform_16, window_bounds = array<i64: 2, 8, 16>}, {pipeline_mode = #tpu.pipeline_mode<synchronous>, transform_indices = @transform_17, window_bounds = array<i64: 2, 4, 8>}, {pipeline_mode = #tpu.pipeline_mode<synchronous>, transform_indices = @transform_18, window_bounds = array<i64: 8, 4>}, {pipeline_mode = #tpu.pipeline_mode<synchronous>, transform_indices = @transform_19, window_bounds = array<i64: 16, 8>}, {transform_indices = @transform_20, window_bounds = array<i64: 1, 16, 32>}, {transform_indices = @transform_21, window_bounds = array<i64: 1, 1, 2>}]} {
    %c0 = arith.constant 0 : index
    %c0_0 = arith.constant 0 : index
    %c0_1 = arith.constant 0 : index
    %0 = vector.load %arg1[%c0, %c0_0, %c0_1] : memref<1x16x64xbf16, #tpu.memory_space<vmem>>, vector<1x16x64xbf16>
    %1 = vector.shape_cast %0 : vector<1x16x64xbf16> to vector<16x64xbf16>
    %cst = arith.constant 0.000000e+00 : bf16
    %2 = vector.broadcast %cst : bf16 to vector<1x64xbf16>
    %c7 = arith.constant 7 : index
    %c0_2 = arith.constant 0 : index
    %3 = vector.load %arg23[%c7, %c0_2] : memref<32x64xbf16, #tpu.memory_space<vmem>>, vector<1x64xbf16>
    tpu.vector_store %arg23[%c7, %c0_2], %2 {strides = array<i32>} : memref<32x64xbf16, #tpu.memory_space<vmem>>, vector<1x64xbf16>,
    %c8 = arith.constant 8 : index
    %c0_3 = arith.constant 0 : index
    %4 = vector.load %arg23[%c8, %c0_3] : memref<32x64xbf16, #tpu.memory_space<vmem>>, vector<16x64xbf16>
    tpu.vector_store %arg23[%c8, %c0_3], %1 {strides = array<i32>} : memref<32x64xbf16, #tpu.memory_space<vmem>>, vector<16x64xbf16>,
    %cst_4 = arith.constant 0.000000e+00 : bf16
    %5 = vector.broadcast %cst_4 : bf16 to vector<1x64xbf16>
    %c24 = arith.constant 24 : index
    %c0_5 = arith.constant 0 : index
    %6 = vector.load %arg23[%c24, %c0_5] : memref<32x64xbf16, #tpu.memory_space<vmem>>, vector<1x64xbf16>
    tpu.vector_store %arg23[%c24, %c0_5], %5 {strides = array<i32>} : memref<32x64xbf16, #tpu.memory_space<vmem>>, vector<1x64xbf16>,
    %c7_6 = arith.constant 7 : index
    %c0_7 = arith.constant 0 : index
    %7 = vector.load %arg23[%c7_6, %c0_7] : memref<32x64xbf16, #tpu.memory_space<vmem>>, vector<16x64xbf16>
    %c0_8 = arith.constant 0 : index
    %c0_9 = arith.constant 0 : index
    %c0_10 = arith.constant 0 : index
    %8 = vector.load %arg2[%c0_8, %c0_9, %c0_10] : memref<3x64x128xbf16, #tpu.memory_space<vmem>>, vector<1x64x128xbf16>
    %9 = vector.shape_cast %8 : vector<1x64x128xbf16> to vector<64x128xbf16>
    %cst_11 = arith.constant dense<0.000000e+00> : vector<16x128xf32>
    %10 = tpu.matmul %7, %9, %cst_11 {dimension_numbers = #tpu.dot_dimension_numbers<[1], [0], [0], [1], [0, 0, 1, 1], [], []>} : vector<16x64xbf16>, vector<64x128xbf16>, vector<16x128xf32> -> vector<16x128xf32>
    %c8_12 = arith.constant 8 : index
    %c0_13 = arith.constant 0 : index
    %11 = vector.load %arg23[%c8_12, %c0_13] : memref<32x64xbf16, #tpu.memory_space<vmem>>, vector<16x64xbf16>
    %c1 = arith.constant 1 : index
    %c0_14 = arith.constant 0 : index
    %c0_15 = arith.constant 0 : index
    %12 = vector.load %arg2[%c1, %c0_14, %c0_15] : memref<3x64x128xbf16, #tpu.memory_space<vmem>>, vector<1x64x128xbf16>
    %13 = vector.shape_cast %12 : vector<1x64x128xbf16> to vector<64x128xbf16>
    %cst_16 = arith.constant dense<0.000000e+00> : vector<16x128xf32>
    %14 = tpu.matmul %11, %13, %cst_16 {dimension_numbers = #tpu.dot_dimension_numbers<[1], [0], [0], [1], [0, 0, 1, 1], [], []>} : vector<16x64xbf16>, vector<64x128xbf16>, vector<16x128xf32> -> vector<16x128xf32>
    %15 = arith.addf %10, %14 : vector<16x128xf32>
    %c9 = arith.constant 9 : index
    %c0_17 = arith.constant 0 : index
    %16 = vector.load %arg23[%c9, %c0_17] : memref<32x64xbf16, #tpu.memory_space<vmem>>, vector<16x64xbf16>
    %c2 = arith.constant 2 : index
    %c0_18 = arith.constant 0 : index
    %c0_19 = arith.constant 0 : index
    %17 = vector.load %arg2[%c2, %c0_18, %c0_19] : memref<3x64x128xbf16, #tpu.memory_space<vmem>>, vector<1x64x128xbf16>
    %18 = vector.shape_cast %17 : vector<1x64x128xbf16> to vector<64x128xbf16>
    %cst_20 = arith.constant dense<0.000000e+00> : vector<16x128xf32>
    %19 = tpu.matmul %16, %18, %cst_20 {dimension_numbers = #tpu.dot_dimension_numbers<[1], [0], [0], [1], [0, 0, 1, 1], [], []>} : vector<16x64xbf16>, vector<64x128xbf16>, vector<16x128xf32> -> vector<16x128xf32>
    %20 = arith.addf %15, %19 : vector<16x128xf32>
    %c0_21 = arith.constant 0 : index
    %c0_22 = arith.constant 0 : index
    %21 = vector.load %arg11[%c0_21, %c0_22] : memref<5x128xf32, #tpu.memory_space<vmem>>, vector<1x128xf32>
    %22 = vector.broadcast %21 : vector<1x128xf32> to vector<16x128xf32>
    %23 = arith.mulf %20, %22 : vector<16x128xf32>
    %c0_23 = arith.constant 0 : index
    %c0_24 = arith.constant 0 : index
    %24 = vector.load %arg12[%c0_23, %c0_24] : memref<5x128xf32, #tpu.memory_space<vmem>>, vector<1x128xf32>
    %25 = vector.broadcast %24 : vector<1x128xf32> to vector<16x128xf32>
    %26 = arith.addf %23, %25 : vector<16x128xf32>
    %cst_25 = arith.constant 0.000000e+00 : f32
    %27 = vector.broadcast %cst_25 : f32 to vector<16x128xf32>
    %28 = arith.maximumf %26, %27 : vector<16x128xf32>
    %29 = arith.truncf %28 : vector<16x128xf32> to vector<16x128xbf16>
    %cst_26 = arith.constant 0.000000e+00 : bf16
    %30 = vector.broadcast %cst_26 : bf16 to vector<1x128xbf16>
    %c7_27 = arith.constant 7 : index
    %c0_28 = arith.constant 0 : index
    %31 = vector.load %arg29[%c7_27, %c0_28] : memref<32x128xbf16, #tpu.memory_space<vmem>>, vector<1x128xbf16>
    tpu.vector_store %arg29[%c7_27, %c0_28], %30 {strides = array<i32>} : memref<32x128xbf16, #tpu.memory_space<vmem>>, vector<1x128xbf16>,
    %c8_29 = arith.constant 8 : index
    %c0_30 = arith.constant 0 : index
    %32 = vector.load %arg29[%c8_29, %c0_30] : memref<32x128xbf16, #tpu.memory_space<vmem>>, vector<16x128xbf16>
    tpu.vector_store %arg29[%c8_29, %c0_30], %29 {strides = array<i32>} : memref<32x128xbf16, #tpu.memory_space<vmem>>, vector<16x128xbf16>,
    %cst_31 = arith.constant 0.000000e+00 : bf16
    %33 = vector.broadcast %cst_31 : bf16 to vector<1x128xbf16>
    %c24_32 = arith.constant 24 : index
    %c0_33 = arith.constant 0 : index
    %34 = vector.load %arg29[%c24_32, %c0_33] : memref<32x128xbf16, #tpu.memory_space<vmem>>, vector<1x128xbf16>
    tpu.vector_store %arg29[%c24_32, %c0_33], %33 {strides = array<i32>} : memref<32x128xbf16, #tpu.memory_space<vmem>>, vector<1x128xbf16>,
    %c0_34 = arith.constant 0 : index
    %c0_35 = arith.constant 0 : index
    %c0_36 = arith.constant 0 : index
    %35 = vector.load %arg15[%c0_34, %c0_35, %c0_36] : memref<2x128x64xbf16, #tpu.memory_space<vmem>>, vector<1x128x64xbf16>
    %36 = vector.shape_cast %35 : vector<1x128x64xbf16> to vector<128x64xbf16>
    %cst_37 = arith.constant dense<0.000000e+00> : vector<16x64xf32>
    %37 = tpu.matmul %29, %36, %cst_37 {dimension_numbers = #tpu.dot_dimension_numbers<[1], [0], [0], [1], [0, 0, 1, 1], [], []>} : vector<16x128xbf16>, vector<128x64xbf16>, vector<16x64xf32> -> vector<16x64xf32>
    %c1_38 = arith.constant 1 : index
    %c0_39 = arith.constant 0 : index
    %c0_40 = arith.constant 0 : index
    %38 = vector.load %arg15[%c1_38, %c0_39, %c0_40] : memref<2x128x64xbf16, #tpu.memory_space<vmem>>, vector<1x128x64xbf16>
    %39 = vector.shape_cast %38 : vector<1x128x64xbf16> to vector<128x64xbf16>
    %cst_41 = arith.constant dense<0.000000e+00> : vector<16x64xf32>
    %40 = tpu.matmul %29, %39, %cst_41 {dimension_numbers = #tpu.dot_dimension_numbers<[1], [0], [0], [1], [0, 0, 1, 1], [], []>} : vector<16x128xbf16>, vector<128x64xbf16>, vector<16x64xf32> -> vector<16x64xf32>
    %41 = arith.maximumf %37, %40 : vector<16x64xf32>
    %42 = arith.truncf %41 : vector<16x64xf32> to vector<16x64xbf16>
    %c0_42 = arith.constant 0 : index
    %c0_43 = arith.constant 0 : index
    %c0_44 = arith.constant 0 : index
    %43 = vector.load %arg17[%c0_42, %c0_43, %c0_44] : memref<2x8x16xbf16, #tpu.memory_space<vmem>>, vector<1x8x16xbf16>
    %44 = vector.shape_cast %43 : vector<1x8x16xbf16> to vector<8x16xbf16>
    %cst_45 = arith.constant dense<0.000000e+00> : vector<8x64xf32>
    %45 = tpu.matmul %44, %42, %cst_45 {dimension_numbers = #tpu.dot_dimension_numbers<[1], [0], [0], [1], [0, 0, 1, 1], [], []>} : vector<8x16xbf16>, vector<16x64xbf16>, vector<8x64xf32> -> vector<8x64xf32>
    %c1_46 = arith.constant 1 : index
    %c0_47 = arith.constant 0 : index
    %c0_48 = arith.constant 0 : index
    %46 = vector.load %arg17[%c1_46, %c0_47, %c0_48] : memref<2x8x16xbf16, #tpu.memory_space<vmem>>, vector<1x8x16xbf16>
    %47 = vector.shape_cast %46 : vector<1x8x16xbf16> to vector<8x16xbf16>
    %cst_49 = arith.constant dense<0.000000e+00> : vector<8x64xf32>
    %48 = tpu.matmul %47, %42, %cst_49 {dimension_numbers = #tpu.dot_dimension_numbers<[1], [0], [0], [1], [0, 0, 1, 1], [], []>} : vector<8x16xbf16>, vector<16x64xbf16>, vector<8x64xf32> -> vector<8x64xf32>
    %49 = arith.maximumf %45, %48 : vector<8x64xf32>
    %50 = arith.truncf %49 : vector<8x64xf32> to vector<8x64xbf16>
    %cst_50 = arith.constant 0.000000e+00 : bf16
    %51 = vector.broadcast %cst_50 : bf16 to vector<1x64xbf16>
    %c7_51 = arith.constant 7 : index
    %c0_52 = arith.constant 0 : index
    %52 = vector.load %arg24[%c7_51, %c0_52] : memref<24x64xbf16, #tpu.memory_space<vmem>>, vector<1x64xbf16>
    tpu.vector_store %arg24[%c7_51, %c0_52], %51 {strides = array<i32>} : memref<24x64xbf16, #tpu.memory_space<vmem>>, vector<1x64xbf16>,
    %c8_53 = arith.constant 8 : index
    %c0_54 = arith.constant 0 : index
    %53 = vector.load %arg24[%c8_53, %c0_54] : memref<24x64xbf16, #tpu.memory_space<vmem>>, vector<8x64xbf16>
    tpu.vector_store %arg24[%c8_53, %c0_54], %50 {strides = array<i32>} : memref<24x64xbf16, #tpu.memory_space<vmem>>, vector<8x64xbf16>,
    %cst_55 = arith.constant 0.000000e+00 : bf16
    %54 = vector.broadcast %cst_55 : bf16 to vector<1x64xbf16>
    %c16 = arith.constant 16 : index
    %c0_56 = arith.constant 0 : index
    %55 = vector.load %arg24[%c16, %c0_56] : memref<24x64xbf16, #tpu.memory_space<vmem>>, vector<1x64xbf16>
    tpu.vector_store %arg24[%c16, %c0_56], %54 {strides = array<i32>} : memref<24x64xbf16, #tpu.memory_space<vmem>>, vector<1x64xbf16>,
    %c7_57 = arith.constant 7 : index
    %c0_58 = arith.constant 0 : index
    %56 = vector.load %arg24[%c7_57, %c0_58] : memref<24x64xbf16, #tpu.memory_space<vmem>>, vector<8x64xbf16>
    %c0_59 = arith.constant 0 : index
    %c0_60 = arith.constant 0 : index
    %c0_61 = arith.constant 0 : index
    %57 = vector.load %arg3[%c0_59, %c0_60, %c0_61] : memref<3x64x128xbf16, #tpu.memory_space<vmem>>, vector<1x64x128xbf16>
    %58 = vector.shape_cast %57 : vector<1x64x128xbf16> to vector<64x128xbf16>
    %cst_62 = arith.constant dense<0.000000e+00> : vector<8x128xf32>
    %59 = tpu.matmul %56, %58, %cst_62 {dimension_numbers = #tpu.dot_dimension_numbers<[1], [0], [0], [1], [0, 0, 1, 1], [], []>} : vector<8x64xbf16>, vector<64x128xbf16>, vector<8x128xf32> -> vector<8x128xf32>
    %c8_63 = arith.constant 8 : index
    %c0_64 = arith.constant 0 : index
    %60 = vector.load %arg24[%c8_63, %c0_64] : memref<24x64xbf16, #tpu.memory_space<vmem>>, vector<8x64xbf16>
    %c1_65 = arith.constant 1 : index
    %c0_66 = arith.constant 0 : index
    %c0_67 = arith.constant 0 : index
    %61 = vector.load %arg3[%c1_65, %c0_66, %c0_67] : memref<3x64x128xbf16, #tpu.memory_space<vmem>>, vector<1x64x128xbf16>
    %62 = vector.shape_cast %61 : vector<1x64x128xbf16> to vector<64x128xbf16>
    %cst_68 = arith.constant dense<0.000000e+00> : vector<8x128xf32>
    %63 = tpu.matmul %60, %62, %cst_68 {dimension_numbers = #tpu.dot_dimension_numbers<[1], [0], [0], [1], [0, 0, 1, 1], [], []>} : vector<8x64xbf16>, vector<64x128xbf16>, vector<8x128xf32> -> vector<8x128xf32>
    %64 = arith.addf %59, %63 : vector<8x128xf32>
    %c9_69 = arith.constant 9 : index
    %c0_70 = arith.constant 0 : index
    %65 = vector.load %arg24[%c9_69, %c0_70] : memref<24x64xbf16, #tpu.memory_space<vmem>>, vector<8x64xbf16>
    %c2_71 = arith.constant 2 : index
    %c0_72 = arith.constant 0 : index
    %c0_73 = arith.constant 0 : index
    %66 = vector.load %arg3[%c2_71, %c0_72, %c0_73] : memref<3x64x128xbf16, #tpu.memory_space<vmem>>, vector<1x64x128xbf16>
    %67 = vector.shape_cast %66 : vector<1x64x128xbf16> to vector<64x128xbf16>
    %cst_74 = arith.constant dense<0.000000e+00> : vector<8x128xf32>
    %68 = tpu.matmul %65, %67, %cst_74 {dimension_numbers = #tpu.dot_dimension_numbers<[1], [0], [0], [1], [0, 0, 1, 1], [], []>} : vector<8x64xbf16>, vector<64x128xbf16>, vector<8x128xf32> -> vector<8x128xf32>
    %69 = arith.addf %64, %68 : vector<8x128xf32>
    %c1_75 = arith.constant 1 : index
    %c0_76 = arith.constant 0 : index
    %70 = vector.load %arg11[%c1_75, %c0_76] : memref<5x128xf32, #tpu.memory_space<vmem>>, vector<1x128xf32>
    %71 = vector.broadcast %70 : vector<1x128xf32> to vector<8x128xf32>
    %72 = arith.mulf %69, %71 : vector<8x128xf32>
    %c1_77 = arith.constant 1 : index
    %c0_78 = arith.constant 0 : index
    %73 = vector.load %arg12[%c1_77, %c0_78] : memref<5x128xf32, #tpu.memory_space<vmem>>, vector<1x128xf32>
    %74 = vector.broadcast %73 : vector<1x128xf32> to vector<8x128xf32>
    %75 = arith.addf %72, %74 : vector<8x128xf32>
    %cst_79 = arith.constant 0.000000e+00 : f32
    %76 = vector.broadcast %cst_79 : f32 to vector<8x128xf32>
    %77 = arith.maximumf %75, %76 : vector<8x128xf32>
    %78 = arith.truncf %77 : vector<8x128xf32> to vector<8x128xbf16>
    %cst_80 = arith.constant 0.000000e+00 : bf16
    %79 = vector.broadcast %cst_80 : bf16 to vector<1x128xbf16>
    %c7_81 = arith.constant 7 : index
    %c0_82 = arith.constant 0 : index
    %80 = vector.load %arg27[%c7_81, %c0_82] : memref<24x128xbf16, #tpu.memory_space<vmem>>, vector<1x128xbf16>
    tpu.vector_store %arg27[%c7_81, %c0_82], %79 {strides = array<i32>} : memref<24x128xbf16, #tpu.memory_space<vmem>>, vector<1x128xbf16>,
    %c8_83 = arith.constant 8 : index
    %c0_84 = arith.constant 0 : index
    %81 = vector.load %arg27[%c8_83, %c0_84] : memref<24x128xbf16, #tpu.memory_space<vmem>>, vector<8x128xbf16>
    tpu.vector_store %arg27[%c8_83, %c0_84], %78 {strides = array<i32>} : memref<24x128xbf16, #tpu.memory_space<vmem>>, vector<8x128xbf16>,
    %cst_85 = arith.constant 0.000000e+00 : bf16
    %82 = vector.broadcast %cst_85 : bf16 to vector<1x128xbf16>
    %c16_86 = arith.constant 16 : index
    %c0_87 = arith.constant 0 : index
    %83 = vector.load %arg27[%c16_86, %c0_87] : memref<24x128xbf16, #tpu.memory_space<vmem>>, vector<1x128xbf16>
    tpu.vector_store %arg27[%c16_86, %c0_87], %82 {strides = array<i32>} : memref<24x128xbf16, #tpu.memory_space<vmem>>, vector<1x128xbf16>,
    %c0_88 = arith.constant 0 : index
    %c0_89 = arith.constant 0 : index
    %c0_90 = arith.constant 0 : index
    %84 = vector.load %arg16[%c0_88, %c0_89, %c0_90] : memref<2x128x64xbf16, #tpu.memory_space<vmem>>, vector<1x128x64xbf16>
    %85 = vector.shape_cast %84 : vector<1x128x64xbf16> to vector<128x64xbf16>
    %cst_91 = arith.constant dense<0.000000e+00> : vector<8x64xf32>
    %86 = tpu.matmul %78, %85, %cst_91 {dimension_numbers = #tpu.dot_dimension_numbers<[1], [0], [0], [1], [0, 0, 1, 1], [], []>} : vector<8x128xbf16>, vector<128x64xbf16>, vector<8x64xf32> -> vector<8x64xf32>
    %c1_92 = arith.constant 1 : index
    %c0_93 = arith.constant 0 : index
    %c0_94 = arith.constant 0 : index
    %87 = vector.load %arg16[%c1_92, %c0_93, %c0_94] : memref<2x128x64xbf16, #tpu.memory_space<vmem>>, vector<1x128x64xbf16>
    %88 = vector.shape_cast %87 : vector<1x128x64xbf16> to vector<128x64xbf16>
    %cst_95 = arith.constant dense<0.000000e+00> : vector<8x64xf32>
    %89 = tpu.matmul %78, %88, %cst_95 {dimension_numbers = #tpu.dot_dimension_numbers<[1], [0], [0], [1], [0, 0, 1, 1], [], []>} : vector<8x128xbf16>, vector<128x64xbf16>, vector<8x64xf32> -> vector<8x64xf32>
    %90 = arith.maximumf %86, %89 : vector<8x64xf32>
    %91 = arith.truncf %90 : vector<8x64xf32> to vector<8x64xbf16>
    %c0_96 = arith.constant 0 : index
    %c0_97 = arith.constant 0 : index
    %c0_98 = arith.constant 0 : index
    %92 = vector.load %arg18[%c0_96, %c0_97, %c0_98] : memref<2x4x8xbf16, #tpu.memory_space<vmem>>, vector<1x4x8xbf16>
    %93 = vector.shape_cast %92 : vector<1x4x8xbf16> to vector<4x8xbf16>
    %cst_99 = arith.constant dense<0.000000e+00> : vector<4x64xf32>
    %94 = tpu.matmul %93, %91, %cst_99 {dimension_numbers = #tpu.dot_dimension_numbers<[1], [0], [0], [1], [0, 0, 1, 1], [], []>} : vector<4x8xbf16>, vector<8x64xbf16>, vector<4x64xf32> -> vector<4x64xf32>
    %c1_100 = arith.constant 1 : index
    %c0_101 = arith.constant 0 : index
    %c0_102 = arith.constant 0 : index
    %95 = vector.load %arg18[%c1_100, %c0_101, %c0_102] : memref<2x4x8xbf16, #tpu.memory_space<vmem>>, vector<1x4x8xbf16>
    %96 = vector.shape_cast %95 : vector<1x4x8xbf16> to vector<4x8xbf16>
    %cst_103 = arith.constant dense<0.000000e+00> : vector<4x64xf32>
    %97 = tpu.matmul %96, %91, %cst_103 {dimension_numbers = #tpu.dot_dimension_numbers<[1], [0], [0], [1], [0, 0, 1, 1], [], []>} : vector<4x8xbf16>, vector<8x64xbf16>, vector<4x64xf32> -> vector<4x64xf32>
    %98 = arith.maximumf %94, %97 : vector<4x64xf32>
    %99 = arith.truncf %98 : vector<4x64xf32> to vector<4x64xbf16>
    %cst_104 = arith.constant 0.000000e+00 : bf16
    %100 = vector.broadcast %cst_104 : bf16 to vector<1x64xbf16>
    %c7_105 = arith.constant 7 : index
    %c0_106 = arith.constant 0 : index
    %101 = vector.load %arg25[%c7_105, %c0_106] : memref<20x64xbf16, #tpu.memory_space<vmem>>, vector<1x64xbf16>
    tpu.vector_store %arg25[%c7_105, %c0_106], %100 {strides = array<i32>} : memref<20x64xbf16, #tpu.memory_space<vmem>>, vector<1x64xbf16>,
    %c8_107 = arith.constant 8 : index
    %c0_108 = arith.constant 0 : index
    %102 = vector.load %arg25[%c8_107, %c0_108] : memref<20x64xbf16, #tpu.memory_space<vmem>>, vector<4x64xbf16>
    tpu.vector_store %arg25[%c8_107, %c0_108], %99 {strides = array<i32>} : memref<20x64xbf16, #tpu.memory_space<vmem>>, vector<4x64xbf16>,
    %cst_109 = arith.constant 0.000000e+00 : bf16
    %103 = vector.broadcast %cst_109 : bf16 to vector<1x64xbf16>
    %c12 = arith.constant 12 : index
    %c0_110 = arith.constant 0 : index
    %104 = vector.load %arg25[%c12, %c0_110] : memref<20x64xbf16, #tpu.memory_space<vmem>>, vector<1x64xbf16>
    tpu.vector_store %arg25[%c12, %c0_110], %103 {strides = array<i32>} : memref<20x64xbf16, #tpu.memory_space<vmem>>, vector<1x64xbf16>,
    %c7_111 = arith.constant 7 : index
    %c0_112 = arith.constant 0 : index
    %105 = vector.load %arg25[%c7_111, %c0_112] : memref<20x64xbf16, #tpu.memory_space<vmem>>, vector<4x64xbf16>
    %c0_113 = arith.constant 0 : index
    %c0_114 = arith.constant 0 : index
    %c0_115 = arith.constant 0 : index
    %106 = vector.load %arg4[%c0_113, %c0_114, %c0_115] : memref<3x64x128xbf16, #tpu.memory_space<vmem>>, vector<1x64x128xbf16>
    %107 = vector.shape_cast %106 : vector<1x64x128xbf16> to vector<64x128xbf16>
    %cst_116 = arith.constant dense<0.000000e+00> : vector<4x128xf32>
    %108 = tpu.matmul %105, %107, %cst_116 {dimension_numbers = #tpu.dot_dimension_numbers<[1], [0], [0], [1], [0, 0, 1, 1], [], []>} : vector<4x64xbf16>, vector<64x128xbf16>, vector<4x128xf32> -> vector<4x128xf32>
    %c8_117 = arith.constant 8 : index
    %c0_118 = arith.constant 0 : index
    %109 = vector.load %arg25[%c8_117, %c0_118] : memref<20x64xbf16, #tpu.memory_space<vmem>>, vector<4x64xbf16>
    %c1_119 = arith.constant 1 : index
    %c0_120 = arith.constant 0 : index
    %c0_121 = arith.constant 0 : index
    %110 = vector.load %arg4[%c1_119, %c0_120, %c0_121] : memref<3x64x128xbf16, #tpu.memory_space<vmem>>, vector<1x64x128xbf16>
    %111 = vector.shape_cast %110 : vector<1x64x128xbf16> to vector<64x128xbf16>
    %cst_122 = arith.constant dense<0.000000e+00> : vector<4x128xf32>
    %112 = tpu.matmul %109, %111, %cst_122 {dimension_numbers = #tpu.dot_dimension_numbers<[1], [0], [0], [1], [0, 0, 1, 1], [], []>} : vector<4x64xbf16>, vector<64x128xbf16>, vector<4x128xf32> -> vector<4x128xf32>
    %113 = arith.addf %108, %112 : vector<4x128xf32>
    %c9_123 = arith.constant 9 : index
    %c0_124 = arith.constant 0 : index
    %114 = vector.load %arg25[%c9_123, %c0_124] : memref<20x64xbf16, #tpu.memory_space<vmem>>, vector<4x64xbf16>
    %c2_125 = arith.constant 2 : index
    %c0_126 = arith.constant 0 : index
    %c0_127 = arith.constant 0 : index
    %115 = vector.load %arg4[%c2_125, %c0_126, %c0_127] : memref<3x64x128xbf16, #tpu.memory_space<vmem>>, vector<1x64x128xbf16>
    %116 = vector.shape_cast %115 : vector<1x64x128xbf16> to vector<64x128xbf16>
    %cst_128 = arith.constant dense<0.000000e+00> : vector<4x128xf32>
    %117 = tpu.matmul %114, %116, %cst_128 {dimension_numbers = #tpu.dot_dimension_numbers<[1], [0], [0], [1], [0, 0, 1, 1], [], []>} : vector<4x64xbf16>, vector<64x128xbf16>, vector<4x128xf32> -> vector<4x128xf32>
    %118 = arith.addf %113, %117 : vector<4x128xf32>
    %c2_129 = arith.constant 2 : index
    %c0_130 = arith.constant 0 : index
    %119 = vector.load %arg11[%c2_129, %c0_130] : memref<5x128xf32, #tpu.memory_space<vmem>>, vector<1x128xf32>
    %120 = vector.broadcast %119 : vector<1x128xf32> to vector<4x128xf32>
    %121 = arith.mulf %118, %120 : vector<4x128xf32>
    %c2_131 = arith.constant 2 : index
    %c0_132 = arith.constant 0 : index
    %122 = vector.load %arg12[%c2_131, %c0_132] : memref<5x128xf32, #tpu.memory_space<vmem>>, vector<1x128xf32>
    %123 = vector.broadcast %122 : vector<1x128xf32> to vector<4x128xf32>
    %124 = arith.addf %121, %123 : vector<4x128xf32>
    %cst_133 = arith.constant 0.000000e+00 : f32
    %125 = vector.broadcast %cst_133 : f32 to vector<4x128xf32>
    %126 = arith.maximumf %124, %125 : vector<4x128xf32>
    %127 = arith.truncf %126 : vector<4x128xf32> to vector<4x128xbf16>
    %cst_134 = arith.constant dense<0.000000e+00> : vector<128xf32>
    %128 = vector.multi_reduction <add>, %126, %cst_134 [0] : vector<4x128xf32> to vector<128xf32>
    %129 = vector.shape_cast %128 : vector<128xf32> to vector<1x128xf32>
    %130 = arith.truncf %129 : vector<1x128xf32> to vector<1x128xbf16>
    %c0_135 = arith.constant 0 : index
    %c0_136 = arith.constant 0 : index
    %131 = vector.load %arg10[%c0_135, %c0_136] : memref<128x2xbf16, #tpu.memory_space<vmem>>, vector<128x2xbf16>
    %cst_137 = arith.constant dense<0.000000e+00> : vector<1x2xf32>
    %132 = tpu.matmul %130, %131, %cst_137 {dimension_numbers = #tpu.dot_dimension_numbers<[1], [0], [0], [1], [0, 0, 1, 1], [], []>} : vector<1x128xbf16>, vector<128x2xbf16>, vector<1x2xf32> -> vector<1x2xf32>
    %c0_138 = arith.constant 0 : index
    %c0_139 = arith.constant 0 : index
    %133 = vector.load %arg14[%c0_138, %c0_139] : memref<1x2xf32, #tpu.memory_space<vmem>>, vector<1x2xf32>
    %134 = arith.addf %132, %133 : vector<1x2xf32>
    %c0_140 = arith.constant 0 : index
    %c0_141 = arith.constant 0 : index
    %c0_142 = arith.constant 0 : index
    %135 = vector.load %arg22[%c0_140, %c0_141, %c0_142] : memref<1x1x2xf32, #tpu.memory_space<vmem>>, vector<1x1x2xf32>
    %136 = vector.shape_cast %135 : vector<1x1x2xf32> to vector<1x2xf32>
    %137 = vector.shape_cast %134 : vector<1x2xf32> to vector<1x1x2xf32>
    tpu.vector_store %arg22[%c0_140, %c0_141, %c0_142], %137 {strides = array<i32>} : memref<1x1x2xf32, #tpu.memory_space<vmem>>, vector<1x1x2xf32>,
    %c0_143 = arith.constant 0 : index
    %c0_144 = arith.constant 0 : index
    %138 = vector.load %arg19[%c0_143, %c0_144] : memref<8x4xbf16, #tpu.memory_space<vmem>>, vector<8x4xbf16>
    %cst_145 = arith.constant dense<0.000000e+00> : vector<8x128xf32>
    %139 = tpu.matmul %138, %127, %cst_145 {dimension_numbers = #tpu.dot_dimension_numbers<[1], [0], [0], [1], [0, 0, 1, 1], [], []>} : vector<8x4xbf16>, vector<4x128xbf16>, vector<8x128xf32> -> vector<8x128xf32>
    %140 = arith.truncf %139 : vector<8x128xf32> to vector<8x128xbf16>
    %cst_146 = arith.constant 0.000000e+00 : bf16
    %141 = vector.broadcast %cst_146 : bf16 to vector<1x128xbf16>
    %c7_147 = arith.constant 7 : index
    %c0_148 = arith.constant 0 : index
    %142 = vector.load %arg26[%c7_147, %c0_148] : memref<24x128xbf16, #tpu.memory_space<vmem>>, vector<1x128xbf16>
    tpu.vector_store %arg26[%c7_147, %c0_148], %141 {strides = array<i32>} : memref<24x128xbf16, #tpu.memory_space<vmem>>, vector<1x128xbf16>,
    %c8_149 = arith.constant 8 : index
    %c0_150 = arith.constant 0 : index
    %143 = vector.load %arg26[%c8_149, %c0_150] : memref<24x128xbf16, #tpu.memory_space<vmem>>, vector<8x128xbf16>
    tpu.vector_store %arg26[%c8_149, %c0_150], %140 {strides = array<i32>} : memref<24x128xbf16, #tpu.memory_space<vmem>>, vector<8x128xbf16>,
    %cst_151 = arith.constant 0.000000e+00 : bf16
    %144 = vector.broadcast %cst_151 : bf16 to vector<1x128xbf16>
    %c16_152 = arith.constant 16 : index
    %c0_153 = arith.constant 0 : index
    %145 = vector.load %arg26[%c16_152, %c0_153] : memref<24x128xbf16, #tpu.memory_space<vmem>>, vector<1x128xbf16>
    tpu.vector_store %arg26[%c16_152, %c0_153], %144 {strides = array<i32>} : memref<24x128xbf16, #tpu.memory_space<vmem>>, vector<1x128xbf16>,
    %c7_154 = arith.constant 7 : index
    %c0_155 = arith.constant 0 : index
    %146 = vector.load %arg26[%c7_154, %c0_155] : memref<24x128xbf16, #tpu.memory_space<vmem>>, vector<8x128xbf16>
    %c0_156 = arith.constant 0 : index
    %c0_157 = arith.constant 0 : index
    %c0_158 = arith.constant 0 : index
    %147 = vector.load %arg5[%c0_156, %c0_157, %c0_158] : memref<3x128x128xbf16, #tpu.memory_space<vmem>>, vector<1x128x128xbf16>
    %148 = vector.shape_cast %147 : vector<1x128x128xbf16> to vector<128x128xbf16>
    %cst_159 = arith.constant dense<0.000000e+00> : vector<8x128xf32>
    %149 = tpu.matmul %146, %148, %cst_159 {dimension_numbers = #tpu.dot_dimension_numbers<[1], [0], [0], [1], [0, 0, 1, 1], [], []>} : vector<8x128xbf16>, vector<128x128xbf16>, vector<8x128xf32> -> vector<8x128xf32>
    %c8_160 = arith.constant 8 : index
    %c0_161 = arith.constant 0 : index
    %150 = vector.load %arg26[%c8_160, %c0_161] : memref<24x128xbf16, #tpu.memory_space<vmem>>, vector<8x128xbf16>
    %c1_162 = arith.constant 1 : index
    %c0_163 = arith.constant 0 : index
    %c0_164 = arith.constant 0 : index
    %151 = vector.load %arg5[%c1_162, %c0_163, %c0_164] : memref<3x128x128xbf16, #tpu.memory_space<vmem>>, vector<1x128x128xbf16>
    %152 = vector.shape_cast %151 : vector<1x128x128xbf16> to vector<128x128xbf16>
    %cst_165 = arith.constant dense<0.000000e+00> : vector<8x128xf32>
    %153 = tpu.matmul %150, %152, %cst_165 {dimension_numbers = #tpu.dot_dimension_numbers<[1], [0], [0], [1], [0, 0, 1, 1], [], []>} : vector<8x128xbf16>, vector<128x128xbf16>, vector<8x128xf32> -> vector<8x128xf32>
    %154 = arith.addf %149, %153 : vector<8x128xf32>
    %c9_166 = arith.constant 9 : index
    %c0_167 = arith.constant 0 : index
    %155 = vector.load %arg26[%c9_166, %c0_167] : memref<24x128xbf16, #tpu.memory_space<vmem>>, vector<8x128xbf16>
    %c2_168 = arith.constant 2 : index
    %c0_169 = arith.constant 0 : index
    %c0_170 = arith.constant 0 : index
    %156 = vector.load %arg5[%c2_168, %c0_169, %c0_170] : memref<3x128x128xbf16, #tpu.memory_space<vmem>>, vector<1x128x128xbf16>
    %157 = vector.shape_cast %156 : vector<1x128x128xbf16> to vector<128x128xbf16>
    %cst_171 = arith.constant dense<0.000000e+00> : vector<8x128xf32>
    %158 = tpu.matmul %155, %157, %cst_171 {dimension_numbers = #tpu.dot_dimension_numbers<[1], [0], [0], [1], [0, 0, 1, 1], [], []>} : vector<8x128xbf16>, vector<128x128xbf16>, vector<8x128xf32> -> vector<8x128xf32>
    %159 = arith.addf %154, %158 : vector<8x128xf32>
    %c7_172 = arith.constant 7 : index
    %c0_173 = arith.constant 0 : index
    %160 = vector.load %arg27[%c7_172, %c0_173] : memref<24x128xbf16, #tpu.memory_space<vmem>>, vector<8x128xbf16>
    %c0_174 = arith.constant 0 : index
    %c0_175 = arith.constant 0 : index
    %c0_176 = arith.constant 0 : index
    %161 = vector.load %arg6[%c0_174, %c0_175, %c0_176] : memref<3x128x128xbf16, #tpu.memory_space<vmem>>, vector<1x128x128xbf16>
    %162 = vector.shape_cast %161 : vector<1x128x128xbf16> to vector<128x128xbf16>
    %cst_177 = arith.constant dense<0.000000e+00> : vector<8x128xf32>
    %163 = tpu.matmul %160, %162, %cst_177 {dimension_numbers = #tpu.dot_dimension_numbers<[1], [0], [0], [1], [0, 0, 1, 1], [], []>} : vector<8x128xbf16>, vector<128x128xbf16>, vector<8x128xf32> -> vector<8x128xf32>
    %c8_178 = arith.constant 8 : index
    %c0_179 = arith.constant 0 : index
    %164 = vector.load %arg27[%c8_178, %c0_179] : memref<24x128xbf16, #tpu.memory_space<vmem>>, vector<8x128xbf16>
    %c1_180 = arith.constant 1 : index
    %c0_181 = arith.constant 0 : index
    %c0_182 = arith.constant 0 : index
    %165 = vector.load %arg6[%c1_180, %c0_181, %c0_182] : memref<3x128x128xbf16, #tpu.memory_space<vmem>>, vector<1x128x128xbf16>
    %166 = vector.shape_cast %165 : vector<1x128x128xbf16> to vector<128x128xbf16>
    %cst_183 = arith.constant dense<0.000000e+00> : vector<8x128xf32>
    %167 = tpu.matmul %164, %166, %cst_183 {dimension_numbers = #tpu.dot_dimension_numbers<[1], [0], [0], [1], [0, 0, 1, 1], [], []>} : vector<8x128xbf16>, vector<128x128xbf16>, vector<8x128xf32> -> vector<8x128xf32>
    %168 = arith.addf %163, %167 : vector<8x128xf32>
    %c9_184 = arith.constant 9 : index
    %c0_185 = arith.constant 0 : index
    %169 = vector.load %arg27[%c9_184, %c0_185] : memref<24x128xbf16, #tpu.memory_space<vmem>>, vector<8x128xbf16>
    %c2_186 = arith.constant 2 : index
    %c0_187 = arith.constant 0 : index
    %c0_188 = arith.constant 0 : index
    %170 = vector.load %arg6[%c2_186, %c0_187, %c0_188] : memref<3x128x128xbf16, #tpu.memory_space<vmem>>, vector<1x128x128xbf16>
    %171 = vector.shape_cast %170 : vector<1x128x128xbf16> to vector<128x128xbf16>
    %cst_189 = arith.constant dense<0.000000e+00> : vector<8x128xf32>
    %172 = tpu.matmul %169, %171, %cst_189 {dimension_numbers = #tpu.dot_dimension_numbers<[1], [0], [0], [1], [0, 0, 1, 1], [], []>} : vector<8x128xbf16>, vector<128x128xbf16>, vector<8x128xf32> -> vector<8x128xf32>
    %173 = arith.addf %168, %172 : vector<8x128xf32>
    %174 = arith.addf %159, %173 : vector<8x128xf32>
    %c3 = arith.constant 3 : index
    %c0_190 = arith.constant 0 : index
    %175 = vector.load %arg11[%c3, %c0_190] : memref<5x128xf32, #tpu.memory_space<vmem>>, vector<1x128xf32>
    %176 = vector.broadcast %175 : vector<1x128xf32> to vector<8x128xf32>
    %177 = arith.mulf %174, %176 : vector<8x128xf32>
    %c3_191 = arith.constant 3 : index
    %c0_192 = arith.constant 0 : index
    %178 = vector.load %arg12[%c3_191, %c0_192] : memref<5x128xf32, #tpu.memory_space<vmem>>, vector<1x128xf32>
    %179 = vector.broadcast %178 : vector<1x128xf32> to vector<8x128xf32>
    %180 = arith.addf %177, %179 : vector<8x128xf32>
    %cst_193 = arith.constant 0.000000e+00 : f32
    %181 = vector.broadcast %cst_193 : f32 to vector<8x128xf32>
    %182 = arith.maximumf %180, %181 : vector<8x128xf32>
    %183 = arith.truncf %182 : vector<8x128xf32> to vector<8x128xbf16>
    %c0_194 = arith.constant 0 : index
    %c0_195 = arith.constant 0 : index
    %184 = vector.load %arg20[%c0_194, %c0_195] : memref<16x8xbf16, #tpu.memory_space<vmem>>, vector<16x8xbf16>
    %cst_196 = arith.constant dense<0.000000e+00> : vector<16x128xf32>
    %185 = tpu.matmul %184, %183, %cst_196 {dimension_numbers = #tpu.dot_dimension_numbers<[1], [0], [0], [1], [0, 0, 1, 1], [], []>} : vector<16x8xbf16>, vector<8x128xbf16>, vector<16x128xf32> -> vector<16x128xf32>
    %186 = arith.truncf %185 : vector<16x128xf32> to vector<16x128xbf16>
    %cst_197 = arith.constant 0.000000e+00 : bf16
    %187 = vector.broadcast %cst_197 : bf16 to vector<1x128xbf16>
    %c7_198 = arith.constant 7 : index
    %c0_199 = arith.constant 0 : index
    %188 = vector.load %arg28[%c7_198, %c0_199] : memref<32x128xbf16, #tpu.memory_space<vmem>>, vector<1x128xbf16>
    tpu.vector_store %arg28[%c7_198, %c0_199], %187 {strides = array<i32>} : memref<32x128xbf16, #tpu.memory_space<vmem>>, vector<1x128xbf16>,
    %c8_200 = arith.constant 8 : index
    %c0_201 = arith.constant 0 : index
    %189 = vector.load %arg28[%c8_200, %c0_201] : memref<32x128xbf16, #tpu.memory_space<vmem>>, vector<16x128xbf16>
    tpu.vector_store %arg28[%c8_200, %c0_201], %186 {strides = array<i32>} : memref<32x128xbf16, #tpu.memory_space<vmem>>, vector<16x128xbf16>,
    %cst_202 = arith.constant 0.000000e+00 : bf16
    %190 = vector.broadcast %cst_202 : bf16 to vector<1x128xbf16>
    %c24_203 = arith.constant 24 : index
    %c0_204 = arith.constant 0 : index
    %191 = vector.load %arg28[%c24_203, %c0_204] : memref<32x128xbf16, #tpu.memory_space<vmem>>, vector<1x128xbf16>
    tpu.vector_store %arg28[%c24_203, %c0_204], %190 {strides = array<i32>} : memref<32x128xbf16, #tpu.memory_space<vmem>>, vector<1x128xbf16>,
    %c7_205 = arith.constant 7 : index
    %c0_206 = arith.constant 0 : index
    %192 = vector.load %arg28[%c7_205, %c0_206] : memref<32x128xbf16, #tpu.memory_space<vmem>>, vector<16x128xbf16>
    %c0_207 = arith.constant 0 : index
    %c0_208 = arith.constant 0 : index
    %c0_209 = arith.constant 0 : index
    %193 = vector.load %arg7[%c0_207, %c0_208, %c0_209] : memref<3x128x128xbf16, #tpu.memory_space<vmem>>, vector<1x128x128xbf16>
    %194 = vector.shape_cast %193 : vector<1x128x128xbf16> to vector<128x128xbf16>
    %cst_210 = arith.constant dense<0.000000e+00> : vector<16x128xf32>
    %195 = tpu.matmul %192, %194, %cst_210 {dimension_numbers = #tpu.dot_dimension_numbers<[1], [0], [0], [1], [0, 0, 1, 1], [], []>} : vector<16x128xbf16>, vector<128x128xbf16>, vector<16x128xf32> -> vector<16x128xf32>
    %c8_211 = arith.constant 8 : index
    %c0_212 = arith.constant 0 : index
    %196 = vector.load %arg28[%c8_211, %c0_212] : memref<32x128xbf16, #tpu.memory_space<vmem>>, vector<16x128xbf16>
    %c1_213 = arith.constant 1 : index
    %c0_214 = arith.constant 0 : index
    %c0_215 = arith.constant 0 : index
    %197 = vector.load %arg7[%c1_213, %c0_214, %c0_215] : memref<3x128x128xbf16, #tpu.memory_space<vmem>>, vector<1x128x128xbf16>
    %198 = vector.shape_cast %197 : vector<1x128x128xbf16> to vector<128x128xbf16>
    %cst_216 = arith.constant dense<0.000000e+00> : vector<16x128xf32>
    %199 = tpu.matmul %196, %198, %cst_216 {dimension_numbers = #tpu.dot_dimension_numbers<[1], [0], [0], [1], [0, 0, 1, 1], [], []>} : vector<16x128xbf16>, vector<128x128xbf16>, vector<16x128xf32> -> vector<16x128xf32>
    %200 = arith.addf %195, %199 : vector<16x128xf32>
    %c9_217 = arith.constant 9 : index
    %c0_218 = arith.constant 0 : index
    %201 = vector.load %arg28[%c9_217, %c0_218] : memref<32x128xbf16, #tpu.memory_space<vmem>>, vector<16x128xbf16>
    %c2_219 = arith.constant 2 : index
    %c0_220 = arith.constant 0 : index
    %c0_221 = arith.constant 0 : index
    %202 = vector.load %arg7[%c2_219, %c0_220, %c0_221] : memref<3x128x128xbf16, #tpu.memory_space<vmem>>, vector<1x128x128xbf16>
    %203 = vector.shape_cast %202 : vector<1x128x128xbf16> to vector<128x128xbf16>
    %cst_222 = arith.constant dense<0.000000e+00> : vector<16x128xf32>
    %204 = tpu.matmul %201, %203, %cst_222 {dimension_numbers = #tpu.dot_dimension_numbers<[1], [0], [0], [1], [0, 0, 1, 1], [], []>} : vector<16x128xbf16>, vector<128x128xbf16>, vector<16x128xf32> -> vector<16x128xf32>
    %205 = arith.addf %200, %204 : vector<16x128xf32>
    %c7_223 = arith.constant 7 : index
    %c0_224 = arith.constant 0 : index
    %206 = vector.load %arg29[%c7_223, %c0_224] : memref<32x128xbf16, #tpu.memory_space<vmem>>, vector<16x128xbf16>
    %c0_225 = arith.constant 0 : index
    %c0_226 = arith.constant 0 : index
    %c0_227 = arith.constant 0 : index
    %207 = vector.load %arg8[%c0_225, %c0_226, %c0_227] : memref<3x128x128xbf16, #tpu.memory_space<vmem>>, vector<1x128x128xbf16>
    %208 = vector.shape_cast %207 : vector<1x128x128xbf16> to vector<128x128xbf16>
    %cst_228 = arith.constant dense<0.000000e+00> : vector<16x128xf32>
    %209 = tpu.matmul %206, %208, %cst_228 {dimension_numbers = #tpu.dot_dimension_numbers<[1], [0], [0], [1], [0, 0, 1, 1], [], []>} : vector<16x128xbf16>, vector<128x128xbf16>, vector<16x128xf32> -> vector<16x128xf32>
    %c8_229 = arith.constant 8 : index
    %c0_230 = arith.constant 0 : index
    %210 = vector.load %arg29[%c8_229, %c0_230] : memref<32x128xbf16, #tpu.memory_space<vmem>>, vector<16x128xbf16>
    %c1_231 = arith.constant 1 : index
    %c0_232 = arith.constant 0 : index
    %c0_233 = arith.constant 0 : index
    %211 = vector.load %arg8[%c1_231, %c0_232, %c0_233] : memref<3x128x128xbf16, #tpu.memory_space<vmem>>, vector<1x128x128xbf16>
    %212 = vector.shape_cast %211 : vector<1x128x128xbf16> to vector<128x128xbf16>
    %cst_234 = arith.constant dense<0.000000e+00> : vector<16x128xf32>
    %213 = tpu.matmul %210, %212, %cst_234 {dimension_numbers = #tpu.dot_dimension_numbers<[1], [0], [0], [1], [0, 0, 1, 1], [], []>} : vector<16x128xbf16>, vector<128x128xbf16>, vector<16x128xf32> -> vector<16x128xf32>
    %214 = arith.addf %209, %213 : vector<16x128xf32>
    %c9_235 = arith.constant 9 : index
    %c0_236 = arith.constant 0 : index
    %215 = vector.load %arg29[%c9_235, %c0_236] : memref<32x128xbf16, #tpu.memory_space<vmem>>, vector<16x128xbf16>
    %c2_237 = arith.constant 2 : index
    %c0_238 = arith.constant 0 : index
    %c0_239 = arith.constant 0 : index
    %216 = vector.load %arg8[%c2_237, %c0_238, %c0_239] : memref<3x128x128xbf16, #tpu.memory_space<vmem>>, vector<1x128x128xbf16>
    %217 = vector.shape_cast %216 : vector<1x128x128xbf16> to vector<128x128xbf16>
    %cst_240 = arith.constant dense<0.000000e+00> : vector<16x128xf32>
    %218 = tpu.matmul %215, %217, %cst_240 {dimension_numbers = #tpu.dot_dimension_numbers<[1], [0], [0], [1], [0, 0, 1, 1], [], []>} : vector<16x128xbf16>, vector<128x128xbf16>, vector<16x128xf32> -> vector<16x128xf32>
    %219 = arith.addf %214, %218 : vector<16x128xf32>
    %220 = arith.addf %205, %219 : vector<16x128xf32>
    %c4 = arith.constant 4 : index
    %c0_241 = arith.constant 0 : index
    %221 = vector.load %arg11[%c4, %c0_241] : memref<5x128xf32, #tpu.memory_space<vmem>>, vector<1x128xf32>
    %222 = vector.broadcast %221 : vector<1x128xf32> to vector<16x128xf32>
    %223 = arith.mulf %220, %222 : vector<16x128xf32>
    %c4_242 = arith.constant 4 : index
    %c0_243 = arith.constant 0 : index
    %224 = vector.load %arg12[%c4_242, %c0_243] : memref<5x128xf32, #tpu.memory_space<vmem>>, vector<1x128xf32>
    %225 = vector.broadcast %224 : vector<1x128xf32> to vector<16x128xf32>
    %226 = arith.addf %223, %225 : vector<16x128xf32>
    %cst_244 = arith.constant 0.000000e+00 : f32
    %227 = vector.broadcast %cst_244 : f32 to vector<16x128xf32>
    %228 = arith.maximumf %226, %227 : vector<16x128xf32>
    %229 = arith.truncf %228 : vector<16x128xf32> to vector<16x128xbf16>
    %c0_245 = arith.constant 0 : index
    %c0_246 = arith.constant 0 : index
    %230 = vector.load %arg9[%c0_245, %c0_246] : memref<128x32xbf16, #tpu.memory_space<vmem>>, vector<128x32xbf16>
    %cst_247 = arith.constant dense<0.000000e+00> : vector<16x32xf32>
    %231 = tpu.matmul %229, %230, %cst_247 {dimension_numbers = #tpu.dot_dimension_numbers<[1], [0], [0], [1], [0, 0, 1, 1], [], []>} : vector<16x128xbf16>, vector<128x32xbf16>, vector<16x32xf32> -> vector<16x32xf32>
    %c0_248 = arith.constant 0 : index
    %c0_249 = arith.constant 0 : index
    %232 = vector.load %arg13[%c0_248, %c0_249] : memref<1x32xf32, #tpu.memory_space<vmem>>, vector<1x32xf32>
    %233 = vector.broadcast %232 : vector<1x32xf32> to vector<16x32xf32>
    %234 = arith.addf %231, %233 : vector<16x32xf32>
    %c0_250 = arith.constant 0 : index
    %c0_251 = arith.constant 0 : index
    %c0_252 = arith.constant 0 : index
    %235 = vector.load %arg21[%c0_250, %c0_251, %c0_252] : memref<1x16x32xf32, #tpu.memory_space<vmem>>, vector<1x16x32xf32>
    %236 = vector.shape_cast %235 : vector<1x16x32xf32> to vector<16x32xf32>
    %237 = vector.shape_cast %234 : vector<16x32xf32> to vector<1x16x32xf32>
    tpu.vector_store %arg21[%c0_250, %c0_251, %c0_252], %237 {strides = array<i32>} : memref<1x16x32xf32, #tpu.memory_space<vmem>>, vector<1x16x32xf32>,
    return
  }
  func.func @transform_0(%arg0: i32) -> (i32, i32, i32) {
    %c0_i32 = arith.constant 0 : i32
    %c0_i32_0 = arith.constant 0 : i32
    %c0_i32_1 = arith.constant 0 : i32
    return %arg0, %c0_i32, %c0_i32_0 : i32, i32, i32
  }
  func.func @transform_1(%arg0: i32) -> (i32, i32, i32) {
    %c0_i32 = arith.constant 0 : i32
    %c0_i32_0 = arith.constant 0 : i32
    %c0_i32_1 = arith.constant 0 : i32
    %c0_i32_2 = arith.constant 0 : i32
    return %c0_i32, %c0_i32_0, %c0_i32_1 : i32, i32, i32
  }
  func.func @transform_2(%arg0: i32) -> (i32, i32, i32) {
    %c0_i32 = arith.constant 0 : i32
    %c0_i32_0 = arith.constant 0 : i32
    %c0_i32_1 = arith.constant 0 : i32
    %c0_i32_2 = arith.constant 0 : i32
    return %c0_i32, %c0_i32_0, %c0_i32_1 : i32, i32, i32
  }
  func.func @transform_3(%arg0: i32) -> (i32, i32, i32) {
    %c0_i32 = arith.constant 0 : i32
    %c0_i32_0 = arith.constant 0 : i32
    %c0_i32_1 = arith.constant 0 : i32
    %c0_i32_2 = arith.constant 0 : i32
    return %c0_i32, %c0_i32_0, %c0_i32_1 : i32, i32, i32
  }
  func.func @transform_4(%arg0: i32) -> (i32, i32, i32) {
    %c0_i32 = arith.constant 0 : i32
    %c0_i32_0 = arith.constant 0 : i32
    %c0_i32_1 = arith.constant 0 : i32
    %c0_i32_2 = arith.constant 0 : i32
    return %c0_i32, %c0_i32_0, %c0_i32_1 : i32, i32, i32
  }
  func.func @transform_5(%arg0: i32) -> (i32, i32, i32) {
    %c0_i32 = arith.constant 0 : i32
    %c0_i32_0 = arith.constant 0 : i32
    %c0_i32_1 = arith.constant 0 : i32
    %c0_i32_2 = arith.constant 0 : i32
    return %c0_i32, %c0_i32_0, %c0_i32_1 : i32, i32, i32
  }
  func.func @transform_6(%arg0: i32) -> (i32, i32, i32) {
    %c0_i32 = arith.constant 0 : i32
    %c0_i32_0 = arith.constant 0 : i32
    %c0_i32_1 = arith.constant 0 : i32
    %c0_i32_2 = arith.constant 0 : i32
    return %c0_i32, %c0_i32_0, %c0_i32_1 : i32, i32, i32
  }
  func.func @transform_7(%arg0: i32) -> (i32, i32, i32) {
    %c0_i32 = arith.constant 0 : i32
    %c0_i32_0 = arith.constant 0 : i32
    %c0_i32_1 = arith.constant 0 : i32
    %c0_i32_2 = arith.constant 0 : i32
    return %c0_i32, %c0_i32_0, %c0_i32_1 : i32, i32, i32
  }
  func.func @transform_8(%arg0: i32) -> (i32, i32) {
    %c0_i32 = arith.constant 0 : i32
    %c0_i32_0 = arith.constant 0 : i32
    %c0_i32_1 = arith.constant 0 : i32
    return %c0_i32, %c0_i32_0 : i32, i32
  }
  func.func @transform_9(%arg0: i32) -> (i32, i32) {
    %c0_i32 = arith.constant 0 : i32
    %c0_i32_0 = arith.constant 0 : i32
    %c0_i32_1 = arith.constant 0 : i32
    return %c0_i32, %c0_i32_0 : i32, i32
  }
  func.func @transform_10(%arg0: i32) -> (i32, i32) {
    %c0_i32 = arith.constant 0 : i32
    %c0_i32_0 = arith.constant 0 : i32
    %c0_i32_1 = arith.constant 0 : i32
    return %c0_i32, %c0_i32_0 : i32, i32
  }
  func.func @transform_11(%arg0: i32) -> (i32, i32) {
    %c0_i32 = arith.constant 0 : i32
    %c0_i32_0 = arith.constant 0 : i32
    %c0_i32_1 = arith.constant 0 : i32
    return %c0_i32, %c0_i32_0 : i32, i32
  }
  func.func @transform_12(%arg0: i32) -> (i32, i32) {
    %c0_i32 = arith.constant 0 : i32
    %c0_i32_0 = arith.constant 0 : i32
    %c0_i32_1 = arith.constant 0 : i32
    return %c0_i32, %c0_i32_0 : i32, i32
  }
  func.func @transform_13(%arg0: i32) -> (i32, i32) {
    %c0_i32 = arith.constant 0 : i32
    %c0_i32_0 = arith.constant 0 : i32
    %c0_i32_1 = arith.constant 0 : i32
    return %c0_i32, %c0_i32_0 : i32, i32
  }
  func.func @transform_14(%arg0: i32) -> (i32, i32, i32) {
    %c0_i32 = arith.constant 0 : i32
    %c0_i32_0 = arith.constant 0 : i32
    %c0_i32_1 = arith.constant 0 : i32
    %c0_i32_2 = arith.constant 0 : i32
    return %c0_i32, %c0_i32_0, %c0_i32_1 : i32, i32, i32
  }
  func.func @transform_15(%arg0: i32) -> (i32, i32, i32) {
    %c0_i32 = arith.constant 0 : i32
    %c0_i32_0 = arith.constant 0 : i32
    %c0_i32_1 = arith.constant 0 : i32
    %c0_i32_2 = arith.constant 0 : i32
    return %c0_i32, %c0_i32_0, %c0_i32_1 : i32, i32, i32
  }
  func.func @transform_16(%arg0: i32) -> (i32, i32, i32) {
    %c0_i32 = arith.constant 0 : i32
    %c0_i32_0 = arith.constant 0 : i32
    %c0_i32_1 = arith.constant 0 : i32
    %c0_i32_2 = arith.constant 0 : i32
    return %c0_i32, %c0_i32_0, %c0_i32_1 : i32, i32, i32
  }
  func.func @transform_17(%arg0: i32) -> (i32, i32, i32) {
    %c0_i32 = arith.constant 0 : i32
    %c0_i32_0 = arith.constant 0 : i32
    %c0_i32_1 = arith.constant 0 : i32
    %c0_i32_2 = arith.constant 0 : i32
    return %c0_i32, %c0_i32_0, %c0_i32_1 : i32, i32, i32
  }
  func.func @transform_18(%arg0: i32) -> (i32, i32) {
    %c0_i32 = arith.constant 0 : i32
    %c0_i32_0 = arith.constant 0 : i32
    %c0_i32_1 = arith.constant 0 : i32
    return %c0_i32, %c0_i32_0 : i32, i32
  }
  func.func @transform_19(%arg0: i32) -> (i32, i32) {
    %c0_i32 = arith.constant 0 : i32
    %c0_i32_0 = arith.constant 0 : i32
    %c0_i32_1 = arith.constant 0 : i32
    return %c0_i32, %c0_i32_0 : i32, i32
  }
  func.func @transform_20(%arg0: i32) -> (i32, i32, i32) {
    %c0_i32 = arith.constant 0 : i32
    %c0_i32_0 = arith.constant 0 : i32
    %c0_i32_1 = arith.constant 0 : i32
    return %arg0, %c0_i32, %c0_i32_0 : i32, i32, i32
  }
  func.func @transform_21(%arg0: i32) -> (i32, i32, i32) {
    %c0_i32 = arith.constant 0 : i32
    %c0_i32_0 = arith.constant 0 : i32
    %c0_i32_1 = arith.constant 0 : i32
    return %arg0, %c0_i32, %c0_i32_0 : i32, i32, i32
  }
}

</mosaic_0001>

<llo_original>
// kernel: multiview_net_forward.1
$region0: #{multiview_net_forward.1}
  #allocation0 [shape = 'u32[]', space=smem, size = 0x4, offset = 0x4, fixed_abs, tag = 'smem constant byte address 0x4 - core index']
  #allocation1 [shape = 'u32[144,128]{1,0:T(1,128)}', space=vmem, size = 0x12000, scoped, tag = 'internal scratch']
  #allocation2 [shape = 'bf16[32,64]{1,0:T(16,128)(2,1)}', space=vmem, size = 0x2000, scoped, tag = 'scratch operand']
  #allocation3 [shape = 'bf16[24,64]{1,0:T(8,128)(2,1)}', space=vmem, size = 0x1800, scoped, tag = 'scratch operand']
  #allocation4 [shape = 'bf16[20,64]{1,0:T(8,128)(2,1)}', space=vmem, size = 0x1800, scoped, tag = 'scratch operand']
  #allocation5 [shape = 'bf16[24,128]{1,0:T(8,128)(2,1)}', space=vmem, size = 0x1800, scoped, tag = 'scratch operand']
  #allocation6 [shape = 'bf16[24,128]{1,0:T(8,128)(2,1)}', space=vmem, size = 0x1800, scoped, tag = 'scratch operand']
  #allocation7 [shape = 'bf16[32,128]{1,0:T(16,128)(2,1)}', space=vmem, size = 0x2000, scoped, tag = 'scratch operand']
  #allocation8 [shape = 'bf16[32,128]{1,0:T(16,128)(2,1)}', space=vmem, size = 0x2000, scoped, tag = 'scratch operand']
  %s0 = inlined_call_operand.vmem [shape: bf16[2,16,64], index: 0, kind: input, shape index: {}]
  %s1 = inlined_call_operand.vmem [shape: bf16[3,64,128], index: 1, kind: input, shape index: {}]
  %s2 = inlined_call_operand.vmem [shape: bf16[3,64,128], index: 2, kind: input, shape index: {}]
  %s3 = inlined_call_operand.hbm [shape: bf16[3,64,128], index: 3, kind: input, shape index: {}]
  %s4 = inlined_call_operand.vmem [shape: bf16[3,128,128], index: 4, kind: input, shape index: {}]
  %s5 = inlined_call_operand.vmem [shape: bf16[3,128,128], index: 5, kind: input, shape index: {}]
  %s6 = inlined_call_operand.vmem [shape: bf16[3,128,128], index: 6, kind: input, shape index: {}]
  %s7 = inlined_call_operand.vmem [shape: bf16[3,128,128], index: 7, kind: input, shape index: {}]
  %s8 = inlined_call_operand.vmem [shape: bf16[128,32], index: 8, kind: input, shape index: {}]
  %s9 = inlined_call_operand.vmem [shape: bf16[128,2], index: 9, kind: input, shape index: {}]
  %s10 = inlined_call_operand.hbm [shape: f32[5,128], index: 10, kind: input, shape index: {}]
  %s11 = inlined_call_operand.hbm [shape: f32[5,128], index: 11, kind: input, shape index: {}]
  %s12 = inlined_call_operand.hbm [shape: f32[1,32], index: 12, kind: input, shape index: {}]
  %s13 = inlined_call_operand.hbm [shape: f32[1,2], index: 13, kind: input, shape index: {}]
  %s14 = inlined_call_operand.vmem [shape: bf16[2,128,64], index: 14, kind: input, shape index: {}]
  %s15 = inlined_call_operand.vmem [shape: bf16[2,128,64], index: 15, kind: input, shape index: {}]
  %s16 = inlined_call_operand.hbm [shape: bf16[2,8,16], index: 16, kind: input, shape index: {}]
  %s17 = inlined_call_operand.vmem [shape: bf16[2,4,8], index: 17, kind: input, shape index: {}]
  %s18 = inlined_call_operand.vmem [shape: bf16[8,4], index: 18, kind: input, shape index: {}]
  %s19 = inlined_call_operand.vmem [shape: bf16[16,8], index: 19, kind: input, shape index: {}]
  %s20 = inlined_call_operand.vmem [shape: f32[2,16,32], index: 20, kind: output, shape index: {0}]
  %s21 = inlined_call_operand.hbm [shape: f32[2,1,2], index: 21, kind: output, shape index: {1}]
  %22 = xla_tuple %s20, %s21
  %s23 = sld [smem:[#allocation0]]
  $region145: #{multiview_net_forward.1} parent=0
    _
  %s25 = ssub.s32 1, %s23
  %s26 = scalar_select 0, %s25, %s23
  $region1: #{multiview_net_forward.1} parent=0
    #allocation9 [shape = 'u8[49152]{0}', space=vmem, size = 0xc000, scoped, tag = 'input window, operand 3, single buffered']
    #allocation10 [shape = 's32[2]{0}', space=sflag, size = 0x8, scoped, tag = 'scoped memory for multiview_net_forward.1']
    #allocation11 [shape = 's32[2]{0}', space=sflag, size = 0x8, scoped, tag = 'scoped memory for multiview_net_forward.1']
    #allocation12 [shape = 'u8[4096]{0}', space=vmem, size = 0x1000, scoped, tag = 'input window, operand 10, single buffered']
    #allocation13 [shape = 's32[1]{0}', space=sflag, size = 0x4, scoped, tag = 'scoped memory for multiview_net_forward.1']
    #allocation14 [shape = 'u8[4096]{0}', space=vmem, size = 0x1000, scoped, tag = 'input window, operand 11, single buffered']
    #allocation15 [shape = 'u8[512]{0}', space=vmem, size = 0x400, scoped, tag = 'input window, operand 12, single buffered']
    #allocation16 [shape = 's32[1]{0}', space=sflag, size = 0x4, scoped, tag = 'scoped memory for multiview_net_forward.1']
    #allocation17 [shape = 'u8[512]{0}', space=vmem, size = 0x400, scoped, tag = 'input window, operand 13, single buffered']
    #allocation18 [shape = 'u8[4096]{0}', space=vmem, size = 0x1000, scoped, tag = 'input window, operand 16, single buffered']
    #allocation19 [shape = 's32[1]{0}', space=sflag, size = 0x4, scoped, tag = 'scoped memory for multiview_net_forward.1']
    #allocation20 [shape = 'u8[1024]{0}', space=vmem, size = 0x400, scoped, tag = 'output window, operand 1']
    %27 = vsyncpa [#allocation10], 0
    %28 = vsyncpa [#allocation13], 0
    %29 = vsyncpa [#allocation16], 0
    %30 = vsyncpa [#allocation19], 0
    %31 = vsyncpa [#allocation11], 0
    %s32 = scalar_lea.sflag [#allocation11], 1
    %33 = vsyncpa %s32, 0
    loop: start=0, step=1, limit=4
    $region2: #{multiview_net_forward.1} parent=1 // loop_pre_header
      _
    $region3: #{multiview_net_forward.1} parent=1 // loop_header
      %s35 = sphi 0, %s39
      %p36 = scmp.ge.s32.totalorder %s35, 4
      %s45 = sphi 0, %s47
      %s48 = sphi 0, %s45
      %s49 = sphi 0, %s48
      %s65 = sphi 0, %s49
      %s69 = sphi 0, %s69
      %s71 = sphi 0, %s69
      %s72 = sphi 0, %s71
      %s86 = sphi 0, %s72
      %s90 = sphi 0, %s90
      %s92 = sphi 0, %s90
      %s93 = sphi 0, %s92
      %s107 = sphi 0, %s93
      %s111 = sphi 0, %s111
      %s113 = sphi 0, %s111
      %s114 = sphi 0, %s113
      %s128 = sphi 0, %s114
      %s132 = sphi 0, %s132
      %s134 = sphi 0, %s132
      %s135 = sphi 0, %s134
      %s149 = sphi 0, %s135
      %s153 = sphi 0, %s153
      %s155 = sphi 0, %s153
      %s156 = sphi 0, %s155
      %s170 = sphi 0, %s156
      %s174 = sphi 0, %s174
      %s176 = sphi 0, %s174
      %s177 = sphi 0, %s176
      %s191 = sphi 0, %s177
      %s195 = sphi 0, %s195
      %s197 = sphi 0, %s195
      %s198 = sphi 0, %s197
      %s212 = sphi 0, %s198
      %s216 = sphi 0, %s216
      %s218 = sphi 0, %s216
      %s219 = sphi 0, %s218
      %s233 = sphi 0, %s219
      %s237 = sphi 0, %s237
      %s239 = sphi 0, %s237
      %s240 = sphi 0, %s239
      %s254 = sphi 0, %s240
      %s258 = sphi 0, %s258
      %s260 = sphi 0, %s258
      %s261 = sphi 0, %s260
      %s275 = sphi 0, %s261
      %s279 = sphi 0, %s279
      %s281 = sphi 0, %s279
      %s282 = sphi 0, %s281
      %s296 = sphi 0, %s282
      %s300 = sphi 0, %s300
      %s302 = sphi 0, %s300
      %s303 = sphi 0, %s302
      %s317 = sphi 0, %s303
      %s321 = sphi 0, %s321
      %s323 = sphi 0, %s321
      %s324 = sphi 0, %s323
      %s338 = sphi 0, %s324
      %s342 = sphi 0, %s342
      %s344 = sphi 0, %s342
      %s345 = sphi 0, %s344
      %s359 = sphi 0, %s345
      %s363 = sphi 0, %s363
      %s365 = sphi 0, %s363
      %s366 = sphi 0, %s365
      %s380 = sphi 0, %s366
      %s384 = sphi 0, %s384
      %s386 = sphi 0, %s384
      %s387 = sphi 0, %s386
      %s401 = sphi 0, %s387
      %s405 = sphi 0, %s405
      %s407 = sphi 0, %s405
      %s408 = sphi 0, %s407
      %s422 = sphi 0, %s408
      %s426 = sphi 0, %s426
      %s428 = sphi 0, %s426
      %s429 = sphi 0, %s428
      %s443 = sphi 0, %s429
      %s447 = sphi 0, %s447
      %s449 = sphi 0, %s447
      %s450 = sphi 0, %s449
      %s464 = sphi 0, %s450
      %s470 = sphi 0, %s472
      %s473 = sphi 0, %s470
      %s474 = sphi 0, %s473
      %s490 = sphi 0, %s474
      %s496 = sphi 0, %s498
      %s499 = sphi 0, %s496
      %s500 = sphi 0, %s499
      %s516 = sphi 0, %s500
    $region4: #{multiview_net_forward.1} parent=1 // loop_header_branch
      %38 = sbr.rel (%p36) target = $region8
    $region5: #{multiview_net_forward.1} parent=1 // loop_body
      %s40 = ssub.s32 %s35, 1
      %s41 = ssub.s32 %s35, 2
      %s42 = sadd.s32 %s35, 1
      %s43 = ssub.s32 %s35, %s42
      %p44 = scmp.eq.s32.totalorder %s43, 0
      %s46 = sadd.s32 %s45, 1
      %s47 = scalar_select %p44, %s45, %s46
      %p50 = pneg %p44
      %p51 = scmp.eq.s32.totalorder %s35, 1
      %p52 = por %p50, %p51
      %p53 = scmp.ne.s32.totalorder %s45, %s48
      %p54 = scmp.eq.s32.totalorder %s35, 0
      %p55 = por %p53, %p54
      %p56 = scmp.ne.s32.totalorder %s45, %s48
      %p57 = scmp.eq.s32.totalorder %s40, 1
      %p58 = por %p56, %p57
      %p59 = scmp.ne.s32.totalorder %s48, %s49
      %p60 = scmp.eq.s32.totalorder %s40, 0
      %p61 = por %p59, %p60
      %p62 = scmp.ne.s32.totalorder %s48, %s49
      %p63 = scmp.eq.s32.totalorder %s41, 1
      %p64 = por %p62, %p63
      %p66 = scmp.ne.s32.totalorder %s49, %s65
      %p67 = scmp.eq.s32.totalorder %s41, 0
      %p68 = por %p66, %p67
      %s70 = sadd.s32 %s69, 1
      %p73 = scmp.eq.s32.totalorder %s35, 1
      %p74 = scmp.ne.s32.totalorder %s69, %s71
      %p75 = scmp.eq.s32.totalorder %s35, 0
      %p76 = por %p74, %p75
      %p77 = scmp.ne.s32.totalorder %s69, %s71
      %p78 = scmp.eq.s32.totalorder %s40, 1
      %p79 = por %p77, %p78
      %p80 = scmp.ne.s32.totalorder %s71, %s72
      %p81 = scmp.eq.s32.totalorder %s40, 0
      %p82 = por %p80, %p81
      %p83 = scmp.ne.s32.totalorder %s71, %s72
      %p84 = scmp.eq.s32.totalorder %s41, 1
      %p85 = por %p83, %p84
      %p87 = scmp.ne.s32.totalorder %s72, %s86
      %p88 = scmp.eq.s32.totalorder %s41, 0
      %p89 = por %p87, %p88
      %s91 = sadd.s32 %s90, 1
      %p94 = scmp.eq.s32.totalorder %s35, 1
      %p95 = scmp.ne.s32.totalorder %s90, %s92
      %p96 = scmp.eq.s32.totalorder %s35, 0
      %p97 = por %p95, %p96
      %p98 = scmp.ne.s32.totalorder %s90, %s92
      %p99 = scmp.eq.s32.totalorder %s40, 1
      %p100 = por %p98, %p99
      %p101 = scmp.ne.s32.totalorder %s92, %s93
      %p102 = scmp.eq.s32.totalorder %s40, 0
      %p103 = por %p101, %p102
      %p104 = scmp.ne.s32.totalorder %s92, %s93
      %p105 = scmp.eq.s32.totalorder %s41, 1
      %p106 = por %p104, %p105
      %p108 = scmp.ne.s32.totalorder %s93, %s107
      %p109 = scmp.eq.s32.totalorder %s41, 0
      %p110 = por %p108, %p109
      %s112 = sadd.s32 %s111, 1
      %p115 = scmp.eq.s32.totalorder %s35, 1
      %p116 = scmp.ne.s32.totalorder %s111, %s113
      %p117 = scmp.eq.s32.totalorder %s35, 0
      %p118 = por %p116, %p117
      %p119 = scmp.ne.s32.totalorder %s111, %s113
      %p120 = scmp.eq.s32.totalorder %s40, 1
      %p121 = por %p119, %p120
      %p122 = scmp.ne.s32.totalorder %s113, %s114
      %p123 = scmp.eq.s32.totalorder %s40, 0
      %p124 = por %p122, %p123
      %p125 = scmp.ne.s32.totalorder %s113, %s114
      %p126 = scmp.eq.s32.totalorder %s41, 1
      %p127 = por %p125, %p126
      %p129 = scmp.ne.s32.totalorder %s114, %s128
      %p130 = scmp.eq.s32.totalorder %s41, 0
      %p131 = por %p129, %p130
      %s133 = sadd.s32 %s132, 1
      %p136 = scmp.eq.s32.totalorder %s35, 1
      %p137 = scmp.ne.s32.totalorder %s132, %s134
      %p138 = scmp.eq.s32.totalorder %s35, 0
      %p139 = por %p137, %p138
      %p140 = scmp.ne.s32.totalorder %s132, %s134
      %p141 = scmp.eq.s32.totalorder %s40, 1
      %p142 = por %p140, %p141
      %p143 = scmp.ne.s32.totalorder %s134, %s135
      %p144 = scmp.eq.s32.totalorder %s40, 0
      %p145 = por %p143, %p144
      %p146 = scmp.ne.s32.totalorder %s134, %s135
      %p147 = scmp.eq.s32.totalorder %s41, 1
      %p148 = por %p146, %p147
      %p150 = scmp.ne.s32.totalorder %s135, %s149
      %p151 = scmp.eq.s32.totalorder %s41, 0
      %p152 = por %p150, %p151
      %s154 = sadd.s32 %s153, 1
      %p157 = scmp.eq.s32.totalorder %s35, 1
      %p158 = scmp.ne.s32.totalorder %s153, %s155
      %p159 = scmp.eq.s32.totalorder %s35, 0
      %p160 = por %p158, %p159
      %p161 = scmp.ne.s32.totalorder %s153, %s155
      %p162 = scmp.eq.s32.totalorder %s40, 1
      %p163 = por %p161, %p162
      %p164 = scmp.ne.s32.totalorder %s155, %s156
      %p165 = scmp.eq.s32.totalorder %s40, 0
      %p166 = por %p164, %p165
      %p167 = scmp.ne.s32.totalorder %s155, %s156
      %p168 = scmp.eq.s32.totalorder %s41, 1
      %p169 = por %p167, %p168
      %p171 = scmp.ne.s32.totalorder %s156, %s170
      %p172 = scmp.eq.s32.totalorder %s41, 0
      %p173 = por %p171, %p172
      %s175 = sadd.s32 %s174, 1
      %p178 = scmp.eq.s32.totalorder %s35, 1
      %p179 = scmp.ne.s32.totalorder %s174, %s176
      %p180 = scmp.eq.s32.totalorder %s35, 0
      %p181 = por %p179, %p180
      %p182 = scmp.ne.s32.totalorder %s174, %s176
      %p183 = scmp.eq.s32.totalorder %s40, 1
      %p184 = por %p182, %p183
      %p185 = scmp.ne.s32.totalorder %s176, %s177
      %p186 = scmp.eq.s32.totalorder %s40, 0
      %p187 = por %p185, %p186
      %p188 = scmp.ne.s32.totalorder %s176, %s177
      %p189 = scmp.eq.s32.totalorder %s41, 1
      %p190 = por %p188, %p189
      %p192 = scmp.ne.s32.totalorder %s177, %s191
      %p193 = scmp.eq.s32.totalorder %s41, 0
      %p194 = por %p192, %p193
      %s196 = sadd.s32 %s195, 1
      %p199 = scmp.eq.s32.totalorder %s35, 1
      %p200 = scmp.ne.s32.totalorder %s195, %s197
      %p201 = scmp.eq.s32.totalorder %s35, 0
      %p202 = por %p200, %p201
      %p203 = scmp.ne.s32.totalorder %s195, %s197
      %p204 = scmp.eq.s32.totalorder %s40, 1
      %p205 = por %p203, %p204
      %p206 = scmp.ne.s32.totalorder %s197, %s198
      %p207 = scmp.eq.s32.totalorder %s40, 0
      %p208 = por %p206, %p207
      %p209 = scmp.ne.s32.totalorder %s197, %s198
      %p210 = scmp.eq.s32.totalorder %s41, 1
      %p211 = por %p209, %p210
      %p213 = scmp.ne.s32.totalorder %s198, %s212
      %p214 = scmp.eq.s32.totalorder %s41, 0
      %p215 = por %p213, %p214
      %s217 = sadd.s32 %s216, 1
      %p220 = scmp.eq.s32.totalorder %s35, 1
      %p221 = scmp.ne.s32.totalorder %s216, %s218
      %p222 = scmp.eq.s32.totalorder %s35, 0
      %p223 = por %p221, %p222
      %p224 = scmp.ne.s32.totalorder %s216, %s218
      %p225 = scmp.eq.s32.totalorder %s40, 1
      %p226 = por %p224, %p225
      %p227 = scmp.ne.s32.totalorder %s218, %s219
      %p228 = scmp.eq.s32.totalorder %s40, 0
      %p229 = por %p227, %p228
      %p230 = scmp.ne.s32.totalorder %s218, %s219
      %p231 = scmp.eq.s32.totalorder %s41, 1
      %p232 = por %p230, %p231
      %p234 = scmp.ne.s32.totalorder %s219, %s233
      %p235 = scmp.eq.s32.totalorder %s41, 0
      %p236 = por %p234, %p235
      %s238 = sadd.s32 %s237, 1
      %p241 = scmp.eq.s32.totalorder %s35, 1
      %p242 = scmp.ne.s32.totalorder %s237, %s239
      %p243 = scmp.eq.s32.totalorder %s35, 0
      %p244 = por %p242, %p243
      %p245 = scmp.ne.s32.totalorder %s237, %s239
      %p246 = scmp.eq.s32.totalorder %s40, 1
      %p247 = por %p245, %p246
      %p248 = scmp.ne.s32.totalorder %s239, %s240
      %p249 = scmp.eq.s32.totalorder %s40, 0
      %p250 = por %p248, %p249
      %p251 = scmp.ne.s32.totalorder %s239, %s240
      %p252 = scmp.eq.s32.totalorder %s41, 1
      %p253 = por %p251, %p252
      %p255 = scmp.ne.s32.totalorder %s240, %s254
      %p256 = scmp.eq.s32.totalorder %s41, 0
      %p257 = por %p255, %p256
      %s259 = sadd.s32 %s258, 1
      %p262 = scmp.eq.s32.totalorder %s35, 1
      %p263 = scmp.ne.s32.totalorder %s258, %s260
      %p264 = scmp.eq.s32.totalorder %s35, 0
      %p265 = por %p263, %p264
      %p266 = scmp.ne.s32.totalorder %s258, %s260
      %p267 = scmp.eq.s32.totalorder %s40, 1
      %p268 = por %p266, %p267
      %p269 = scmp.ne.s32.totalorder %s260, %s261
      %p270 = scmp.eq.s32.totalorder %s40, 0
      %p271 = por %p269, %p270
      %p272 = scmp.ne.s32.totalorder %s260, %s261
      %p273 = scmp.eq.s32.totalorder %s41, 1
      %p274 = por %p272, %p273
      %p276 = scmp.ne.s32.totalorder %s261, %s275
      %p277 = scmp.eq.s32.totalorder %s41, 0
      %p278 = por %p276, %p277
      %s280 = sadd.s32 %s279, 1
      %p283 = scmp.eq.s32.totalorder %s35, 1
      %p284 = scmp.ne.s32.totalorder %s279, %s281
      %p285 = scmp.eq.s32.totalorder %s35, 0
      %p286 = por %p284, %p285
      %p287 = scmp.ne.s32.totalorder %s279, %s281
      %p288 = scmp.eq.s32.totalorder %s40, 1
      %p289 = por %p287, %p288
      %p290 = scmp.ne.s32.totalorder %s281, %s282
      %p291 = scmp.eq.s32.totalorder %s40, 0
      %p292 = por %p290, %p291
      %p293 = scmp.ne.s32.totalorder %s281, %s282
      %p294 = scmp.eq.s32.totalorder %s41, 1
      %p295 = por %p293, %p294
      %p297 = scmp.ne.s32.totalorder %s282, %s296
      %p298 = scmp.eq.s32.totalorder %s41, 0
      %p299 = por %p297, %p298
      %s301 = sadd.s32 %s300, 1
      %p304 = scmp.eq.s32.totalorder %s35, 1
      %p305 = scmp.ne.s32.totalorder %s300, %s302
      %p306 = scmp.eq.s32.totalorder %s35, 0
      %p307 = por %p305, %p306
      %p308 = scmp.ne.s32.totalorder %s300, %s302
      %p309 = scmp.eq.s32.totalorder %s40, 1
      %p310 = por %p308, %p309
      %p311 = scmp.ne.s32.totalorder %s302, %s303
      %p312 = scmp.eq.s32.totalorder %s40, 0
      %p313 = por %p311, %p312
      %p314 = scmp.ne.s32.totalorder %s302, %s303
      %p315 = scmp.eq.s32.totalorder %s41, 1
      %p316 = por %p314, %p315
      %p318 = scmp.ne.s32.totalorder %s303, %s317
      %p319 = scmp.eq.s32.totalorder %s41, 0
      %p320 = por %p318, %p319
      %s322 = sadd.s32 %s321, 1
      %p325 = scmp.eq.s32.totalorder %s35, 1
      %p326 = scmp.ne.s32.totalorder %s321, %s323
      %p327 = scmp.eq.s32.totalorder %s35, 0
      %p328 = por %p326, %p327
      %p329 = scmp.ne.s32.totalorder %s321, %s323
      %p330 = scmp.eq.s32.totalorder %s40, 1
      %p331 = por %p329, %p330
      %p332 = scmp.ne.s32.totalorder %s323, %s324
      %p333 = scmp.eq.s32.totalorder %s40, 0
      %p334 = por %p332, %p333
      %p335 = scmp.ne.s32.totalorder %s323, %s324
      %p336 = scmp.eq.s32.totalorder %s41, 1
      %p337 = por %p335, %p336
      %p339 = scmp.ne.s32.totalorder %s324, %s338
      %p340 = scmp.eq.s32.totalorder %s41, 0
      %p341 = por %p339, %p340
      %s343 = sadd.s32 %s342, 1
      %p346 = scmp.eq.s32.totalorder %s35, 1
      %p347 = scmp.ne.s32.totalorder %s342, %s344
      %p348 = scmp.eq.s32.totalorder %s35, 0
      %p349 = por %p347, %p348
      %p350 = scmp.ne.s32.totalorder %s342, %s344
      %p351 = scmp.eq.s32.totalorder %s40, 1
      %p352 = por %p350, %p351
      %p353 = scmp.ne.s32.totalorder %s344, %s345
      %p354 = scmp.eq.s32.totalorder %s40, 0
      %p355 = por %p353, %p354
      %p356 = scmp.ne.s32.totalorder %s344, %s345
      %p357 = scmp.eq.s32.totalorder %s41, 1
      %p358 = por %p356, %p357
      %p360 = scmp.ne.s32.totalorder %s345, %s359
      %p361 = scmp.eq.s32.totalorder %s41, 0
      %p362 = por %p360, %p361
      %s364 = sadd.s32 %s363, 1
      %p367 = scmp.eq.s32.totalorder %s35, 1
      %p368 = scmp.ne.s32.totalorder %s363, %s365
      %p369 = scmp.eq.s32.totalorder %s35, 0
      %p370 = por %p368, %p369
      %p371 = scmp.ne.s32.totalorder %s363, %s365
      %p372 = scmp.eq.s32.totalorder %s40, 1
      %p373 = por %p371, %p372
      %p374 = scmp.ne.s32.totalorder %s365, %s366
      %p375 = scmp.eq.s32.totalorder %s40, 0
      %p376 = por %p374, %p375
      %p377 = scmp.ne.s32.totalorder %s365, %s366
      %p378 = scmp.eq.s32.totalorder %s41, 1
      %p379 = por %p377, %p378
      %p381 = scmp.ne.s32.totalorder %s366, %s380
      %p382 = scmp.eq.s32.totalorder %s41, 0
      %p383 = por %p381, %p382
      %s385 = sadd.s32 %s384, 1
      %p388 = scmp.eq.s32.totalorder %s35, 1
      %p389 = scmp.ne.s32.totalorder %s384, %s386
      %p390 = scmp.eq.s32.totalorder %s35, 0
      %p391 = por %p389, %p390
      %p392 = scmp.ne.s32.totalorder %s384, %s386
      %p393 = scmp.eq.s32.totalorder %s40, 1
      %p394 = por %p392, %p393
      %p395 = scmp.ne.s32.totalorder %s386, %s387
      %p396 = scmp.eq.s32.totalorder %s40, 0
      %p397 = por %p395, %p396
      %p398 = scmp.ne.s32.totalorder %s386, %s387
      %p399 = scmp.eq.s32.totalorder %s41, 1
      %p400 = por %p398, %p399
      %p402 = scmp.ne.s32.totalorder %s387, %s401
      %p403 = scmp.eq.s32.totalorder %s41, 0
      %p404 = por %p402, %p403
      %s406 = sadd.s32 %s405, 1
      %p409 = scmp.eq.s32.totalorder %s35, 1
      %p410 = scmp.ne.s32.totalorder %s405, %s407
      %p411 = scmp.eq.s32.totalorder %s35, 0
      %p412 = por %p410, %p411
      %p413 = scmp.ne.s32.totalorder %s405, %s407
      %p414 = scmp.eq.s32.totalorder %s40, 1
      %p415 = por %p413, %p414
      %p416 = scmp.ne.s32.totalorder %s407, %s408
      %p417 = scmp.eq.s32.totalorder %s40, 0
      %p418 = por %p416, %p417
      %p419 = scmp.ne.s32.totalorder %s407, %s408
      %p420 = scmp.eq.s32.totalorder %s41, 1
      %p421 = por %p419, %p420
      %p423 = scmp.ne.s32.totalorder %s408, %s422
      %p424 = scmp.eq.s32.totalorder %s41, 0
      %p425 = por %p423, %p424
      %s427 = sadd.s32 %s426, 1
      %p430 = scmp.eq.s32.totalorder %s35, 1
      %p431 = scmp.ne.s32.totalorder %s426, %s428
      %p432 = scmp.eq.s32.totalorder %s35, 0
      %p433 = por %p431, %p432
      %p434 = scmp.ne.s32.totalorder %s426, %s428
      %p435 = scmp.eq.s32.totalorder %s40, 1
      %p436 = por %p434, %p435
      %p437 = scmp.ne.s32.totalorder %s428, %s429
      %p438 = scmp.eq.s32.totalorder %s40, 0
      %p439 = por %p437, %p438
      %p440 = scmp.ne.s32.totalorder %s428, %s429
      %p441 = scmp.eq.s32.totalorder %s41, 1
      %p442 = por %p440, %p441
      %p444 = scmp.ne.s32.totalorder %s429, %s443
      %p445 = scmp.eq.s32.totalorder %s41, 0
      %p446 = por %p444, %p445
      %s448 = sadd.s32 %s447, 1
      %p451 = scmp.eq.s32.totalorder %s35, 1
      %p452 = scmp.ne.s32.totalorder %s447, %s449
      %p453 = scmp.eq.s32.totalorder %s35, 0
      %p454 = por %p452, %p453
      %p455 = scmp.ne.s32.totalorder %s447, %s449
      %p456 = scmp.eq.s32.totalorder %s40, 1
      %p457 = por %p455, %p456
      %p458 = scmp.ne.s32.totalorder %s449, %s450
      %p459 = scmp.eq.s32.totalorder %s40, 0
      %p460 = por %p458, %p459
      %p461 = scmp.ne.s32.totalorder %s449, %s450
      %p462 = scmp.eq.s32.totalorder %s41, 1
      %p463 = por %p461, %p462
      %p465 = scmp.ne.s32.totalorder %s450, %s464
      %p466 = scmp.eq.s32.totalorder %s41, 0
      %p467 = por %p465, %p466
      %s468 = ssub.s32 %s35, %s42
      %p469 = scmp.eq.s32.totalorder %s468, 0
      %s471 = sadd.s32 %s470, 1
      %s472 = scalar_select %p469, %s470, %s471
      %p475 = pneg %p469
      %p476 = scmp.eq.s32.totalorder %s35, 1
      %p477 = por %p475, %p476
      %p478 = scmp.ne.s32.totalorder %s470, %s473
      %p479 = scmp.eq.s32.totalorder %s35, 0
      %p480 = por %p478, %p479
      %p481 = scmp.ne.s32.totalorder %s470, %s473
      %p482 = scmp.eq.s32.totalorder %s40, 1
      %p483 = por %p481, %p482
      %p484 = scmp.ne.s32.totalorder %s473, %s474
      %p485 = scmp.eq.s32.totalorder %s40, 0
      %p486 = por %p484, %p485
      %p487 = scmp.ne.s32.totalorder %s473, %s474
      %p488 = scmp.eq.s32.totalorder %s41, 1
      %p489 = por %p487, %p488
      %p491 = scmp.ne.s32.totalorder %s474, %s490
      %p492 = scmp.eq.s32.totalorder %s41, 0
      %p493 = por %p491, %p492
      %s494 = ssub.s32 %s35, %s42
      %p495 = scmp.eq.s32.totalorder %s494, 0
      %s497 = sadd.s32 %s496, 1
      %s498 = scalar_select %p495, %s496, %s497
      %p501 = pneg %p495
      %p502 = scmp.eq.s32.totalorder %s35, 1
      %p503 = por %p501, %p502
      %p504 = scmp.ne.s32.totalorder %s496, %s499
      %p505 = scmp.eq.s32.totalorder %s35, 0
      %p506 = por %p504, %p505
      %p507 = scmp.ne.s32.totalorder %s496, %s499
      %p508 = scmp.eq.s32.totalorder %s40, 1
      %p509 = por %p507, %p508
      %p510 = scmp.ne.s32.totalorder %s499, %s500
      %p511 = scmp.eq.s32.totalorder %s40, 0
      %p512 = por %p510, %p511
      %p513 = scmp.ne.s32.totalorder %s499, %s500
      %p514 = scmp.eq.s32.totalorder %s41, 1
      %p515 = por %p513, %p514
      %p517 = scmp.ne.s32.totalorder %s500, %s516
      %p518 = scmp.eq.s32.totalorder %s41, 0
      %p519 = por %p517, %p518
      %p520 = scmp.le.s32.totalorder 1, %s35
      %p521 = scmp.lt.s32.totalorder %s35, 3
      %p522 = pnand %p520, %p521
      %p523 = pneg %p522
      // Predicated region
      $region9: #{multiview_net_forward.1} parent=5 // pred_check
        _
      $region10: #{multiview_net_forward.1} parent=5 // pred_check_branch
        %525 = sbr.rel (%p522) target = $region12
      $region11: #{multiview_net_forward.1} parent=5 // pred_region
        %s526 = ssub.s32 %s35, 1
        // Predicated region
        $region13: #{multiview_net_forward.1} parent=11 // pred_check
          %p527 = pneg %p82
        $region14: #{multiview_net_forward.1} parent=11 // pred_check_branch
          %529 = sbr.rel (%p527) target = $region16
        $region15: #{multiview_net_forward.1} parent=11 // pred_region
          _
        $region16: #{multiview_net_forward.1} parent=11 // pred_fallthru
          _
        // Predicated region
        $region17: #{multiview_net_forward.1} parent=11 // pred_check
          %p530 = pneg %p103
        $region18: #{multiview_net_forward.1} parent=11 // pred_check_branch
          %532 = sbr.rel (%p530) target = $region20
        $region19: #{multiview_net_forward.1} parent=11 // pred_region
          _
        $region20: #{multiview_net_forward.1} parent=11 // pred_fallthru
          _
        // Predicated region
        $region21: #{multiview_net_forward.1} parent=11 // pred_check
          %p533 = pneg %p124
        $region22: #{multiview_net_forward.1} parent=11 // pred_check_branch
          %535 = sbr.rel (%p533) target = $region24
        $region23: #{multiview_net_forward.1} parent=11 // pred_region
          %s537 = ssub.s32 1536, 1536
          %538 = vsyncadd [#allocation10], %s537
          %s539 = sshll.u32 [#allocation9], 4
          %s540 = int_to_ptr.vmem [resolvable:$true] %s539
          %545 = dma.hbm_to_vmem [thread:$0]  %s3, 1536, %s540, [#allocation10], 64, 64, 4
        $region24: #{multiview_net_forward.1} parent=11 // pred_fallthru
          _
        // Predicated region
        $region25: #{multiview_net_forward.1} parent=11 // pred_check
          %p546 = pneg %p145
        $region26: #{multiview_net_forward.1} parent=11 // pred_check_branch
          %548 = sbr.rel (%p546) target = $region28
        $region27: #{multiview_net_forward.1} parent=11 // pred_region
          _
        $region28: #{multiview_net_forward.1} parent=11 // pred_fallthru
          _
        // Predicated region
        $region29: #{multiview_net_forward.1} parent=11 // pred_check
          %p549 = pneg %p166
        $region30: #{multiview_net_forward.1} parent=11 // pred_check_branch
          %551 = sbr.rel (%p549) target = $region32
        $region31: #{multiview_net_forward.1} parent=11 // pred_region
          _
        $region32: #{multiview_net_forward.1} parent=11 // pred_fallthru
          _
        // Predicated region
        $region33: #{multiview_net_forward.1} parent=11 // pred_check
          %p552 = pneg %p187
        $region34: #{multiview_net_forward.1} parent=11 // pred_check_branch
          %554 = sbr.rel (%p552) target = $region36
        $region35: #{multiview_net_forward.1} parent=11 // pred_region
          _
        $region36: #{multiview_net_forward.1} parent=11 // pred_fallthru
          _
        // Predicated region
        $region37: #{multiview_net_forward.1} parent=11 // pred_check
          %p555 = pneg %p208
        $region38: #{multiview_net_forward.1} parent=11 // pred_check_branch
          %557 = sbr.rel (%p555) target = $region40
        $region39: #{multiview_net_forward.1} parent=11 // pred_region
          _
        $region40: #{multiview_net_forward.1} parent=11 // pred_fallthru
          _
        // Predicated region
        $region41: #{multiview_net_forward.1} parent=11 // pred_check
          %p558 = pneg %p229
        $region42: #{multiview_net_forward.1} parent=11 // pred_check_branch
          %560 = sbr.rel (%p558) target = $region44
        $region43: #{multiview_net_forward.1} parent=11 // pred_region
          _
        $region44: #{multiview_net_forward.1} parent=11 // pred_fallthru
          _
        // Predicated region
        $region45: #{multiview_net_forward.1} parent=11 // pred_check
          %p561 = pneg %p250
        $region46: #{multiview_net_forward.1} parent=11 // pred_check_branch
          %563 = sbr.rel (%p561) target = $region48
        $region47: #{multiview_net_forward.1} parent=11 // pred_region
          _
        $region48: #{multiview_net_forward.1} parent=11 // pred_fallthru
          _
        // Predicated region
        $region49: #{multiview_net_forward.1} parent=11 // pred_check
          %p564 = pneg %p271
        $region50: #{multiview_net_forward.1} parent=11 // pred_check_branch
          %566 = sbr.rel (%p564) target = $region52
        $region51: #{multiview_net_forward.1} parent=11 // pred_region
          %s568 = ssub.s32 128, 128
          %569 = vsyncadd [#allocation13], %s568
          %s571 = sshll.u32 [#allocation12], 4
          %s572 = int_to_ptr.vmem [resolvable:$true] %s571
          %574 = dma.hbm_to_vmem [thread:$0]  %s10, 128, %s572, [#allocation13]
        $region52: #{multiview_net_forward.1} parent=11 // pred_fallthru
          _
        // Predicated region
        $region53: #{multiview_net_forward.1} parent=11 // pred_check
          %p575 = pneg %p292
        $region54: #{multiview_net_forward.1} parent=11 // pred_check_branch
          %577 = sbr.rel (%p575) target = $region56
        $region55: #{multiview_net_forward.1} parent=11 // pred_region
          %s579 = ssub.s32 128, 128
          %580 = vsyncadd [#allocation13], %s579
          %s582 = sshll.u32 [#allocation14], 4
          %s583 = int_to_ptr.vmem [resolvable:$true] %s582
          %585 = dma.hbm_to_vmem [thread:$0]  %s11, 128, %s583, [#allocation13]
        $region56: #{multiview_net_forward.1} parent=11 // pred_fallthru
          _
        // Predicated region
        $region57: #{multiview_net_forward.1} parent=11 // pred_check
          %p586 = pneg %p313
        $region58: #{multiview_net_forward.1} parent=11 // pred_check_branch
          %588 = sbr.rel (%p586) target = $region60
        $region59: #{multiview_net_forward.1} parent=11 // pred_region
          %s590 = ssub.s32 16, 16
          %591 = vsyncadd [#allocation16], %s590
          %s593 = sshll.u32 [#allocation15], 4
          %s594 = int_to_ptr.vmem [resolvable:$true] %s593
          %596 = dma.hbm_to_vmem [thread:$0]  %s12, 16, %s594, [#allocation16]
        $region60: #{multiview_net_forward.1} parent=11 // pred_fallthru
          _
        // Predicated region
        $region61: #{multiview_net_forward.1} parent=11 // pred_check
          %p597 = pneg %p334
        $region62: #{multiview_net_forward.1} parent=11 // pred_check_branch
          %599 = sbr.rel (%p597) target = $region64
        $region63: #{multiview_net_forward.1} parent=11 // pred_region
          %s601 = ssub.s32 16, 16
          %602 = vsyncadd [#allocation16], %s601
          %s604 = sshll.u32 [#allocation17], 4
          %s605 = int_to_ptr.vmem [resolvable:$true] %s604
          %607 = dma.hbm_to_vmem [thread:$0]  %s13, 16, %s605, [#allocation16]
        $region64: #{multiview_net_forward.1} parent=11 // pred_fallthru
          _
        // Predicated region
        $region65: #{multiview_net_forward.1} parent=11 // pred_check
          %p608 = pneg %p355
        $region66: #{multiview_net_forward.1} parent=11 // pred_check_branch
          %610 = sbr.rel (%p608) target = $region68
        $region67: #{multiview_net_forward.1} parent=11 // pred_region
          _
        $region68: #{multiview_net_forward.1} parent=11 // pred_fallthru
          _
        // Predicated region
        $region69: #{multiview_net_forward.1} parent=11 // pred_check
          %p611 = pneg %p376
        $region70: #{multiview_net_forward.1} parent=11 // pred_check_branch
          %613 = sbr.rel (%p611) target = $region72
        $region71: #{multiview_net_forward.1} parent=11 // pred_region
          _
        $region72: #{multiview_net_forward.1} parent=11 // pred_fallthru
          _
        // Predicated region
        $region73: #{multiview_net_forward.1} parent=11 // pred_check
          %p614 = pneg %p397
        $region74: #{multiview_net_forward.1} parent=11 // pred_check_branch
          %616 = sbr.rel (%p614) target = $region76
        $region75: #{multiview_net_forward.1} parent=11 // pred_region
          %s618 = ssub.s32 128, 128
          %619 = vsyncadd [#allocation19], %s618
          %s620 = sshll.u32 [#allocation18], 4
          %s621 = int_to_ptr.vmem [resolvable:$true] %s620
          %626 = dma.hbm_to_vmem [thread:$0]  %s16, 128, %s621, [#allocation19], 64, 64, 4
        $region76: #{multiview_net_forward.1} parent=11 // pred_fallthru
          _
        // Predicated region
        $region77: #{multiview_net_forward.1} parent=11 // pred_check
          %p627 = pneg %p418
        $region78: #{multiview_net_forward.1} parent=11 // pred_check_branch
          %629 = sbr.rel (%p627) target = $region80
        $region79: #{multiview_net_forward.1} parent=11 // pred_region
          _
        $region80: #{multiview_net_forward.1} parent=11 // pred_fallthru
          _
        // Predicated region
        $region81: #{multiview_net_forward.1} parent=11 // pred_check
          %p630 = pneg %p439
        $region82: #{multiview_net_forward.1} parent=11 // pred_check_branch
          %632 = sbr.rel (%p630) target = $region84
        $region83: #{multiview_net_forward.1} parent=11 // pred_region
          _
        $region84: #{multiview_net_forward.1} parent=11 // pred_fallthru
          _
        // Predicated region
        $region85: #{multiview_net_forward.1} parent=11 // pred_check
          %p633 = pneg %p460
        $region86: #{multiview_net_forward.1} parent=11 // pred_check_branch
          %635 = sbr.rel (%p633) target = $region88
        $region87: #{multiview_net_forward.1} parent=11 // pred_region
          _
        $region88: #{multiview_net_forward.1} parent=11 // pred_fallthru
          _
      $region12: #{multiview_net_forward.1} parent=5 // pred_fallthru
        _
      %p636 = scmp.lt.s32.totalorder %s35, 2
      // Predicated region
      $region89: #{multiview_net_forward.1} parent=5 // pred_check
        %p637 = pneg %p636
      $region90: #{multiview_net_forward.1} parent=5 // pred_check_branch
        %639 = sbr.rel (%p637) target = $region92
      $region91: #{multiview_net_forward.1} parent=5 // pred_region
        // Predicated region
        $region93: #{multiview_net_forward.1} parent=91 // pred_check
          %p640 = pneg %p55
        $region94: #{multiview_net_forward.1} parent=91 // pred_check_branch
          %642 = sbr.rel (%p640) target = $region96
        $region95: #{multiview_net_forward.1} parent=91 // pred_region
          %p643 = scmp.lt.s32.totalorder %s35, 1
          %s644 = scalar_select %p643, %s35, 1
          %s645 = smul.addr %s644, 2
          %s646 = smul.addr %s645, 4
          %s647 = scalar_lea.vmem %s0, %s646
        $region96: #{multiview_net_forward.1} parent=91 // pred_fallthru
          _
      $region92: #{multiview_net_forward.1} parent=5 // pred_fallthru
        _
      %p648 = scmp.le.s32.totalorder 1, %s35
      %p649 = scmp.lt.s32.totalorder %s35, 3
      %p650 = pnand %p648, %p649
      %p651 = pneg %p650
      // Predicated region
      $region97: #{multiview_net_forward.1} parent=5 // pred_check
        _
      $region98: #{multiview_net_forward.1} parent=5 // pred_check_branch
        %653 = sbr.rel (%p650) target = $region100
      $region99: #{multiview_net_forward.1} parent=5 // pred_region
        %s654 = ssub.s32 %s35, 1
        // Predicated region
        $region101: #{multiview_net_forward.1} parent=99 // pred_check
          %p655 = pneg %p124
        $region102: #{multiview_net_forward.1} parent=99 // pred_check_branch
          %657 = sbr.rel (%p655) target = $region104
        $region103: #{multiview_net_forward.1} parent=99 // pred_region
          %658 = dma.done [#allocation10], 1536
        $region104: #{multiview_net_forward.1} parent=99 // pred_fallthru
          _
        // Predicated region
        $region105: #{multiview_net_forward.1} parent=99 // pred_check
          %p659 = pneg %p271
        $region106: #{multiview_net_forward.1} parent=99 // pred_check_branch
          %661 = sbr.rel (%p659) target = $region108
        $region107: #{multiview_net_forward.1} parent=99 // pred_region
          %662 = dma.done [#allocation13], 128
        $region108: #{multiview_net_forward.1} parent=99 // pred_fallthru
          _
        // Predicated region
        $region109: #{multiview_net_forward.1} parent=99 // pred_check
          %p663 = pneg %p292
        $region110: #{multiview_net_forward.1} parent=99 // pred_check_branch
          %665 = sbr.rel (%p663) target = $region112
        $region111: #{multiview_net_forward.1} parent=99 // pred_region
          %666 = dma.done [#allocation13], 128
        $region112: #{multiview_net_forward.1} parent=99 // pred_fallthru
          _
        // Predicated region
        $region113: #{multiview_net_forward.1} parent=99 // pred_check
          %p667 = pneg %p313
        $region114: #{multiview_net_forward.1} parent=99 // pred_check_branch
          %669 = sbr.rel (%p667) target = $region116
        $region115: #{multiview_net_forward.1} parent=99 // pred_region
          %670 = dma.done [#allocation16], 16
        $region116: #{multiview_net_forward.1} parent=99 // pred_fallthru
          _
        // Predicated region
        $region117: #{multiview_net_forward.1} parent=99 // pred_check
          %p671 = pneg %p334
        $region118: #{multiview_net_forward.1} parent=99 // pred_check_branch
          %673 = sbr.rel (%p671) target = $region120
        $region119: #{multiview_net_forward.1} parent=99 // pred_region
          %674 = dma.done [#allocation16], 16
        $region120: #{multiview_net_forward.1} parent=99 // pred_fallthru
          _
        // Predicated region
        $region121: #{multiview_net_forward.1} parent=99 // pred_check
          %p675 = pneg %p397
        $region122: #{multiview_net_forward.1} parent=99 // pred_check_branch
          %677 = sbr.rel (%p675) target = $region124
        $region123: #{multiview_net_forward.1} parent=99 // pred_region
          %678 = dma.done [#allocation19], 128
        $region124: #{multiview_net_forward.1} parent=99 // pred_fallthru
          _
        %p679 = scmp.lt.s32.totalorder %s40, 1
        %s680 = scalar_select %p679, %s40, 1
        %s681 = smul.addr %s680, 2
        %s682 = smul.addr %s681, 4
        %s683 = scalar_lea.vmem %s0, %s682
        %p684 = pneg %p61
        %p685 = pneg %p58
        %p686 = pneg %p82
        %p687 = pneg %p79
        %p688 = pneg %p103
        %p689 = pneg %p100
        %p690 = pneg %p124
        %p691 = pneg %p121
        %p692 = pneg %p145
        %p693 = pneg %p142
        %p694 = pneg %p166
        %p695 = pneg %p163
        %p696 = pneg %p187
        %p697 = pneg %p184
        %p698 = pneg %p208
        %p699 = pneg %p205
        %p700 = pneg %p229
        %p701 = pneg %p226
        %p702 = pneg %p250
        %p703 = pneg %p247
        %p704 = pneg %p271
        %p705 = pneg %p268
        %p706 = pneg %p292
        %p707 = pneg %p289
        %p708 = pneg %p313
        %p709 = pneg %p310
        %p710 = pneg %p334
        %p711 = pneg %p331
        %p712 = pneg %p355
        %p713 = pneg %p352
        %p714 = pneg %p376
        %p715 = pneg %p373
        %p716 = pneg %p397
        %p717 = pneg %p394
        %p718 = pneg %p418
        %p719 = pneg %p415
        %p720 = pneg %p439
        %p721 = pneg %p436
        %p722 = pneg %p460
        %p723 = pneg %p457
        %p724 = pneg %p486
        %p725 = pneg %p483
        %p726 = scmp.lt.s32.totalorder %s40, 1
        %s727 = scalar_select %p726, %s40, 1
        %s728 = smul.addr %s727, 2
        %s729 = smul.addr %s728, 8
        %s730 = scalar_lea.vmem %s20, %s729
        %p731 = pneg %p512
        %p732 = pneg %p509
        %s733 = sand.u32 %s499, 1
        %s734 = scalar_lea.sflag [#allocation11], %s733
        %s735 = sand.u32 %s499, 1
        %s736 = scalar_lea.vmem [#allocation20], %s735
        %p737 = scmp.lt.s32.totalorder %s40, 1
        %s738 = scalar_select %p737, %s40, 1
        %s739 = smul.addr %s738, 2
        %s740 = smul.addr %s739, 4
        %s741 = scalar_lea.vmem %s0, %s740
        %p742 = scmp.lt.s32.totalorder %s40, 1
        %s743 = scalar_select %p742, %s40, 1
        %s744 = smul.addr %s743, 2
        %s745 = smul.addr %s744, 8
        %s746 = scalar_lea.vmem %s20, %s745
        %v748 = vld [vmem:[%s741] sm:$0xf]
        %v749 = vld [vmem:[%s741 + $0x4] sm:$0xf]
        %vm750 = vcmask 519171
        %vm751 = vsmask.f32 7950
        %vm752 = vmand %vm750, %vm751
        %v753 = vld [vmem:[#allocation2] sm:$0x8]
        %v754 = vsel %vm752, 0, %v753
        %755 = vst [vmem:[#allocation2] sm:$0x8] %v754
        %v758 = vunpack.c.l.b16 %v748
        %v759 = vunpack.c.l.b16 %v749
        %v760 = vpack.c.b16 %v758, %v758
        %v761 = vpack.c.b16 %v759, %v759
        %vm764 = vcmask 523268
        %765 = vst.msk [vmem:[#allocation2] sm:$0xf0] %vm764, %v760
        %vm766 = vcmask 519168
        %767 = vst.msk [vmem:[#allocation2 + $0x8] sm:$0xf] %vm766, %v761
        %vm768 = vcmask 520196
        %vm769 = vsmask.f32 4352
        %vm770 = vmand %vm768, %vm769
        %v771 = vld [vmem:[#allocation2 + $0x8] sm:$0x10]
        %v772 = vsel %vm770, 0, %v771
        %773 = vst [vmem:[#allocation2 + $0x8] sm:$0x10] %v772
        %v774 = vld [vmem:[#allocation2] sm:$0xf8]
        %v775 = vld [vmem:[#allocation2 + $0x8] sm:$0xf]
        %v776 = vld [vmem:[%s1] sm:$0xf]
        %v777 = vld [vmem:[%s1 + $0x4] sm:$0xf]
        %v778 = vld [vmem:[%s1 + $0x8] sm:$0xf]
        %v779 = vld [vmem:[%s1 + $0xc] sm:$0xf]
        %v780 = vld [vmem:[%s1 + $0x10] sm:$0xf]
        %v781 = vld [vmem:[%s1 + $0x14] sm:$0xf]
        %v782 = vld [vmem:[%s1 + $0x18] sm:$0xf]
        %v783 = vld [vmem:[%s1 + $0x1c] sm:$0xf]
        %v784 = vld [vmem:[#allocation2] sm:$0xf0]
        %s785 = scalar_lea.vmem %s1, 32
        %v786 = vld [vmem:[%s785] sm:$0xf]
        %v787 = vld [vmem:[%s785 + $0x4] sm:$0xf]
        %v788 = vld [vmem:[%s785 + $0x8] sm:$0xf]
        %v789 = vld [vmem:[%s785 + $0xc] sm:$0xf]
        %v790 = vld [vmem:[%s785 + $0x10] sm:$0xf]
        %v791 = vld [vmem:[%s785 + $0x14] sm:$0xf]
        %v792 = vld [vmem:[%s785 + $0x18] sm:$0xf]
        %v793 = vld [vmem:[%s785 + $0x1c] sm:$0xf]
        %vm796 = vcmask 1043456
        %v797 = vrot.slane %v784, 4
        %v798 = vrot.slane %v775, 4
        %v799 = vsel %vm796, %v797, %v798
        %v808 = vunpack.c.l.b16 %v786
        %v809 = vunpack.c.l.b16 %v787
        %v810 = vunpack.c.l.b16 %v788
        %v811 = vunpack.c.l.b16 %v789
        %v812 = vunpack.c.l.b16 %v790
        %v813 = vunpack.c.l.b16 %v791
        %v814 = vunpack.c.l.b16 %v792
        %v815 = vunpack.c.l.b16 %v793
        %v816 = vpack.c.b16 %v809, %v808
        %v817 = vpack.c.b16 %v811, %v810
        %v818 = vpack.c.b16 %v813, %v812
        %v819 = vpack.c.b16 %v815, %v814
        %vm824 = vcmask 523264
        %v826 = vsel %vm824, %v799, 0
        %828 = vmatprep.subr.bf16.mxu0 0
        %829 = vmatpush1.bf16.msra.mxu0 %v816
        %830 = vmatprep.subr.bf16.mxu0 0
        %831 = vmatpush1.bf16.msra.mxu0 %v817
        %832 = vmatprep.subr.bf16.mxu0 0
        %833 = vmatpush1.bf16.msra.mxu0 %v818
        %834 = vmatprep.subr.bf16.mxu0 0
        %835 = vmatpush1.bf16.msra.mxu0 %v819
        %836 = vmatprep.subr.bf16.mxu0 0
        %837 = vmatpush1.bf16.msra.mxu0 0
        %838 = vmatprep.subr.bf16.mxu0 0
        %839 = vmatpush1.bf16.msra.mxu0 0
        %840 = vmatprep.subr.bf16.mxu0 0
        %841 = vmatpush1.bf16.msra.mxu0 0
        %842 = vmatprep.subr.bf16.mxu0 0
        %843 = vmatpush1.bf16.msra.mxu0 0
        %844 = vmatprep.subr.bf16.mxu0 0
        %845 = vmatpush1.bf16.msra.mxu0 0
        %846 = vmatprep.subr.bf16.mxu0 0
        %847 = vmatpush1.bf16.msra.mxu0 0
        %848 = vmatprep.subr.bf16.mxu0 0
        %849 = vmatpush1.bf16.msra.mxu0 0
        %850 = vmatprep.subr.bf16.mxu0 0
        %851 = vmatpush1.bf16.msra.mxu0 0
        %852 = vmatprep.subr.bf16.mxu0 0
        %853 = vmatpush1.bf16.msra.mxu0 0
        %854 = vmatprep.subr.bf16.mxu0 0
        %855 = vmatpush1.bf16.msra.mxu0 0
        %856 = vmatprep.subr.bf16.mxu0 0
        %857 = vmatpush1.bf16.msra.mxu0 0
        %858 = vmatprep.subr.bf16.mxu0 0
        %859 = vmatpush1.bf16.msra.mxu0 0
        %860 = vmatprep.mubr.bf16.mxu0 0
        %861 = vmatmul.mubr.bf16.gmra.mrb[0].mxu0 %v826
        %v862 = vpop.f32.mrb[0].mxu0
        %v863 = vadd.f32 0.0, %v862
        %v864 = vpop.f32.mrb[0].mxu0
        %v865 = vpop.f32.mrb[0].mxu0
        %v866 = vadd.f32 0.0, %v865
        %v867 = vpop.f32.mrb[0].mxu0
        %868 = vdwg.mxu0
        %v870 = vshrl.u32 %v774, 16
        %v872 = vrot.slane %v870, 3
        %v873 = vshll.u32 %v774, 16
        %v875 = vrot.slane %v873, 4
        %v876 = vor.u32 %v872, %v875
        %v878 = vshrl.u32 %v775, 16
        %v880 = vrot.slane %v878, 3
        %v881 = vshll.u32 %v775, 16
        %v883 = vrot.slane %v881, 4
        %v884 = vor.u32 %v880, %v883
        %v885 = vsel %vm769, %v876, %v884
        %v894 = vunpack.c.l.b16 %v776
        %v895 = vunpack.c.l.b16 %v777
        %v896 = vunpack.c.l.b16 %v778
        %v897 = vunpack.c.l.b16 %v779
        %v898 = vunpack.c.l.b16 %v780
        %v899 = vunpack.c.l.b16 %v781
        %v900 = vunpack.c.l.b16 %v782
        %v901 = vunpack.c.l.b16 %v783
        %v902 = vpack.c.b16 %v895, %v894
        %v903 = vpack.c.b16 %v897, %v896
        %v904 = vpack.c.b16 %v899, %v898
        %v905 = vpack.c.b16 %v901, %v900
        %v911 = vsel %vm824, %v885, 0
        %913 = vmatprep.subr.bf16.mxu0 0
        %914 = vmatpush1.bf16.msra.mxu0 %v902
        %915 = vmatprep.subr.bf16.mxu0 0
        %916 = vmatpush1.bf16.msra.mxu0 %v903
        %917 = vmatprep.subr.bf16.mxu0 0
        %918 = vmatpush1.bf16.msra.mxu0 %v904
        %919 = vmatprep.subr.bf16.mxu0 0
        %920 = vmatpush1.bf16.msra.mxu0 %v905
        %921 = vmatprep.subr.bf16.mxu0 0
        %922 = vmatpush1.bf16.msra.mxu0 0
        %923 = vmatprep.subr.bf16.mxu0 0
        %924 = vmatpush1.bf16.msra.mxu0 0
        %925 = vmatprep.subr.bf16.mxu0 0
        %926 = vmatpush1.bf16.msra.mxu0 0
        %927 = vmatprep.subr.bf16.mxu0 0
        %928 = vmatpush1.bf16.msra.mxu0 0
        %929 = vmatprep.subr.bf16.mxu0 0
        %930 = vmatpush1.bf16.msra.mxu0 0
        %931 = vmatprep.subr.bf16.mxu0 0
        %932 = vmatpush1.bf16.msra.mxu0 0
        %933 = vmatprep.subr.bf16.mxu0 0
        %934 = vmatpush1.bf16.msra.mxu0 0
        %935 = vmatprep.subr.bf16.mxu0 0
        %936 = vmatpush1.bf16.msra.mxu0 0
        %937 = vmatprep.subr.bf16.mxu0 0
        %938 = vmatpush1.bf16.msra.mxu0 0
        %939 = vmatprep.subr.bf16.mxu0 0
        %940 = vmatpush1.bf16.msra.mxu0 0
        %941 = vmatprep.subr.bf16.mxu0 0
        %942 = vmatpush1.bf16.msra.mxu0 0
        %943 = vmatprep.subr.bf16.mxu0 0
        %944 = vmatpush1.bf16.msra.mxu0 0
        %945 = vmatprep.mubr.bf16.mxu0 0
        %946 = vmatmul.mubr.bf16.gmra.mrb[0].mxu0 %v911
        %v947 = vpop.f32.mrb[0].mxu0
        %v948 = vadd.f32 %v863, %v947
        %v949 = vpop.f32.mrb[0].mxu0
        %v950 = vpop.f32.mrb[0].mxu0
        %v951 = vadd.f32 %v866, %v950
        %v952 = vpop.f32.mrb[0].mxu0
        %953 = vdwg.mxu0
        %v954 = vld [vmem:[#allocation2 + $0x8] sm:$0x1f]
        %s955 = scalar_lea.vmem %s1, 64
        %v956 = vld [vmem:[%s955] sm:$0xf]
        %v957 = vld [vmem:[%s955 + $0x4] sm:$0xf]
        %v958 = vld [vmem:[%s955 + $0x8] sm:$0xf]
        %v959 = vld [vmem:[%s955 + $0xc] sm:$0xf]
        %v960 = vld [vmem:[%s955 + $0x10] sm:$0xf]
        %v961 = vld [vmem:[%s955 + $0x14] sm:$0xf]
        %v962 = vld [vmem:[%s955 + $0x18] sm:$0xf]
        %v963 = vld [vmem:[%s955 + $0x1c] sm:$0xf]
        %vm964 = vsmask.f32 3328
        %v966 = vshrl.u32 %v784, 16
        %v968 = vrot.slane %v966, 4
        %v969 = vshll.u32 %v784, 16
        %v971 = vrot.slane %v969, 5
        %v972 = vor.u32 %v968, %v971
        %v974 = vshrl.u32 %v954, 16
        %v976 = vrot.slane %v974, 4
        %v977 = vshll.u32 %v954, 16
        %v979 = vrot.slane %v977, 5
        %v980 = vor.u32 %v976, %v979
        %v981 = vsel %vm964, %v972, %v980
        %v990 = vunpack.c.l.b16 %v956
        %v991 = vunpack.c.l.b16 %v957
        %v992 = vunpack.c.l.b16 %v958
        %v993 = vunpack.c.l.b16 %v959
        %v994 = vunpack.c.l.b16 %v960
        %v995 = vunpack.c.l.b16 %v961
        %v996 = vunpack.c.l.b16 %v962
        %v997 = vunpack.c.l.b16 %v963
        %v998 = vpack.c.b16 %v991, %v990
        %v999 = vpack.c.b16 %v993, %v992
        %v1000 = vpack.c.b16 %v995, %v994
        %v1001 = vpack.c.b16 %v997, %v996
        %v1007 = vsel %vm824, %v981, 0
        %1009 = vmatprep.subr.bf16.mxu0 0
        %1010 = vmatpush1.bf16.msra.mxu0 %v998
        %1011 = vmatprep.subr.bf16.mxu0 0
        %1012 = vmatpush1.bf16.msra.mxu0 %v999
        %1013 = vmatprep.subr.bf16.mxu0 0
        %1014 = vmatpush1.bf16.msra.mxu0 %v1000
        %1015 = vmatprep.subr.bf16.mxu0 0
        %1016 = vmatpush1.bf16.msra.mxu0 %v1001
        %1017 = vmatprep.subr.bf16.mxu0 0
        %1018 = vmatpush1.bf16.msra.mxu0 0
        %1019 = vmatprep.subr.bf16.mxu0 0
        %1020 = vmatpush1.bf16.msra.mxu0 0
        %1021 = vmatprep.subr.bf16.mxu0 0
        %1022 = vmatpush1.bf16.msra.mxu0 0
        %1023 = vmatprep.subr.bf16.mxu0 0
        %1024 = vmatpush1.bf16.msra.mxu0 0
        %1025 = vmatprep.subr.bf16.mxu0 0
        %1026 = vmatpush1.bf16.msra.mxu0 0
        %1027 = vmatprep.subr.bf16.mxu0 0
        %1028 = vmatpush1.bf16.msra.mxu0 0
        %1029 = vmatprep.subr.bf16.mxu0 0
        %1030 = vmatpush1.bf16.msra.mxu0 0
        %1031 = vmatprep.subr.bf16.mxu0 0
        %1032 = vmatpush1.bf16.msra.mxu0 0
        %1033 = vmatprep.subr.bf16.mxu0 0
        %1034 = vmatpush1.bf16.msra.mxu0 0
        %1035 = vmatprep.subr.bf16.mxu0 0
        %1036 = vmatpush1.bf16.msra.mxu0 0
        %1037 = vmatprep.subr.bf16.mxu0 0
        %1038 = vmatpush1.bf16.msra.mxu0 0
        %1039 = vmatprep.subr.bf16.mxu0 0
        %1040 = vmatpush1.bf16.msra.mxu0 0
        %1041 = vmatprep.mubr.bf16.mxu0 0
        %1042 = vmatmul.mubr.bf16.gmra.mrb[0].mxu0 %v1007
        %v1043 = vpop.f32.mrb[0].mxu0
        %v1044 = vadd.f32 0.0, %v1043
        %v1045 = vpop.f32.mrb[0].mxu0
        %v1046 = vpop.f32.mrb[0].mxu0
        %v1047 = vadd.f32 0.0, %v1046
        %v1048 = vpop.f32.mrb[0].mxu0
        %1049 = vdwg.mxu0
        %v1050 = vadd.f32 %v948, %v1044
        %v1051 = vadd.f32 %v951, %v1047
        %v1052 = vld [vmem:[#allocation12] sm:$0x1]
        %v1053 = vlaneseq
        %v1054 = vshrl.u32 %v1053, 7
        %v1055 = vsub.s32 0, %v1054
        %v1056 = vrot.slane %v1052, %v1055
        %v1057 = vmul.f32 %v1050, %v1056
        %v1058 = vmul.f32 %v1051, %v1056
        %v1059 = vld [vmem:[#allocation14] sm:$0x1]
        %v1060 = vlaneseq
        %v1061 = vshrl.u32 %v1060, 7
        %v1062 = vsub.s32 0, %v1061
        %v1063 = vrot.slane %v1059, %v1062
        %v1064 = vadd.f32 %v1057, %v1063
        %v1065 = vadd.f32 %v1058, %v1063
        %v1066 = vmax.f32 %v1064, 0.0
        %v1067 = vmax.f32 %v1065, 0.0
        %v1068 = vpack.c.bf16 %v1067, %v1066
        %vm1069 = vcmask 1043459
        %vm1070 = vmand %vm1069, %vm751
        %v1071 = vld [vmem:[#allocation8] sm:$0x8]
        %v1072 = vsel %vm1070, 0, %v1071
        %1073 = vst [vmem:[#allocation8] sm:$0x8] %v1072
        %v1075 = vrot.slane %v1068, 4
        %1077 = vst [vmem:[#allocation8] sm:$0xf0] %v1075
        %1078 = vst [vmem:[#allocation8 + $0x8] sm:$0xf] %v1075
        %vm1079 = vcmask 1044484
        %vm1080 = vmand %vm1079, %vm769
        %v1081 = vld [vmem:[#allocation8 + $0x8] sm:$0x10]
        %v1082 = vsel %vm1080, 0, %v1081
        %1083 = vst [vmem:[#allocation8 + $0x8] sm:$0x10] %v1082
        %v1084 = vld [vmem:[%s14] sm:$0xf]
        %v1085 = vld [vmem:[%s14 + $0x4] sm:$0xf]
        %v1086 = vld [vmem:[%s14 + $0x8] sm:$0xf]
        %v1087 = vld [vmem:[%s14 + $0xc] sm:$0xf]
        %v1088 = vld [vmem:[%s14 + $0x10] sm:$0xf]
        %v1089 = vld [vmem:[%s14 + $0x14] sm:$0xf]
        %v1090 = vld [vmem:[%s14 + $0x18] sm:$0xf]
        %v1091 = vld [vmem:[%s14 + $0x1c] sm:$0xf]
        %v1092 = vld [vmem:[%s14 + $0x20] sm:$0xf]
        %v1093 = vld [vmem:[%s14 + $0x24] sm:$0xf]
        %v1094 = vld [vmem:[%s14 + $0x28] sm:$0xf]
        %v1095 = vld [vmem:[%s14 + $0x2c] sm:$0xf]
        %v1096 = vld [vmem:[%s14 + $0x30] sm:$0xf]
        %v1097 = vld [vmem:[%s14 + $0x34] sm:$0xf]
        %v1098 = vld [vmem:[%s14 + $0x38] sm:$0xf]
        %v1099 = vld [vmem:[%s14 + $0x3c] sm:$0xf]
        %v1116 = vunpack.c.l.b16 %v1084
        %v1117 = vunpack.c.l.b16 %v1085
        %v1118 = vunpack.c.l.b16 %v1086
        %v1119 = vunpack.c.l.b16 %v1087
        %v1120 = vunpack.c.l.b16 %v1088
        %v1121 = vunpack.c.l.b16 %v1089
        %v1122 = vunpack.c.l.b16 %v1090
        %v1123 = vunpack.c.l.b16 %v1091
        %v1124 = vunpack.c.l.b16 %v1092
        %v1125 = vunpack.c.l.b16 %v1093
        %v1126 = vunpack.c.l.b16 %v1094
        %v1127 = vunpack.c.l.b16 %v1095
        %v1128 = vunpack.c.l.b16 %v1096
        %v1129 = vunpack.c.l.b16 %v1097
        %v1130 = vunpack.c.l.b16 %v1098
        %v1131 = vunpack.c.l.b16 %v1099
        %v1132 = vpack.c.b16 %v1117, %v1116
        %v1133 = vpack.c.b16 %v1119, %v1118
        %v1134 = vpack.c.b16 %v1121, %v1120
        %v1135 = vpack.c.b16 %v1123, %v1122
        %v1136 = vpack.c.b16 %v1125, %v1124
        %v1137 = vpack.c.b16 %v1127, %v1126
        %v1138 = vpack.c.b16 %v1129, %v1128
        %v1139 = vpack.c.b16 %v1131, %v1130
        %1148 = vmatprep.subr.bf16.mxu0 0
        %1149 = vmatpush1.bf16.msra.mxu0 %v1132
        %1150 = vmatprep.subr.bf16.mxu0 0
        %1151 = vmatpush1.bf16.msra.mxu0 %v1133
        %1152 = vmatprep.subr.bf16.mxu0 0
        %1153 = vmatpush1.bf16.msra.mxu0 %v1134
        %1154 = vmatprep.subr.bf16.mxu0 0
        %1155 = vmatpush1.bf16.msra.mxu0 %v1135
        %1156 = vmatprep.subr.bf16.mxu0 0
        %1157 = vmatpush1.bf16.msra.mxu0 %v1136
        %1158 = vmatprep.subr.bf16.mxu0 0
        %1159 = vmatpush1.bf16.msra.mxu0 %v1137
        %1160 = vmatprep.subr.bf16.mxu0 0
        %1161 = vmatpush1.bf16.msra.mxu0 %v1138
        %1162 = vmatprep.subr.bf16.mxu0 0
        %1163 = vmatpush1.bf16.msra.mxu0 %v1139
        %1164 = vmatprep.subr.bf16.mxu0 0
        %1165 = vmatpush1.bf16.msra.mxu0 0
        %1166 = vmatprep.subr.bf16.mxu0 0
        %1167 = vmatpush1.bf16.msra.mxu0 0
        %1168 = vmatprep.subr.bf16.mxu0 0
        %1169 = vmatpush1.bf16.msra.mxu0 0
        %1170 = vmatprep.subr.bf16.mxu0 0
        %1171 = vmatpush1.bf16.msra.mxu0 0
        %1172 = vmatprep.subr.bf16.mxu0 0
        %1173 = vmatpush1.bf16.msra.mxu0 0
        %1174 = vmatprep.subr.bf16.mxu0 0
        %1175 = vmatpush1.bf16.msra.mxu0 0
        %1176 = vmatprep.subr.bf16.mxu0 0
        %1177 = vmatpush1.bf16.msra.mxu0 0
        %1178 = vmatprep.subr.bf16.mxu0 0
        %1179 = vmatpush1.bf16.msra.mxu0 0
        %1180 = vmatprep.mubr.bf16.mxu0 0
        %1181 = vmatmul.mubr.bf16.gmra.mrb[0].mxu0 %v1068
        %v1182 = vpop.f32.mrb[0].mxu0
        %v1183 = vadd.f32 0.0, %v1182
        %v1184 = vpop.f32.mrb[0].mxu0
        %v1185 = vpop.f32.mrb[0].mxu0
        %v1186 = vadd.f32 0.0, %v1185
        %v1187 = vpop.f32.mrb[0].mxu0
        %1188 = vdwg.mxu0
        %s1189 = scalar_lea.vmem %s14, 64
        %v1190 = vld [vmem:[%s1189] sm:$0xf]
        %v1191 = vld [vmem:[%s1189 + $0x4] sm:$0xf]
        %v1192 = vld [vmem:[%s1189 + $0x8] sm:$0xf]
        %v1193 = vld [vmem:[%s1189 + $0xc] sm:$0xf]
        %v1194 = vld [vmem:[%s1189 + $0x10] sm:$0xf]
        %v1195 = vld [vmem:[%s1189 + $0x14] sm:$0xf]
        %v1196 = vld [vmem:[%s1189 + $0x18] sm:$0xf]
        %v1197 = vld [vmem:[%s1189 + $0x1c] sm:$0xf]
        %v1198 = vld [vmem:[%s1189 + $0x20] sm:$0xf]
        %v1199 = vld [vmem:[%s1189 + $0x24] sm:$0xf]
        %v1200 = vld [vmem:[%s1189 + $0x28] sm:$0xf]
        %v1201 = vld [vmem:[%s1189 + $0x2c] sm:$0xf]
        %v1202 = vld [vmem:[%s1189 + $0x30] sm:$0xf]
        %v1203 = vld [vmem:[%s1189 + $0x34] sm:$0xf]
        %v1204 = vld [vmem:[%s1189 + $0x38] sm:$0xf]
        %v1205 = vld [vmem:[%s1189 + $0x3c] sm:$0xf]
        %v1222 = vunpack.c.l.b16 %v1190
        %v1223 = vunpack.c.l.b16 %v1191
        %v1224 = vunpack.c.l.b16 %v1192
        %v1225 = vunpack.c.l.b16 %v1193
        %v1226 = vunpack.c.l.b16 %v1194
        %v1227 = vunpack.c.l.b16 %v1195
        %v1228 = vunpack.c.l.b16 %v1196
        %v1229 = vunpack.c.l.b16 %v1197
        %v1230 = vunpack.c.l.b16 %v1198
        %v1231 = vunpack.c.l.b16 %v1199
        %v1232 = vunpack.c.l.b16 %v1200
        %v1233 = vunpack.c.l.b16 %v1201
        %v1234 = vunpack.c.l.b16 %v1202
        %v1235 = vunpack.c.l.b16 %v1203
        %v1236 = vunpack.c.l.b16 %v1204
        %v1237 = vunpack.c.l.b16 %v1205
        %v1238 = vpack.c.b16 %v1223, %v1222
        %v1239 = vpack.c.b16 %v1225, %v1224
        %v1240 = vpack.c.b16 %v1227, %v1226
        %v1241 = vpack.c.b16 %v1229, %v1228
        %v1242 = vpack.c.b16 %v1231, %v1230
        %v1243 = vpack.c.b16 %v1233, %v1232
        %v1244 = vpack.c.b16 %v1235, %v1234
        %v1245 = vpack.c.b16 %v1237, %v1236
        %1254 = vmatprep.subr.bf16.mxu0 0
        %1255 = vmatpush1.bf16.msra.mxu0 %v1238
        %1256 = vmatprep.subr.bf16.mxu0 0
        %1257 = vmatpush1.bf16.msra.mxu0 %v1239
        %1258 = vmatprep.subr.bf16.mxu0 0
        %1259 = vmatpush1.bf16.msra.mxu0 %v1240
        %1260 = vmatprep.subr.bf16.mxu0 0
        %1261 = vmatpush1.bf16.msra.mxu0 %v1241
        %1262 = vmatprep.subr.bf16.mxu0 0
        %1263 = vmatpush1.bf16.msra.mxu0 %v1242
        %1264 = vmatprep.subr.bf16.mxu0 0
        %1265 = vmatpush1.bf16.msra.mxu0 %v1243
        %1266 = vmatprep.subr.bf16.mxu0 0
        %1267 = vmatpush1.bf16.msra.mxu0 %v1244
        %1268 = vmatprep.subr.bf16.mxu0 0
        %1269 = vmatpush1.bf16.msra.mxu0 %v1245
        %1270 = vmatprep.subr.bf16.mxu0 0
        %1271 = vmatpush1.bf16.msra.mxu0 0
        %1272 = vmatprep.subr.bf16.mxu0 0
        %1273 = vmatpush1.bf16.msra.mxu0 0
        %1274 = vmatprep.subr.bf16.mxu0 0
        %1275 = vmatpush1.bf16.msra.mxu0 0
        %1276 = vmatprep.subr.bf16.mxu0 0
        %1277 = vmatpush1.bf16.msra.mxu0 0
        %1278 = vmatprep.subr.bf16.mxu0 0
        %1279 = vmatpush1.bf16.msra.mxu0 0
        %1280 = vmatprep.subr.bf16.mxu0 0
        %1281 = vmatpush1.bf16.msra.mxu0 0
        %1282 = vmatprep.subr.bf16.mxu0 0
        %1283 = vmatpush1.bf16.msra.mxu0 0
        %1284 = vmatprep.subr.bf16.mxu0 0
        %1285 = vmatpush1.bf16.msra.mxu0 0
        %1286 = vmatprep.mubr.bf16.mxu0 0
        %1287 = vmatmul.mubr.bf16.gmra.mrb[0].mxu0 %v1068
        %v1288 = vpop.f32.mrb[0].mxu0
        %v1289 = vadd.f32 0.0, %v1288
        %v1290 = vpop.f32.mrb[0].mxu0
        %v1291 = vpop.f32.mrb[0].mxu0
        %v1292 = vadd.f32 0.0, %v1291
        %v1293 = vpop.f32.mrb[0].mxu0
        %1294 = vdwg.mxu0
        %v1295 = vmax.f32 %v1183, %v1289
        %v1296 = vmax.f32 %v1186, %v1292
        %v1297 = vpack.c.bf16 %v1296, %v1295
        %v1298 = vld [vmem:[#allocation18] sm:$0xf]
        %vm1299 = vcmask 130048
        %v1301 = vsel %vm1299, %v1298, 0
        %1303 = vmatprep.subr.bf16.mxu0 0
        %1304 = vmatpush1.bf16.msra.mxu0 %v1297
        %1305 = vmatprep.subr.bf16.mxu0 0
        %1306 = vmatpush1.bf16.msra.mxu0 0
        %1307 = vmatprep.subr.bf16.mxu0 0
        %1308 = vmatpush1.bf16.msra.mxu0 0
        %1309 = vmatprep.subr.bf16.mxu0 0
        %1310 = vmatpush1.bf16.msra.mxu0 0
        %1311 = vmatprep.subr.bf16.mxu0 0
        %1312 = vmatpush1.bf16.msra.mxu0 0
        %1313 = vmatprep.subr.bf16.mxu0 0
        %1314 = vmatpush1.bf16.msra.mxu0 0
        %1315 = vmatprep.subr.bf16.mxu0 0
        %1316 = vmatpush1.bf16.msra.mxu0 0
        %1317 = vmatprep.subr.bf16.mxu0 0
        %1318 = vmatpush1.bf16.msra.mxu0 0
        %1319 = vmatprep.subr.bf16.mxu0 0
        %1320 = vmatpush1.bf16.msra.mxu0 0
        %1321 = vmatprep.subr.bf16.mxu0 0
        %1322 = vmatpush1.bf16.msra.mxu0 0
        %1323 = vmatprep.subr.bf16.mxu0 0
        %1324 = vmatpush1.bf16.msra.mxu0 0
        %1325 = vmatprep.subr.bf16.mxu0 0
        %1326 = vmatpush1.bf16.msra.mxu0 0
        %1327 = vmatprep.subr.bf16.mxu0 0
        %1328 = vmatpush1.bf16.msra.mxu0 0
        %1329 = vmatprep.subr.bf16.mxu0 0
        %1330 = vmatpush1.bf16.msra.mxu0 0
        %1331 = vmatprep.subr.bf16.mxu0 0
        %1332 = vmatpush1.bf16.msra.mxu0 0
        %1333 = vmatprep.subr.bf16.mxu0 0
        %1334 = vmatpush1.bf16.msra.mxu0 0
        %1335 = vmatprep.mubr.bf16.mxu0 0
        %1336 = vmatmul.mubr.bf16.gmra.mrb[0].mxu0 %v1301
        %v1337 = vpop.f32.mrb[0].mxu0
        %v1338 = vadd.f32 0.0, %v1337
        %v1339 = vpop.f32.mrb[0].mxu0
        %v1340 = vpop.f32.mrb[0].mxu0
        %v1341 = vpop.f32.mrb[0].mxu0
        %1342 = vdwg.mxu0
        %s1343 = scalar_lea.vmem [#allocation18], 4
        %v1344 = vld [vmem:[%s1343] sm:$0xf]
        %v1346 = vsel %vm1299, %v1344, 0
        %1348 = vmatprep.subr.bf16.mxu0 0
        %1349 = vmatpush1.bf16.msra.mxu0 %v1297
        %1350 = vmatprep.subr.bf16.mxu0 0
        %1351 = vmatpush1.bf16.msra.mxu0 0
        %1352 = vmatprep.subr.bf16.mxu0 0
        %1353 = vmatpush1.bf16.msra.mxu0 0
        %1354 = vmatprep.subr.bf16.mxu0 0
        %1355 = vmatpush1.bf16.msra.mxu0 0
        %1356 = vmatprep.subr.bf16.mxu0 0
        %1357 = vmatpush1.bf16.msra.mxu0 0
        %1358 = vmatprep.subr.bf16.mxu0 0
        %1359 = vmatpush1.bf16.msra.mxu0 0
        %1360 = vmatprep.subr.bf16.mxu0 0
        %1361 = vmatpush1.bf16.msra.mxu0 0
        %1362 = vmatprep.subr.bf16.mxu0 0
        %1363 = vmatpush1.bf16.msra.mxu0 0
        %1364 = vmatprep.subr.bf16.mxu0 0
        %1365 = vmatpush1.bf16.msra.mxu0 0
        %1366 = vmatprep.subr.bf16.mxu0 0
        %1367 = vmatpush1.bf16.msra.mxu0 0
        %1368 = vmatprep.subr.bf16.mxu0 0
        %1369 = vmatpush1.bf16.msra.mxu0 0
        %1370 = vmatprep.subr.bf16.mxu0 0
        %1371 = vmatpush1.bf16.msra.mxu0 0
        %1372 = vmatprep.subr.bf16.mxu0 0
        %1373 = vmatpush1.bf16.msra.mxu0 0
        %1374 = vmatprep.subr.bf16.mxu0 0
        %1375 = vmatpush1.bf16.msra.mxu0 0
        %1376 = vmatprep.subr.bf16.mxu0 0
        %1377 = vmatpush1.bf16.msra.mxu0 0
        %1378 = vmatprep.subr.bf16.mxu0 0
        %1379 = vmatpush1.bf16.msra.mxu0 0
        %1380 = vmatprep.mubr.bf16.mxu0 0
        %1381 = vmatmul.mubr.bf16.gmra.mrb[0].mxu0 %v1346
        %v1382 = vpop.f32.mrb[0].mxu0
        %v1383 = vadd.f32 0.0, %v1382
        %v1384 = vpop.f32.mrb[0].mxu0
        %v1385 = vpop.f32.mrb[0].mxu0
        %v1386 = vpop.f32.mrb[0].mxu0
        %1387 = vdwg.mxu0
        %v1388 = vmax.f32 %v1338, %v1383
        %v1389 = vpack.c.bf16 %v1388, %v1388
        %v1390 = vld [vmem:[#allocation3] sm:$0x8]
        %v1391 = vsel %vm752, 0, %v1390
        %1392 = vst [vmem:[#allocation3] sm:$0x8] %v1391
        %1393 = vst.msk [vmem:[#allocation3 + $0x4] sm:$0xf] %vm766, %v1389
        %vm1394 = vcmask 516096
        %vm1395 = vsmask.f32 256
        %vm1396 = vmand %vm1394, %vm1395
        %v1397 = vld [vmem:[#allocation3 + $0x8] sm:$0x1]
        %v1398 = vsel %vm1396, 0, %v1397
        %1399 = vst [vmem:[#allocation3 + $0x8] sm:$0x1] %v1398
        %v1400 = vld [vmem:[#allocation3] sm:$0x8]
        %v1401 = vld [vmem:[#allocation3 + $0x4] sm:$0xf]
        %v1402 = vld [vmem:[%s2] sm:$0xf]
        %v1403 = vld [vmem:[%s2 + $0x4] sm:$0xf]
        %v1404 = vld [vmem:[%s2 + $0x8] sm:$0xf]
        %v1405 = vld [vmem:[%s2 + $0xc] sm:$0xf]
        %v1406 = vld [vmem:[%s2 + $0x10] sm:$0xf]
        %v1407 = vld [vmem:[%s2 + $0x14] sm:$0xf]
        %v1408 = vld [vmem:[%s2 + $0x18] sm:$0xf]
        %v1409 = vld [vmem:[%s2 + $0x1c] sm:$0xf]
        %s1410 = scalar_lea.vmem %s2, 32
        %v1411 = vld [vmem:[%s1410] sm:$0xf]
        %v1412 = vld [vmem:[%s1410 + $0x4] sm:$0xf]
        %v1413 = vld [vmem:[%s1410 + $0x8] sm:$0xf]
        %v1414 = vld [vmem:[%s1410 + $0xc] sm:$0xf]
        %v1415 = vld [vmem:[%s1410 + $0x10] sm:$0xf]
        %v1416 = vld [vmem:[%s1410 + $0x14] sm:$0xf]
        %v1417 = vld [vmem:[%s1410 + $0x18] sm:$0xf]
        %v1418 = vld [vmem:[%s1410 + $0x1c] sm:$0xf]
        %v1427 = vunpack.c.l.b16 %v1411
        %v1428 = vunpack.c.l.b16 %v1412
        %v1429 = vunpack.c.l.b16 %v1413
        %v1430 = vunpack.c.l.b16 %v1414
        %v1431 = vunpack.c.l.b16 %v1415
        %v1432 = vunpack.c.l.b16 %v1416
        %v1433 = vunpack.c.l.b16 %v1417
        %v1434 = vunpack.c.l.b16 %v1418
        %v1435 = vpack.c.b16 %v1428, %v1427
        %v1436 = vpack.c.b16 %v1430, %v1429
        %v1437 = vpack.c.b16 %v1432, %v1431
        %v1438 = vpack.c.b16 %v1434, %v1433
        %v1444 = vsel %vm824, %v1401, 0
        %1446 = vmatprep.subr.bf16.mxu0 0
        %1447 = vmatpush1.bf16.msra.mxu0 %v1435
        %1448 = vmatprep.subr.bf16.mxu0 0
        %1449 = vmatpush1.bf16.msra.mxu0 %v1436
        %1450 = vmatprep.subr.bf16.mxu0 0
        %1451 = vmatpush1.bf16.msra.mxu0 %v1437
        %1452 = vmatprep.subr.bf16.mxu0 0
        %1453 = vmatpush1.bf16.msra.mxu0 %v1438
        %1454 = vmatprep.subr.bf16.mxu0 0
        %1455 = vmatpush1.bf16.msra.mxu0 0
        %1456 = vmatprep.subr.bf16.mxu0 0
        %1457 = vmatpush1.bf16.msra.mxu0 0
        %1458 = vmatprep.subr.bf16.mxu0 0
        %1459 = vmatpush1.bf16.msra.mxu0 0
        %1460 = vmatprep.subr.bf16.mxu0 0
        %1461 = vmatpush1.bf16.msra.mxu0 0
        %1462 = vmatprep.subr.bf16.mxu0 0
        %1463 = vmatpush1.bf16.msra.mxu0 0
        %1464 = vmatprep.subr.bf16.mxu0 0
        %1465 = vmatpush1.bf16.msra.mxu0 0
        %1466 = vmatprep.subr.bf16.mxu0 0
        %1467 = vmatpush1.bf16.msra.mxu0 0
        %1468 = vmatprep.subr.bf16.mxu0 0
        %1469 = vmatpush1.bf16.msra.mxu0 0
        %1470 = vmatprep.subr.bf16.mxu0 0
        %1471 = vmatpush1.bf16.msra.mxu0 0
        %1472 = vmatprep.subr.bf16.mxu0 0
        %1473 = vmatpush1.bf16.msra.mxu0 0
        %1474 = vmatprep.subr.bf16.mxu0 0
        %1475 = vmatpush1.bf16.msra.mxu0 0
        %1476 = vmatprep.subr.bf16.mxu0 0
        %1477 = vmatpush1.bf16.msra.mxu0 0
        %1478 = vmatprep.mubr.bf16.mxu0 0
        %1479 = vmatmul.mubr.bf16.gmra.mrb[0].mxu0 %v1444
        %v1480 = vpop.f32.mrb[0].mxu0
        %v1481 = vadd.f32 0.0, %v1480
        %v1482 = vpop.f32.mrb[0].mxu0
        %v1483 = vpop.f32.mrb[0].mxu0
        %v1484 = vpop.f32.mrb[0].mxu0
        %1485 = vdwg.mxu0
        %v1488 = vunpack.c.l.b16 %v1400
        %v1489 = vunpack.c.l.b16 %v1401
        %v1490 = vpack.c.b16 %v1489, %v1488
        %v1492 = vshrl.u32 %v1490, 16
        %v1494 = vrot.slane %v1492, 3
        %v1495 = vshll.u32 %v1490, 16
        %v1497 = vrot.slane %v1495, 4
        %v1498 = vor.u32 %v1494, %v1497
        %v1507 = vunpack.c.l.b16 %v1402
        %v1508 = vunpack.c.l.b16 %v1403
        %v1509 = vunpack.c.l.b16 %v1404
        %v1510 = vunpack.c.l.b16 %v1405
        %v1511 = vunpack.c.l.b16 %v1406
        %v1512 = vunpack.c.l.b16 %v1407
        %v1513 = vunpack.c.l.b16 %v1408
        %v1514 = vunpack.c.l.b16 %v1409
        %v1515 = vpack.c.b16 %v1508, %v1507
        %v1516 = vpack.c.b16 %v1510, %v1509
        %v1517 = vpack.c.b16 %v1512, %v1511
        %v1518 = vpack.c.b16 %v1514, %v1513
        %v1524 = vsel %vm824, %v1498, 0
        %1526 = vmatprep.subr.bf16.mxu0 0
        %1527 = vmatpush1.bf16.msra.mxu0 %v1515
        %1528 = vmatprep.subr.bf16.mxu0 0
        %1529 = vmatpush1.bf16.msra.mxu0 %v1516
        %1530 = vmatprep.subr.bf16.mxu0 0
        %1531 = vmatpush1.bf16.msra.mxu0 %v1517
        %1532 = vmatprep.subr.bf16.mxu0 0
        %1533 = vmatpush1.bf16.msra.mxu0 %v1518
        %1534 = vmatprep.subr.bf16.mxu0 0
        %1535 = vmatpush1.bf16.msra.mxu0 0
        %1536 = vmatprep.subr.bf16.mxu0 0
        %1537 = vmatpush1.bf16.msra.mxu0 0
        %1538 = vmatprep.subr.bf16.mxu0 0
        %1539 = vmatpush1.bf16.msra.mxu0 0
        %1540 = vmatprep.subr.bf16.mxu0 0
        %1541 = vmatpush1.bf16.msra.mxu0 0
        %1542 = vmatprep.subr.bf16.mxu0 0
        %1543 = vmatpush1.bf16.msra.mxu0 0
        %1544 = vmatprep.subr.bf16.mxu0 0
        %1545 = vmatpush1.bf16.msra.mxu0 0
        %1546 = vmatprep.subr.bf16.mxu0 0
        %1547 = vmatpush1.bf16.msra.mxu0 0
        %1548 = vmatprep.subr.bf16.mxu0 0
        %1549 = vmatpush1.bf16.msra.mxu0 0
        %1550 = vmatprep.subr.bf16.mxu0 0
        %1551 = vmatpush1.bf16.msra.mxu0 0
        %1552 = vmatprep.subr.bf16.mxu0 0
        %1553 = vmatpush1.bf16.msra.mxu0 0
        %1554 = vmatprep.subr.bf16.mxu0 0
        %1555 = vmatpush1.bf16.msra.mxu0 0
        %1556 = vmatprep.subr.bf16.mxu0 0
        %1557 = vmatpush1.bf16.msra.mxu0 0
        %1558 = vmatprep.mubr.bf16.mxu0 0
        %1559 = vmatmul.mubr.bf16.gmra.mrb[0].mxu0 %v1524
        %v1560 = vpop.f32.mrb[0].mxu0
        %v1561 = vadd.f32 %v1481, %v1560
        %v1562 = vpop.f32.mrb[0].mxu0
        %v1563 = vpop.f32.mrb[0].mxu0
        %v1564 = vpop.f32.mrb[0].mxu0
        %1565 = vdwg.mxu0
        %v1566 = vld [vmem:[#allocation3 + $0x4] sm:$0xf]
        %v1567 = vld [vmem:[#allocation3 + $0x8] sm:$0x1]
        %s1568 = scalar_lea.vmem %s2, 64
        %v1569 = vld [vmem:[%s1568] sm:$0xf]
        %v1570 = vld [vmem:[%s1568 + $0x4] sm:$0xf]
        %v1571 = vld [vmem:[%s1568 + $0x8] sm:$0xf]
        %v1572 = vld [vmem:[%s1568 + $0xc] sm:$0xf]
        %v1573 = vld [vmem:[%s1568 + $0x10] sm:$0xf]
        %v1574 = vld [vmem:[%s1568 + $0x14] sm:$0xf]
        %v1575 = vld [vmem:[%s1568 + $0x18] sm:$0xf]
        %v1576 = vld [vmem:[%s1568 + $0x1c] sm:$0xf]
        %v1579 = vunpack.c.l.b16 %v1566
        %v1580 = vunpack.c.l.b16 %v1567
        %v1581 = vpack.c.b16 %v1580, %v1579
        %v1583 = vshrl.u32 %v1581, 16
        %v1585 = vshll.u32 %v1581, 16
        %v1587 = vrot.slane %v1585, 1
        %v1588 = vor.u32 %v1583, %v1587
        %v1597 = vunpack.c.l.b16 %v1569
        %v1598 = vunpack.c.l.b16 %v1570
        %v1599 = vunpack.c.l.b16 %v1571
        %v1600 = vunpack.c.l.b16 %v1572
        %v1601 = vunpack.c.l.b16 %v1573
        %v1602 = vunpack.c.l.b16 %v1574
        %v1603 = vunpack.c.l.b16 %v1575
        %v1604 = vunpack.c.l.b16 %v1576
        %v1605 = vpack.c.b16 %v1598, %v1597
        %v1606 = vpack.c.b16 %v1600, %v1599
        %v1607 = vpack.c.b16 %v1602, %v1601
        %v1608 = vpack.c.b16 %v1604, %v1603
        %v1614 = vsel %vm824, %v1588, 0
        %1616 = vmatprep.subr.bf16.mxu0 0
        %1617 = vmatpush1.bf16.msra.mxu0 %v1605
        %1618 = vmatprep.subr.bf16.mxu0 0
        %1619 = vmatpush1.bf16.msra.mxu0 %v1606
        %1620 = vmatprep.subr.bf16.mxu0 0
        %1621 = vmatpush1.bf16.msra.mxu0 %v1607
        %1622 = vmatprep.subr.bf16.mxu0 0
        %1623 = vmatpush1.bf16.msra.mxu0 %v1608
        %1624 = vmatprep.subr.bf16.mxu0 0
        %1625 = vmatpush1.bf16.msra.mxu0 0
        %1626 = vmatprep.subr.bf16.mxu0 0
        %1627 = vmatpush1.bf16.msra.mxu0 0
        %1628 = vmatprep.subr.bf16.mxu0 0
        %1629 = vmatpush1.bf16.msra.mxu0 0
        %1630 = vmatprep.subr.bf16.mxu0 0
        %1631 = vmatpush1.bf16.msra.mxu0 0
        %1632 = vmatprep.subr.bf16.mxu0 0
        %1633 = vmatpush1.bf16.msra.mxu0 0
        %1634 = vmatprep.subr.bf16.mxu0 0
        %1635 = vmatpush1.bf16.msra.mxu0 0
        %1636 = vmatprep.subr.bf16.mxu0 0
        %1637 = vmatpush1.bf16.msra.mxu0 0
        %1638 = vmatprep.subr.bf16.mxu0 0
        %1639 = vmatpush1.bf16.msra.mxu0 0
        %1640 = vmatprep.subr.bf16.mxu0 0
        %1641 = vmatpush1.bf16.msra.mxu0 0
        %1642 = vmatprep.subr.bf16.mxu0 0
        %1643 = vmatpush1.bf16.msra.mxu0 0
        %1644 = vmatprep.subr.bf16.mxu0 0
        %1645 = vmatpush1.bf16.msra.mxu0 0
        %1646 = vmatprep.subr.bf16.mxu0 0
        %1647 = vmatpush1.bf16.msra.mxu0 0
        %1648 = vmatprep.mubr.bf16.mxu0 0
        %1649 = vmatmul.mubr.bf16.gmra.mrb[0].mxu0 %v1614
        %v1650 = vpop.f32.mrb[0].mxu0
        %v1651 = vadd.f32 0.0, %v1650
        %v1652 = vpop.f32.mrb[0].mxu0
        %v1653 = vpop.f32.mrb[0].mxu0
        %v1654 = vpop.f32.mrb[0].mxu0
        %1655 = vdwg.mxu0
        %v1656 = vadd.f32 %v1561, %v1651
        %v1657 = vld [vmem:[#allocation12 + $0x1] sm:$0x1]
        %v1658 = vlaneseq
        %v1659 = vshrl.u32 %v1658, 7
        %v1660 = vsub.s32 0, %v1659
        %v1661 = vrot.slane %v1657, %v1660
        %v1662 = vmul.f32 %v1656, %v1661
        %v1663 = vld [vmem:[#allocation14 + $0x1] sm:$0x1]
        %v1664 = vlaneseq
        %v1665 = vshrl.u32 %v1664, 7
        %v1666 = vsub.s32 0, %v1665
        %v1667 = vrot.slane %v1663, %v1666
        %v1668 = vadd.f32 %v1662, %v1667
        %v1669 = vmax.f32 %v1668, 0.0
        %v1670 = vpack.c.bf16 %v1669, %v1669
        %v1671 = vld [vmem:[#allocation6] sm:$0x8]
        %v1672 = vsel %vm1070, 0, %v1671
        %1673 = vst [vmem:[#allocation6] sm:$0x8] %v1672
        %1674 = vst [vmem:[#allocation6 + $0x4] sm:$0xf] %v1670
        %vm1675 = vcmask 1040384
        %vm1676 = vmand %vm1675, %vm1395
        %v1677 = vld [vmem:[#allocation6 + $0x8] sm:$0x1]
        %v1678 = vsel %vm1676, 0, %v1677
        %1679 = vst [vmem:[#allocation6 + $0x8] sm:$0x1] %v1678
        %v1680 = vld [vmem:[%s15] sm:$0xf]
        %v1681 = vld [vmem:[%s15 + $0x4] sm:$0xf]
        %v1682 = vld [vmem:[%s15 + $0x8] sm:$0xf]
        %v1683 = vld [vmem:[%s15 + $0xc] sm:$0xf]
        %v1684 = vld [vmem:[%s15 + $0x10] sm:$0xf]
        %v1685 = vld [vmem:[%s15 + $0x14] sm:$0xf]
        %v1686 = vld [vmem:[%s15 + $0x18] sm:$0xf]
        %v1687 = vld [vmem:[%s15 + $0x1c] sm:$0xf]
        %v1688 = vld [vmem:[%s15 + $0x20] sm:$0xf]
        %v1689 = vld [vmem:[%s15 + $0x24] sm:$0xf]
        %v1690 = vld [vmem:[%s15 + $0x28] sm:$0xf]
        %v1691 = vld [vmem:[%s15 + $0x2c] sm:$0xf]
        %v1692 = vld [vmem:[%s15 + $0x30] sm:$0xf]
        %v1693 = vld [vmem:[%s15 + $0x34] sm:$0xf]
        %v1694 = vld [vmem:[%s15 + $0x38] sm:$0xf]
        %v1695 = vld [vmem:[%s15 + $0x3c] sm:$0xf]
        %v1712 = vunpack.c.l.b16 %v1680
        %v1713 = vunpack.c.l.b16 %v1681
        %v1714 = vunpack.c.l.b16 %v1682
        %v1715 = vunpack.c.l.b16 %v1683
        %v1716 = vunpack.c.l.b16 %v1684
        %v1717 = vunpack.c.l.b16 %v1685
        %v1718 = vunpack.c.l.b16 %v1686
        %v1719 = vunpack.c.l.b16 %v1687
        %v1720 = vunpack.c.l.b16 %v1688
        %v1721 = vunpack.c.l.b16 %v1689
        %v1722 = vunpack.c.l.b16 %v1690
        %v1723 = vunpack.c.l.b16 %v1691
        %v1724 = vunpack.c.l.b16 %v1692
        %v1725 = vunpack.c.l.b16 %v1693
        %v1726 = vunpack.c.l.b16 %v1694
        %v1727 = vunpack.c.l.b16 %v1695
        %v1728 = vpack.c.b16 %v1713, %v1712
        %v1729 = vpack.c.b16 %v1715, %v1714
        %v1730 = vpack.c.b16 %v1717, %v1716
        %v1731 = vpack.c.b16 %v1719, %v1718
        %v1732 = vpack.c.b16 %v1721, %v1720
        %v1733 = vpack.c.b16 %v1723, %v1722
        %v1734 = vpack.c.b16 %v1725, %v1724
        %v1735 = vpack.c.b16 %v1727, %v1726
        %1744 = vmatprep.subr.bf16.mxu0 0
        %1745 = vmatpush1.bf16.msra.mxu0 %v1728
        %1746 = vmatprep.subr.bf16.mxu0 0
        %1747 = vmatpush1.bf16.msra.mxu0 %v1729
        %1748 = vmatprep.subr.bf16.mxu0 0
        %1749 = vmatpush1.bf16.msra.mxu0 %v1730
        %1750 = vmatprep.subr.bf16.mxu0 0
        %1751 = vmatpush1.bf16.msra.mxu0 %v1731
        %1752 = vmatprep.subr.bf16.mxu0 0
        %1753 = vmatpush1.bf16.msra.mxu0 %v1732
        %1754 = vmatprep.subr.bf16.mxu0 0
        %1755 = vmatpush1.bf16.msra.mxu0 %v1733
        %1756 = vmatprep.subr.bf16.mxu0 0
        %1757 = vmatpush1.bf16.msra.mxu0 %v1734
        %1758 = vmatprep.subr.bf16.mxu0 0
        %1759 = vmatpush1.bf16.msra.mxu0 %v1735
        %1760 = vmatprep.subr.bf16.mxu0 0
        %1761 = vmatpush1.bf16.msra.mxu0 0
        %1762 = vmatprep.subr.bf16.mxu0 0
        %1763 = vmatpush1.bf16.msra.mxu0 0
        %1764 = vmatprep.subr.bf16.mxu0 0
        %1765 = vmatpush1.bf16.msra.mxu0 0
        %1766 = vmatprep.subr.bf16.mxu0 0
        %1767 = vmatpush1.bf16.msra.mxu0 0
        %1768 = vmatprep.subr.bf16.mxu0 0
        %1769 = vmatpush1.bf16.msra.mxu0 0
        %1770 = vmatprep.subr.bf16.mxu0 0
        %1771 = vmatpush1.bf16.msra.mxu0 0
        %1772 = vmatprep.subr.bf16.mxu0 0
        %1773 = vmatpush1.bf16.msra.mxu0 0
        %1774 = vmatprep.subr.bf16.mxu0 0
        %1775 = vmatpush1.bf16.msra.mxu0 0
        %1776 = vmatprep.mubr.bf16.mxu0 0
        %1777 = vmatmul.mubr.bf16.gmra.mrb[0].mxu0 %v1670
        %v1778 = vpop.f32.mrb[0].mxu0
        %v1779 = vadd.f32 0.0, %v1778
        %v1780 = vpop.f32.mrb[0].mxu0
        %v1781 = vpop.f32.mrb[0].mxu0
        %v1782 = vpop.f32.mrb[0].mxu0
        %1783 = vdwg.mxu0
        %s1784 = scalar_lea.vmem %s15, 64
        %v1785 = vld [vmem:[%s1784] sm:$0xf]
        %v1786 = vld [vmem:[%s1784 + $0x4] sm:$0xf]
        %v1787 = vld [vmem:[%s1784 + $0x8] sm:$0xf]
        %v1788 = vld [vmem:[%s1784 + $0xc] sm:$0xf]
        %v1789 = vld [vmem:[%s1784 + $0x10] sm:$0xf]
        %v1790 = vld [vmem:[%s1784 + $0x14] sm:$0xf]
        %v1791 = vld [vmem:[%s1784 + $0x18] sm:$0xf]
        %v1792 = vld [vmem:[%s1784 + $0x1c] sm:$0xf]
        %v1793 = vld [vmem:[%s1784 + $0x20] sm:$0xf]
        %v1794 = vld [vmem:[%s1784 + $0x24] sm:$0xf]
        %v1795 = vld [vmem:[%s1784 + $0x28] sm:$0xf]
        %v1796 = vld [vmem:[%s1784 + $0x2c] sm:$0xf]
        %v1797 = vld [vmem:[%s1784 + $0x30] sm:$0xf]
        %v1798 = vld [vmem:[%s1784 + $0x34] sm:$0xf]
        %v1799 = vld [vmem:[%s1784 + $0x38] sm:$0xf]
        %v1800 = vld [vmem:[%s1784 + $0x3c] sm:$0xf]
        %v1817 = vunpack.c.l.b16 %v1785
        %v1818 = vunpack.c.l.b16 %v1786
        %v1819 = vunpack.c.l.b16 %v1787
        %v1820 = vunpack.c.l.b16 %v1788
        %v1821 = vunpack.c.l.b16 %v1789
        %v1822 = vunpack.c.l.b16 %v1790
        %v1823 = vunpack.c.l.b16 %v1791
        %v1824 = vunpack.c.l.b16 %v1792
        %v1825 = vunpack.c.l.b16 %v1793
        %v1826 = vunpack.c.l.b16 %v1794
        %v1827 = vunpack.c.l.b16 %v1795
        %v1828 = vunpack.c.l.b16 %v1796
        %v1829 = vunpack.c.l.b16 %v1797
        %v1830 = vunpack.c.l.b16 %v1798
        %v1831 = vunpack.c.l.b16 %v1799
        %v1832 = vunpack.c.l.b16 %v1800
        %v1833 = vpack.c.b16 %v1818, %v1817
        %v1834 = vpack.c.b16 %v1820, %v1819
        %v1835 = vpack.c.b16 %v1822, %v1821
        %v1836 = vpack.c.b16 %v1824, %v1823
        %v1837 = vpack.c.b16 %v1826, %v1825
        %v1838 = vpack.c.b16 %v1828, %v1827
        %v1839 = vpack.c.b16 %v1830, %v1829
        %v1840 = vpack.c.b16 %v1832, %v1831
        %1849 = vmatprep.subr.bf16.mxu0 0
        %1850 = vmatpush1.bf16.msra.mxu0 %v1833
        %1851 = vmatprep.subr.bf16.mxu0 0
        %1852 = vmatpush1.bf16.msra.mxu0 %v1834
        %1853 = vmatprep.subr.bf16.mxu0 0
        %1854 = vmatpush1.bf16.msra.mxu0 %v1835
        %1855 = vmatprep.subr.bf16.mxu0 0
        %1856 = vmatpush1.bf16.msra.mxu0 %v1836
        %1857 = vmatprep.subr.bf16.mxu0 0
        %1858 = vmatpush1.bf16.msra.mxu0 %v1837
        %1859 = vmatprep.subr.bf16.mxu0 0
        %1860 = vmatpush1.bf16.msra.mxu0 %v1838
        %1861 = vmatprep.subr.bf16.mxu0 0
        %1862 = vmatpush1.bf16.msra.mxu0 %v1839
        %1863 = vmatprep.subr.bf16.mxu0 0
        %1864 = vmatpush1.bf16.msra.mxu0 %v1840
        %1865 = vmatprep.subr.bf16.mxu0 0
        %1866 = vmatpush1.bf16.msra.mxu0 0
        %1867 = vmatprep.subr.bf16.mxu0 0
        %1868 = vmatpush1.bf16.msra.mxu0 0
        %1869 = vmatprep.subr.bf16.mxu0 0
        %1870 = vmatpush1.bf16.msra.mxu0 0
        %1871 = vmatprep.subr.bf16.mxu0 0
        %1872 = vmatpush1.bf16.msra.mxu0 0
        %1873 = vmatprep.subr.bf16.mxu0 0
        %1874 = vmatpush1.bf16.msra.mxu0 0
        %1875 = vmatprep.subr.bf16.mxu0 0
        %1876 = vmatpush1.bf16.msra.mxu0 0
        %1877 = vmatprep.subr.bf16.mxu0 0
        %1878 = vmatpush1.bf16.msra.mxu0 0
        %1879 = vmatprep.subr.bf16.mxu0 0
        %1880 = vmatpush1.bf16.msra.mxu0 0
        %1881 = vmatprep.mubr.bf16.mxu0 0
        %1882 = vmatmul.mubr.bf16.gmra.mrb[0].mxu0 %v1670
        %v1883 = vpop.f32.mrb[0].mxu0
        %v1884 = vadd.f32 0.0, %v1883
        %v1885 = vpop.f32.mrb[0].mxu0
        %v1886 = vpop.f32.mrb[0].mxu0
        %v1887 = vpop.f32.mrb[0].mxu0
        %1888 = vdwg.mxu0
        %v1889 = vmax.f32 %v1779, %v1884
        %v1890 = vpack.c.bf16 %v1889, %v1889
        %v1891 = vld [vmem:[%s17] sm:$0x3]
        %vm1892 = vcmask 64512
        %v1894 = vsel %vm1892, %v1891, 0
        %vm1896 = vcmask 1043456
        %v1898 = vsel %vm1896, %v1890, 0
        %1900 = vmatprep.subr.bf16.mxu0 0
        %1901 = vmatpush1.bf16.msra.mxu0 %v1898
        %1902 = vmatprep.subr.bf16.mxu0 0
        %1903 = vmatpush1.bf16.msra.mxu0 0
        %1904 = vmatprep.subr.bf16.mxu0 0
        %1905 = vmatpush1.bf16.msra.mxu0 0
        %1906 = vmatprep.subr.bf16.mxu0 0
        %1907 = vmatpush1.bf16.msra.mxu0 0
        %1908 = vmatprep.subr.bf16.mxu0 0
        %1909 = vmatpush1.bf16.msra.mxu0 0
        %1910 = vmatprep.subr.bf16.mxu0 0
        %1911 = vmatpush1.bf16.msra.mxu0 0
        %1912 = vmatprep.subr.bf16.mxu0 0
        %1913 = vmatpush1.bf16.msra.mxu0 0
        %1914 = vmatprep.subr.bf16.mxu0 0
        %1915 = vmatpush1.bf16.msra.mxu0 0
        %1916 = vmatprep.subr.bf16.mxu0 0
        %1917 = vmatpush1.bf16.msra.mxu0 0
        %1918 = vmatprep.subr.bf16.mxu0 0
        %1919 = vmatpush1.bf16.msra.mxu0 0
        %1920 = vmatprep.subr.bf16.mxu0 0
        %1921 = vmatpush1.bf16.msra.mxu0 0
        %1922 = vmatprep.subr.bf16.mxu0 0
        %1923 = vmatpush1.bf16.msra.mxu0 0
        %1924 = vmatprep.subr.bf16.mxu0 0
        %1925 = vmatpush1.bf16.msra.mxu0 0
        %1926 = vmatprep.subr.bf16.mxu0 0
        %1927 = vmatpush1.bf16.msra.mxu0 0
        %1928 = vmatprep.subr.bf16.mxu0 0
        %1929 = vmatpush1.bf16.msra.mxu0 0
        %1930 = vmatprep.subr.bf16.mxu0 0
        %1931 = vmatpush1.bf16.msra.mxu0 0
        %1932 = vmatprep.mubr.bf16.mxu0 0
        %1933 = vmatmul.mubr.bf16.gmra.mrb[0].mxu0 %v1894
        %v1934 = vpop.f32.mrb[0].mxu0
        %v1935 = vadd.f32 0.0, %v1934
        %v1936 = vpop.f32.mrb[0].mxu0
        %v1937 = vpop.f32.mrb[0].mxu0
        %v1938 = vpop.f32.mrb[0].mxu0
        %1939 = vdwg.mxu0
        %s1940 = scalar_lea.vmem %s17, 2
        %v1941 = vld [vmem:[%s1940] sm:$0x3]
        %v1943 = vsel %vm1892, %v1941, 0
        %1945 = vmatprep.subr.bf16.mxu0 0
        %1946 = vmatpush1.bf16.msra.mxu0 %v1898
        %1947 = vmatprep.subr.bf16.mxu0 0
        %1948 = vmatpush1.bf16.msra.mxu0 0
        %1949 = vmatprep.subr.bf16.mxu0 0
        %1950 = vmatpush1.bf16.msra.mxu0 0
        %1951 = vmatprep.subr.bf16.mxu0 0
        %1952 = vmatpush1.bf16.msra.mxu0 0
        %1953 = vmatprep.subr.bf16.mxu0 0
        %1954 = vmatpush1.bf16.msra.mxu0 0
        %1955 = vmatprep.subr.bf16.mxu0 0
        %1956 = vmatpush1.bf16.msra.mxu0 0
        %1957 = vmatprep.subr.bf16.mxu0 0
        %1958 = vmatpush1.bf16.msra.mxu0 0
        %1959 = vmatprep.subr.bf16.mxu0 0
        %1960 = vmatpush1.bf16.msra.mxu0 0
        %1961 = vmatprep.subr.bf16.mxu0 0
        %1962 = vmatpush1.bf16.msra.mxu0 0
        %1963 = vmatprep.subr.bf16.mxu0 0
        %1964 = vmatpush1.bf16.msra.mxu0 0
        %1965 = vmatprep.subr.bf16.mxu0 0
        %1966 = vmatpush1.bf16.msra.mxu0 0
        %1967 = vmatprep.subr.bf16.mxu0 0
        %1968 = vmatpush1.bf16.msra.mxu0 0
        %1969 = vmatprep.subr.bf16.mxu0 0
        %1970 = vmatpush1.bf16.msra.mxu0 0
        %1971 = vmatprep.subr.bf16.mxu0 0
        %1972 = vmatpush1.bf16.msra.mxu0 0
        %1973 = vmatprep.subr.bf16.mxu0 0
        %1974 = vmatpush1.bf16.msra.mxu0 0
        %1975 = vmatprep.subr.bf16.mxu0 0
        %1976 = vmatpush1.bf16.msra.mxu0 0
        %1977 = vmatprep.mubr.bf16.mxu0 0
        %1978 = vmatmul.mubr.bf16.gmra.mrb[0].mxu0 %v1943
        %v1979 = vpop.f32.mrb[0].mxu0
        %v1980 = vadd.f32 0.0, %v1979
        %v1981 = vpop.f32.mrb[0].mxu0
        %v1982 = vpop.f32.mrb[0].mxu0
        %v1983 = vpop.f32.mrb[0].mxu0
        %1984 = vdwg.mxu0
        %v1985 = vmax.f32 %v1935, %v1980
        %v1986 = vpack.c.bf16 %v1985, %v1985
        %v1987 = vld [vmem:[#allocation4] sm:$0x8]
        %v1988 = vsel %vm752, 0, %v1987
        %1989 = vst [vmem:[#allocation4] sm:$0x8] %v1988
        %vm1990 = vcmask 517120
        %1991 = vst.msk [vmem:[#allocation4 + $0x4] sm:$0x3] %vm1990, %v1986
        %vm1992 = vcmask 518146
        %vm1993 = vsmask.f32 2304
        %vm1994 = vmand %vm1992, %vm1993
        %v1995 = vld [vmem:[#allocation4 + $0x4] sm:$0x4]
        %v1996 = vsel %vm1994, 0, %v1995
        %1997 = vst [vmem:[#allocation4 + $0x4] sm:$0x4] %v1996
        %v1998 = vld [vmem:[#allocation4] sm:$0x8]
        %v1999 = vld [vmem:[#allocation4 + $0x4] sm:$0x3]
        %v2000 = vld [vmem:[#allocation9] sm:$0xf]
        %v2001 = vld [vmem:[#allocation9 + $0x4] sm:$0xf]
        %v2002 = vld [vmem:[#allocation9 + $0x8] sm:$0xf]
        %v2003 = vld [vmem:[#allocation9 + $0xc] sm:$0xf]
        %v2004 = vld [vmem:[#allocation9 + $0x10] sm:$0xf]
        %v2005 = vld [vmem:[#allocation9 + $0x14] sm:$0xf]
        %v2006 = vld [vmem:[#allocation9 + $0x18] sm:$0xf]
        %v2007 = vld [vmem:[#allocation9 + $0x1c] sm:$0xf]
        %s2008 = scalar_lea.vmem [#allocation9], 32
        %v2009 = vld [vmem:[%s2008] sm:$0xf]
        %v2010 = vld [vmem:[%s2008 + $0x4] sm:$0xf]
        %v2011 = vld [vmem:[%s2008 + $0x8] sm:$0xf]
        %v2012 = vld [vmem:[%s2008 + $0xc] sm:$0xf]
        %v2013 = vld [vmem:[%s2008 + $0x10] sm:$0xf]
        %v2014 = vld [vmem:[%s2008 + $0x14] sm:$0xf]
        %v2015 = vld [vmem:[%s2008 + $0x18] sm:$0xf]
        %v2016 = vld [vmem:[%s2008 + $0x1c] sm:$0xf]
        %v2025 = vunpack.c.l.b16 %v2009
        %v2026 = vunpack.c.l.b16 %v2010
        %v2027 = vunpack.c.l.b16 %v2011
        %v2028 = vunpack.c.l.b16 %v2012
        %v2029 = vunpack.c.l.b16 %v2013
        %v2030 = vunpack.c.l.b16 %v2014
        %v2031 = vunpack.c.l.b16 %v2015
        %v2032 = vunpack.c.l.b16 %v2016
        %v2033 = vpack.c.b16 %v2026, %v2025
        %v2034 = vpack.c.b16 %v2028, %v2027
        %v2035 = vpack.c.b16 %v2030, %v2029
        %v2036 = vpack.c.b16 %v2032, %v2031
        %v2042 = vsel %vm824, %v1999, 0
        %2044 = vmatprep.subr.bf16.mxu0 0
        %2045 = vmatpush1.bf16.msra.mxu0 %v2033
        %2046 = vmatprep.subr.bf16.mxu0 0
        %2047 = vmatpush1.bf16.msra.mxu0 %v2034
        %2048 = vmatprep.subr.bf16.mxu0 0
        %2049 = vmatpush1.bf16.msra.mxu0 %v2035
        %2050 = vmatprep.subr.bf16.mxu0 0
        %2051 = vmatpush1.bf16.msra.mxu0 %v2036
        %2052 = vmatprep.subr.bf16.mxu0 0
        %2053 = vmatpush1.bf16.msra.mxu0 0
        %2054 = vmatprep.subr.bf16.mxu0 0
        %2055 = vmatpush1.bf16.msra.mxu0 0
        %2056 = vmatprep.subr.bf16.mxu0 0
        %2057 = vmatpush1.bf16.msra.mxu0 0
        %2058 = vmatprep.subr.bf16.mxu0 0
        %2059 = vmatpush1.bf16.msra.mxu0 0
        %2060 = vmatprep.subr.bf16.mxu0 0
        %2061 = vmatpush1.bf16.msra.mxu0 0
        %2062 = vmatprep.subr.bf16.mxu0 0
        %2063 = vmatpush1.bf16.msra.mxu0 0
        %2064 = vmatprep.subr.bf16.mxu0 0
        %2065 = vmatpush1.bf16.msra.mxu0 0
        %2066 = vmatprep.subr.bf16.mxu0 0
        %2067 = vmatpush1.bf16.msra.mxu0 0
        %2068 = vmatprep.subr.bf16.mxu0 0
        %2069 = vmatpush1.bf16.msra.mxu0 0
        %2070 = vmatprep.subr.bf16.mxu0 0
        %2071 = vmatpush1.bf16.msra.mxu0 0
        %2072 = vmatprep.subr.bf16.mxu0 0
        %2073 = vmatpush1.bf16.msra.mxu0 0
        %2074 = vmatprep.subr.bf16.mxu0 0
        %2075 = vmatpush1.bf16.msra.mxu0 0
        %2076 = vmatprep.mubr.bf16.mxu0 0
        %2077 = vmatmul.mubr.bf16.gmra.mrb[0].mxu0 %v2042
        %v2078 = vpop.f32.mrb[0].mxu0
        %v2079 = vadd.f32 0.0, %v2078
        %v2080 = vpop.f32.mrb[0].mxu0
        %v2081 = vpop.f32.mrb[0].mxu0
        %v2082 = vpop.f32.mrb[0].mxu0
        %2083 = vdwg.mxu0
        %v2086 = vunpack.c.l.b16 %v1998
        %v2087 = vunpack.c.l.b16 %v1999
        %v2088 = vpack.c.b16 %v2087, %v2086
        %v2090 = vshrl.u32 %v2088, 16
        %v2092 = vrot.slane %v2090, 3
        %v2093 = vshll.u32 %v2088, 16
        %v2095 = vrot.slane %v2093, 4
        %v2096 = vor.u32 %v2092, %v2095
        %v2105 = vunpack.c.l.b16 %v2000
        %v2106 = vunpack.c.l.b16 %v2001
        %v2107 = vunpack.c.l.b16 %v2002
        %v2108 = vunpack.c.l.b16 %v2003
        %v2109 = vunpack.c.l.b16 %v2004
        %v2110 = vunpack.c.l.b16 %v2005
        %v2111 = vunpack.c.l.b16 %v2006
        %v2112 = vunpack.c.l.b16 %v2007
        %v2113 = vpack.c.b16 %v2106, %v2105
        %v2114 = vpack.c.b16 %v2108, %v2107
        %v2115 = vpack.c.b16 %v2110, %v2109
        %v2116 = vpack.c.b16 %v2112, %v2111
        %v2122 = vsel %vm824, %v2096, 0
        %2124 = vmatprep.subr.bf16.mxu0 0
        %2125 = vmatpush1.bf16.msra.mxu0 %v2113
        %2126 = vmatprep.subr.bf16.mxu0 0
        %2127 = vmatpush1.bf16.msra.mxu0 %v2114
        %2128 = vmatprep.subr.bf16.mxu0 0
        %2129 = vmatpush1.bf16.msra.mxu0 %v2115
        %2130 = vmatprep.subr.bf16.mxu0 0
        %2131 = vmatpush1.bf16.msra.mxu0 %v2116
        %2132 = vmatprep.subr.bf16.mxu0 0
        %2133 = vmatpush1.bf16.msra.mxu0 0
        %2134 = vmatprep.subr.bf16.mxu0 0
        %2135 = vmatpush1.bf16.msra.mxu0 0
        %2136 = vmatprep.subr.bf16.mxu0 0
        %2137 = vmatpush1.bf16.msra.mxu0 0
        %2138 = vmatprep.subr.bf16.mxu0 0
        %2139 = vmatpush1.bf16.msra.mxu0 0
        %2140 = vmatprep.subr.bf16.mxu0 0
        %2141 = vmatpush1.bf16.msra.mxu0 0
        %2142 = vmatprep.subr.bf16.mxu0 0
        %2143 = vmatpush1.bf16.msra.mxu0 0
        %2144 = vmatprep.subr.bf16.mxu0 0
        %2145 = vmatpush1.bf16.msra.mxu0 0
        %2146 = vmatprep.subr.bf16.mxu0 0
        %2147 = vmatpush1.bf16.msra.mxu0 0
        %2148 = vmatprep.subr.bf16.mxu0 0
        %2149 = vmatpush1.bf16.msra.mxu0 0
        %2150 = vmatprep.subr.bf16.mxu0 0
        %2151 = vmatpush1.bf16.msra.mxu0 0
        %2152 = vmatprep.subr.bf16.mxu0 0
        %2153 = vmatpush1.bf16.msra.mxu0 0
        %2154 = vmatprep.subr.bf16.mxu0 0
        %2155 = vmatpush1.bf16.msra.mxu0 0
        %2156 = vmatprep.mubr.bf16.mxu0 0
        %2157 = vmatmul.mubr.bf16.gmra.mrb[0].mxu0 %v2122
        %v2158 = vpop.f32.mrb[0].mxu0
        %v2159 = vadd.f32 %v2079, %v2158
        %v2160 = vpop.f32.mrb[0].mxu0
        %v2161 = vpop.f32.mrb[0].mxu0
        %v2162 = vpop.f32.mrb[0].mxu0
        %2163 = vdwg.mxu0
        %v2164 = vld [vmem:[#allocation4 + $0x4] sm:$0x7]
        %s2165 = scalar_lea.vmem [#allocation9], 64
        %v2166 = vld [vmem:[%s2165] sm:$0xf]
        %v2167 = vld [vmem:[%s2165 + $0x4] sm:$0xf]
        %v2168 = vld [vmem:[%s2165 + $0x8] sm:$0xf]
        %v2169 = vld [vmem:[%s2165 + $0xc] sm:$0xf]
        %v2170 = vld [vmem:[%s2165 + $0x10] sm:$0xf]
        %v2171 = vld [vmem:[%s2165 + $0x14] sm:$0xf]
        %v2172 = vld [vmem:[%s2165 + $0x18] sm:$0xf]
        %v2173 = vld [vmem:[%s2165 + $0x1c] sm:$0xf]
        %v2175 = vunpack.c.l.b16 %v2164
        %v2176 = vpack.c.b16 %v2175, %v2175
        %v2178 = vshrl.u32 %v2176, 16
        %v2180 = vshll.u32 %v2176, 16
        %v2182 = vrot.slane %v2180, 1
        %v2183 = vor.u32 %v2178, %v2182
        %v2192 = vunpack.c.l.b16 %v2166
        %v2193 = vunpack.c.l.b16 %v2167
        %v2194 = vunpack.c.l.b16 %v2168
        %v2195 = vunpack.c.l.b16 %v2169
        %v2196 = vunpack.c.l.b16 %v2170
        %v2197 = vunpack.c.l.b16 %v2171
        %v2198 = vunpack.c.l.b16 %v2172
        %v2199 = vunpack.c.l.b16 %v2173
        %v2200 = vpack.c.b16 %v2193, %v2192
        %v2201 = vpack.c.b16 %v2195, %v2194
        %v2202 = vpack.c.b16 %v2197, %v2196
        %v2203 = vpack.c.b16 %v2199, %v2198
        %v2209 = vsel %vm824, %v2183, 0
        %2211 = vmatprep.subr.bf16.mxu0 0
        %2212 = vmatpush1.bf16.msra.mxu0 %v2200
        %2213 = vmatprep.subr.bf16.mxu0 0
        %2214 = vmatpush1.bf16.msra.mxu0 %v2201
        %2215 = vmatprep.subr.bf16.mxu0 0
        %2216 = vmatpush1.bf16.msra.mxu0 %v2202
        %2217 = vmatprep.subr.bf16.mxu0 0
        %2218 = vmatpush1.bf16.msra.mxu0 %v2203
        %2219 = vmatprep.subr.bf16.mxu0 0
        %2220 = vmatpush1.bf16.msra.mxu0 0
        %2221 = vmatprep.subr.bf16.mxu0 0
        %2222 = vmatpush1.bf16.msra.mxu0 0
        %2223 = vmatprep.subr.bf16.mxu0 0
        %2224 = vmatpush1.bf16.msra.mxu0 0
        %2225 = vmatprep.subr.bf16.mxu0 0
        %2226 = vmatpush1.bf16.msra.mxu0 0
        %2227 = vmatprep.subr.bf16.mxu0 0
        %2228 = vmatpush1.bf16.msra.mxu0 0
        %2229 = vmatprep.subr.bf16.mxu0 0
        %2230 = vmatpush1.bf16.msra.mxu0 0
        %2231 = vmatprep.subr.bf16.mxu0 0
        %2232 = vmatpush1.bf16.msra.mxu0 0
        %2233 = vmatprep.subr.bf16.mxu0 0
        %2234 = vmatpush1.bf16.msra.mxu0 0
        %2235 = vmatprep.subr.bf16.mxu0 0
        %2236 = vmatpush1.bf16.msra.mxu0 0
        %2237 = vmatprep.subr.bf16.mxu0 0
        %2238 = vmatpush1.bf16.msra.mxu0 0
        %2239 = vmatprep.subr.bf16.mxu0 0
        %2240 = vmatpush1.bf16.msra.mxu0 0
        %2241 = vmatprep.subr.bf16.mxu0 0
        %2242 = vmatpush1.bf16.msra.mxu0 0
        %2243 = vmatprep.mubr.bf16.mxu0 0
        %2244 = vmatmul.mubr.bf16.gmra.mrb[0].mxu0 %v2209
        %v2245 = vpop.f32.mrb[0].mxu0
        %v2246 = vadd.f32 0.0, %v2245
        %v2247 = vpop.f32.mrb[0].mxu0
        %v2248 = vpop.f32.mrb[0].mxu0
        %v2249 = vpop.f32.mrb[0].mxu0
        %2250 = vdwg.mxu0
        %v2251 = vadd.f32 %v2159, %v2246
        %v2252 = vld [vmem:[#allocation12 + $0x2] sm:$0x1]
        %v2253 = vlaneseq
        %v2254 = vshrl.u32 %v2253, 7
        %v2255 = vsub.s32 0, %v2254
        %v2256 = vrot.slane %v2252, %v2255
        %v2257 = vmul.f32 %v2251, %v2256
        %v2258 = vld [vmem:[#allocation14 + $0x2] sm:$0x1]
        %v2259 = vlaneseq
        %v2260 = vshrl.u32 %v2259, 7
        %v2261 = vsub.s32 0, %v2260
        %v2262 = vrot.slane %v2258, %v2261
        %v2263 = vadd.f32 %v2257, %v2262
        %v2264 = vmax.f32 %v2263, 0.0
        %v2265 = vpack.c.bf16 %v2264, %v2264
        %v2266 = vsel %vm1896, %v2264, 0.0
        %v2267 = vrot.slane %v2266, 4
        %v2268 = vadd.f32 %v2266, %v2267
        %v2269 = vrot.slane %v2268, 2
        %v2270 = vadd.f32 %v2268, %v2269
        %v2271 = vrot.slane %v2270, 1
        %v2272 = vadd.f32 %v2270, %v2271
        %v2273 = vpack.c.bf16 %v2272, %v2272
        %v2274 = vld [vmem:[%s9] sm:$0xf]
        %v2275 = vld [vmem:[%s9 + $0x4] sm:$0xf]
        %v2276 = vld [vmem:[%s9 + $0x8] sm:$0xf]
        %v2277 = vld [vmem:[%s9 + $0xc] sm:$0xf]
        %v2278 = vld [vmem:[%s9 + $0x10] sm:$0xf]
        %v2279 = vld [vmem:[%s9 + $0x14] sm:$0xf]
        %v2280 = vld [vmem:[%s9 + $0x18] sm:$0xf]
        %v2281 = vld [vmem:[%s9 + $0x1c] sm:$0xf]
        %v2282 = vld [vmem:[%s9 + $0x20] sm:$0xf]
        %v2283 = vld [vmem:[%s9 + $0x24] sm:$0xf]
        %v2284 = vld [vmem:[%s9 + $0x28] sm:$0xf]
        %v2285 = vld [vmem:[%s9 + $0x2c] sm:$0xf]
        %v2286 = vld [vmem:[%s9 + $0x30] sm:$0xf]
        %v2287 = vld [vmem:[%s9 + $0x34] sm:$0xf]
        %v2288 = vld [vmem:[%s9 + $0x38] sm:$0xf]
        %v2289 = vld [vmem:[%s9 + $0x3c] sm:$0xf]
        %v2290 = vld [vmem:[#allocation17] sm:$0x1]
        %v2307 = vunpack.c.l.b16 %v2274
        %v2308 = vunpack.c.l.b16 %v2275
        %v2309 = vunpack.c.l.b16 %v2276
        %v2310 = vunpack.c.l.b16 %v2277
        %v2311 = vunpack.c.l.b16 %v2278
        %v2312 = vunpack.c.l.b16 %v2279
        %v2313 = vunpack.c.l.b16 %v2280
        %v2314 = vunpack.c.l.b16 %v2281
        %v2315 = vunpack.c.l.b16 %v2282
        %v2316 = vunpack.c.l.b16 %v2283
        %v2317 = vunpack.c.l.b16 %v2284
        %v2318 = vunpack.c.l.b16 %v2285
        %v2319 = vunpack.c.l.b16 %v2286
        %v2320 = vunpack.c.l.b16 %v2287
        %v2321 = vunpack.c.l.b16 %v2288
        %v2322 = vunpack.c.l.b16 %v2289
        %v2323 = vpack.c.b16 %v2308, %v2307
        %v2324 = vpack.c.b16 %v2310, %v2309
        %v2325 = vpack.c.b16 %v2312, %v2311
        %v2326 = vpack.c.b16 %v2314, %v2313
        %v2327 = vpack.c.b16 %v2316, %v2315
        %v2328 = vpack.c.b16 %v2318, %v2317
        %v2329 = vpack.c.b16 %v2320, %v2319
        %v2330 = vpack.c.b16 %v2322, %v2321
        %2339 = vmatprep.subr.bf16.mxu0 0
        %2340 = vmatpush1.bf16.msra.mxu0 %v2323
        %2341 = vmatprep.subr.bf16.mxu0 0
        %2342 = vmatpush1.bf16.msra.mxu0 %v2324
        %2343 = vmatprep.subr.bf16.mxu0 0
        %2344 = vmatpush1.bf16.msra.mxu0 %v2325
        %2345 = vmatprep.subr.bf16.mxu0 0
        %2346 = vmatpush1.bf16.msra.mxu0 %v2326
        %2347 = vmatprep.subr.bf16.mxu0 0
        %2348 = vmatpush1.bf16.msra.mxu0 %v2327
        %2349 = vmatprep.subr.bf16.mxu0 0
        %2350 = vmatpush1.bf16.msra.mxu0 %v2328
        %2351 = vmatprep.subr.bf16.mxu0 0
        %2352 = vmatpush1.bf16.msra.mxu0 %v2329
        %2353 = vmatprep.subr.bf16.mxu0 0
        %2354 = vmatpush1.bf16.msra.mxu0 %v2330
        %2355 = vmatprep.subr.bf16.mxu0 0
        %2356 = vmatpush1.bf16.msra.mxu0 0
        %2357 = vmatprep.subr.bf16.mxu0 0
        %2358 = vmatpush1.bf16.msra.mxu0 0
        %2359 = vmatprep.subr.bf16.mxu0 0
        %2360 = vmatpush1.bf16.msra.mxu0 0
        %2361 = vmatprep.subr.bf16.mxu0 0
        %2362 = vmatpush1.bf16.msra.mxu0 0
        %2363 = vmatprep.subr.bf16.mxu0 0
        %2364 = vmatpush1.bf16.msra.mxu0 0
        %2365 = vmatprep.subr.bf16.mxu0 0
        %2366 = vmatpush1.bf16.msra.mxu0 0
        %2367 = vmatprep.subr.bf16.mxu0 0
        %2368 = vmatpush1.bf16.msra.mxu0 0
        %2369 = vmatprep.subr.bf16.mxu0 0
        %2370 = vmatpush1.bf16.msra.mxu0 0
        %2371 = vmatprep.mubr.bf16.mxu0 0
        %2372 = vmatmul.mubr.bf16.gmra.mrb[0].mxu0 %v2273
        %v2373 = vpop.f32.mrb[0].mxu0
        %v2374 = vadd.f32 %v2290, %v2373
        %v2375 = vpop.f32.mrb[0].mxu0
        %v2376 = vpop.f32.mrb[0].mxu0
        %v2377 = vpop.f32.mrb[0].mxu0
        %2378 = vdwg.mxu0
        %vm2379 = vcmask 8192
        %2380 = vst.msk [vmem:[%s736] sm:$0x1] %vm2379, %v2374
        %v2381 = vld [vmem:[%s18] sm:$0xf]
        %vm2382 = vcmask 31744
        %v2384 = vsel %vm2382, %v2381, 0
        %vm2386 = vcmask 1041408
        %v2388 = vsel %vm2386, %v2265, 0
        %2390 = vmatprep.subr.bf16.mxu0 0
        %2391 = vmatpush1.bf16.msra.mxu0 %v2388
        %2392 = vmatprep.subr.bf16.mxu0 0
        %2393 = vmatpush1.bf16.msra.mxu0 0
        %2394 = vmatprep.subr.bf16.mxu0 0
        %2395 = vmatpush1.bf16.msra.mxu0 0
        %2396 = vmatprep.subr.bf16.mxu0 0
        %2397 = vmatpush1.bf16.msra.mxu0 0
        %2398 = vmatprep.subr.bf16.mxu0 0
        %2399 = vmatpush1.bf16.msra.mxu0 0
        %2400 = vmatprep.subr.bf16.mxu0 0
        %2401 = vmatpush1.bf16.msra.mxu0 0
        %2402 = vmatprep.subr.bf16.mxu0 0
        %2403 = vmatpush1.bf16.msra.mxu0 0
        %2404 = vmatprep.subr.bf16.mxu0 0
        %2405 = vmatpush1.bf16.msra.mxu0 0
        %2406 = vmatprep.subr.bf16.mxu0 0
        %2407 = vmatpush1.bf16.msra.mxu0 0
        %2408 = vmatprep.subr.bf16.mxu0 0
        %2409 = vmatpush1.bf16.msra.mxu0 0
        %2410 = vmatprep.subr.bf16.mxu0 0
        %2411 = vmatpush1.bf16.msra.mxu0 0
        %2412 = vmatprep.subr.bf16.mxu0 0
        %2413 = vmatpush1.bf16.msra.mxu0 0
        %2414 = vmatprep.subr.bf16.mxu0 0
        %2415 = vmatpush1.bf16.msra.mxu0 0
        %2416 = vmatprep.subr.bf16.mxu0 0
        %2417 = vmatpush1.bf16.msra.mxu0 0
        %2418 = vmatprep.subr.bf16.mxu0 0
        %2419 = vmatpush1.bf16.msra.mxu0 0
        %2420 = vmatprep.subr.bf16.mxu0 0
        %2421 = vmatpush1.bf16.msra.mxu0 0
        %2422 = vmatprep.mubr.bf16.mxu0 0
        %2423 = vmatmul.mubr.bf16.gmra.mrb[0].mxu0 %v2384
        %v2424 = vpop.f32.mrb[0].mxu0
        %v2425 = vadd.f32 0.0, %v2424
        %v2426 = vpop.f32.mrb[0].mxu0
        %v2427 = vpop.f32.mrb[0].mxu0
        %v2428 = vpop.f32.mrb[0].mxu0
        %2429 = vdwg.mxu0
        %v2430 = vpack.c.bf16 %v2425, %v2425
        %v2431 = vld [vmem:[#allocation5] sm:$0x8]
        %v2432 = vsel %vm1070, 0, %v2431
        %2433 = vst [vmem:[#allocation5] sm:$0x8] %v2432
        %2434 = vst [vmem:[#allocation5 + $0x4] sm:$0xf] %v2430
        %v2435 = vld [vmem:[#allocation5 + $0x8] sm:$0x1]
        %v2436 = vsel %vm1676, 0, %v2435
        %2437 = vst [vmem:[#allocation5 + $0x8] sm:$0x1] %v2436
        %v2438 = vld [vmem:[#allocation5] sm:$0x8]
        %v2439 = vld [vmem:[#allocation5 + $0x4] sm:$0xf]
        %v2440 = vld [vmem:[%s4] sm:$0xf]
        %v2441 = vld [vmem:[%s4 + $0x4] sm:$0xf]
        %v2442 = vld [vmem:[%s4 + $0x8] sm:$0xf]
        %v2443 = vld [vmem:[%s4 + $0xc] sm:$0xf]
        %v2444 = vld [vmem:[%s4 + $0x10] sm:$0xf]
        %v2445 = vld [vmem:[%s4 + $0x14] sm:$0xf]
        %v2446 = vld [vmem:[%s4 + $0x18] sm:$0xf]
        %v2447 = vld [vmem:[%s4 + $0x1c] sm:$0xf]
        %v2448 = vld [vmem:[%s4 + $0x20] sm:$0xf]
        %v2449 = vld [vmem:[%s4 + $0x24] sm:$0xf]
        %v2450 = vld [vmem:[%s4 + $0x28] sm:$0xf]
        %v2451 = vld [vmem:[%s4 + $0x2c] sm:$0xf]
        %v2452 = vld [vmem:[%s4 + $0x30] sm:$0xf]
        %v2453 = vld [vmem:[%s4 + $0x34] sm:$0xf]
        %v2454 = vld [vmem:[%s4 + $0x38] sm:$0xf]
        %v2455 = vld [vmem:[%s4 + $0x3c] sm:$0xf]
        %s2456 = scalar_lea.vmem %s4, 64
        %v2457 = vld [vmem:[%s2456] sm:$0xf]
        %v2458 = vld [vmem:[%s2456 + $0x4] sm:$0xf]
        %v2459 = vld [vmem:[%s2456 + $0x8] sm:$0xf]
        %v2460 = vld [vmem:[%s2456 + $0xc] sm:$0xf]
        %v2461 = vld [vmem:[%s2456 + $0x10] sm:$0xf]
        %v2462 = vld [vmem:[%s2456 + $0x14] sm:$0xf]
        %v2463 = vld [vmem:[%s2456 + $0x18] sm:$0xf]
        %v2464 = vld [vmem:[%s2456 + $0x1c] sm:$0xf]
        %v2465 = vld [vmem:[%s2456 + $0x20] sm:$0xf]
        %v2466 = vld [vmem:[%s2456 + $0x24] sm:$0xf]
        %v2467 = vld [vmem:[%s2456 + $0x28] sm:$0xf]
        %v2468 = vld [vmem:[%s2456 + $0x2c] sm:$0xf]
        %v2469 = vld [vmem:[%s2456 + $0x30] sm:$0xf]
        %v2470 = vld [vmem:[%s2456 + $0x34] sm:$0xf]
        %v2471 = vld [vmem:[%s2456 + $0x38] sm:$0xf]
        %v2472 = vld [vmem:[%s2456 + $0x3c] sm:$0xf]
        %v2489 = vunpack.c.l.b16 %v2457
        %v2490 = vunpack.c.l.b16 %v2458
        %v2491 = vunpack.c.l.b16 %v2459
        %v2492 = vunpack.c.l.b16 %v2460
        %v2493 = vunpack.c.l.b16 %v2461
        %v2494 = vunpack.c.l.b16 %v2462
        %v2495 = vunpack.c.l.b16 %v2463
        %v2496 = vunpack.c.l.b16 %v2464
        %v2497 = vunpack.c.l.b16 %v2465
        %v2498 = vunpack.c.l.b16 %v2466
        %v2499 = vunpack.c.l.b16 %v2467
        %v2500 = vunpack.c.l.b16 %v2468
        %v2501 = vunpack.c.l.b16 %v2469
        %v2502 = vunpack.c.l.b16 %v2470
        %v2503 = vunpack.c.l.b16 %v2471
        %v2504 = vunpack.c.l.b16 %v2472
        %v2505 = vpack.c.b16 %v2490, %v2489
        %v2506 = vpack.c.b16 %v2492, %v2491
        %v2507 = vpack.c.b16 %v2494, %v2493
        %v2508 = vpack.c.b16 %v2496, %v2495
        %v2509 = vpack.c.b16 %v2498, %v2497
        %v2510 = vpack.c.b16 %v2500, %v2499
        %v2511 = vpack.c.b16 %v2502, %v2501
        %v2512 = vpack.c.b16 %v2504, %v2503
        %2521 = vmatprep.subr.bf16.mxu0 0
        %2522 = vmatpush1.bf16.msra.mxu0 %v2505
        %2523 = vmatprep.subr.bf16.mxu0 0
        %2524 = vmatpush1.bf16.msra.mxu0 %v2506
        %2525 = vmatprep.subr.bf16.mxu0 0
        %2526 = vmatpush1.bf16.msra.mxu0 %v2507
        %2527 = vmatprep.subr.bf16.mxu0 0
        %2528 = vmatpush1.bf16.msra.mxu0 %v2508
        %2529 = vmatprep.subr.bf16.mxu0 0
        %2530 = vmatpush1.bf16.msra.mxu0 %v2509
        %2531 = vmatprep.subr.bf16.mxu0 0
        %2532 = vmatpush1.bf16.msra.mxu0 %v2510
        %2533 = vmatprep.subr.bf16.mxu0 0
        %2534 = vmatpush1.bf16.msra.mxu0 %v2511
        %2535 = vmatprep.subr.bf16.mxu0 0
        %2536 = vmatpush1.bf16.msra.mxu0 %v2512
        %2537 = vmatprep.subr.bf16.mxu0 0
        %2538 = vmatpush1.bf16.msra.mxu0 0
        %2539 = vmatprep.subr.bf16.mxu0 0
        %2540 = vmatpush1.bf16.msra.mxu0 0
        %2541 = vmatprep.subr.bf16.mxu0 0
        %2542 = vmatpush1.bf16.msra.mxu0 0
        %2543 = vmatprep.subr.bf16.mxu0 0
        %2544 = vmatpush1.bf16.msra.mxu0 0
        %2545 = vmatprep.subr.bf16.mxu0 0
        %2546 = vmatpush1.bf16.msra.mxu0 0
        %2547 = vmatprep.subr.bf16.mxu0 0
        %2548 = vmatpush1.bf16.msra.mxu0 0
        %2549 = vmatprep.subr.bf16.mxu0 0
        %2550 = vmatpush1.bf16.msra.mxu0 0
        %2551 = vmatprep.subr.bf16.mxu0 0
        %2552 = vmatpush1.bf16.msra.mxu0 0
        %2553 = vmatprep.mubr.bf16.mxu0 0
        %2554 = vmatmul.mubr.bf16.gmra.mrb[0].mxu0 %v2439
        %v2555 = vpop.f32.mrb[0].mxu0
        %v2556 = vadd.f32 0.0, %v2555
        %v2557 = vpop.f32.mrb[0].mxu0
        %v2558 = vpop.f32.mrb[0].mxu0
        %v2559 = vpop.f32.mrb[0].mxu0
        %2560 = vdwg.mxu0
        %v2563 = vunpack.c.l.b16 %v2438
        %v2564 = vunpack.c.l.b16 %v2439
        %v2565 = vpack.c.b16 %v2564, %v2563
        %v2567 = vshrl.u32 %v2565, 16
        %v2569 = vrot.slane %v2567, 3
        %v2570 = vshll.u32 %v2565, 16
        %v2572 = vrot.slane %v2570, 4
        %v2573 = vor.u32 %v2569, %v2572
        %v2591 = vunpack.c.l.b16 %v2440
        %v2592 = vunpack.c.l.b16 %v2441
        %v2593 = vunpack.c.l.b16 %v2442
        %v2594 = vunpack.c.l.b16 %v2443
        %v2595 = vunpack.c.l.b16 %v2444
        %v2596 = vunpack.c.l.b16 %v2445
        %v2597 = vunpack.c.l.b16 %v2446
        %v2598 = vunpack.c.l.b16 %v2447
        %v2599 = vunpack.c.l.b16 %v2448
        %v2600 = vunpack.c.l.b16 %v2449
        %v2601 = vunpack.c.l.b16 %v2450
        %v2602 = vunpack.c.l.b16 %v2451
        %v2603 = vunpack.c.l.b16 %v2452
        %v2604 = vunpack.c.l.b16 %v2453
        %v2605 = vunpack.c.l.b16 %v2454
        %v2606 = vunpack.c.l.b16 %v2455
        %v2607 = vpack.c.b16 %v2592, %v2591
        %v2608 = vpack.c.b16 %v2594, %v2593
        %v2609 = vpack.c.b16 %v2596, %v2595
        %v2610 = vpack.c.b16 %v2598, %v2597
        %v2611 = vpack.c.b16 %v2600, %v2599
        %v2612 = vpack.c.b16 %v2602, %v2601
        %v2613 = vpack.c.b16 %v2604, %v2603
        %v2614 = vpack.c.b16 %v2606, %v2605
        %2623 = vmatprep.subr.bf16.mxu0 0
        %2624 = vmatpush1.bf16.msra.mxu0 %v2607
        %2625 = vmatprep.subr.bf16.mxu0 0
        %2626 = vmatpush1.bf16.msra.mxu0 %v2608
        %2627 = vmatprep.subr.bf16.mxu0 0
        %2628 = vmatpush1.bf16.msra.mxu0 %v2609
        %2629 = vmatprep.subr.bf16.mxu0 0
        %2630 = vmatpush1.bf16.msra.mxu0 %v2610
        %2631 = vmatprep.subr.bf16.mxu0 0
        %2632 = vmatpush1.bf16.msra.mxu0 %v2611
        %2633 = vmatprep.subr.bf16.mxu0 0
        %2634 = vmatpush1.bf16.msra.mxu0 %v2612
        %2635 = vmatprep.subr.bf16.mxu0 0
        %2636 = vmatpush1.bf16.msra.mxu0 %v2613
        %2637 = vmatprep.subr.bf16.mxu0 0
        %2638 = vmatpush1.bf16.msra.mxu0 %v2614
        %2639 = vmatprep.subr.bf16.mxu0 0
        %2640 = vmatpush1.bf16.msra.mxu0 0
        %2641 = vmatprep.subr.bf16.mxu0 0
        %2642 = vmatpush1.bf16.msra.mxu0 0
        %2643 = vmatprep.subr.bf16.mxu0 0
        %2644 = vmatpush1.bf16.msra.mxu0 0
        %2645 = vmatprep.subr.bf16.mxu0 0
        %2646 = vmatpush1.bf16.msra.mxu0 0
        %2647 = vmatprep.subr.bf16.mxu0 0
        %2648 = vmatpush1.bf16.msra.mxu0 0
        %2649 = vmatprep.subr.bf16.mxu0 0
        %2650 = vmatpush1.bf16.msra.mxu0 0
        %2651 = vmatprep.subr.bf16.mxu0 0
        %2652 = vmatpush1.bf16.msra.mxu0 0
        %2653 = vmatprep.subr.bf16.mxu0 0
        %2654 = vmatpush1.bf16.msra.mxu0 0
        %2655 = vmatprep.mubr.bf16.mxu0 0
        %2656 = vmatmul.mubr.bf16.gmra.mrb[0].mxu0 %v2573
        %v2657 = vpop.f32.mrb[0].mxu0
        %v2658 = vadd.f32 %v2556, %v2657
        %v2659 = vpop.f32.mrb[0].mxu0
        %v2660 = vpop.f32.mrb[0].mxu0
        %v2661 = vpop.f32.mrb[0].mxu0
        %2662 = vdwg.mxu0
        %v2663 = vld [vmem:[#allocation5 + $0x4] sm:$0xf]
        %v2664 = vld [vmem:[#allocation5 + $0x8] sm:$0x1]
        %s2665 = scalar_lea.vmem %s4, 128
        %v2666 = vld [vmem:[%s2665] sm:$0xf]
        %v2667 = vld [vmem:[%s2665 + $0x4] sm:$0xf]
        %v2668 = vld [vmem:[%s2665 + $0x8] sm:$0xf]
        %v2669 = vld [vmem:[%s2665 + $0xc] sm:$0xf]
        %v2670 = vld [vmem:[%s2665 + $0x10] sm:$0xf]
        %v2671 = vld [vmem:[%s2665 + $0x14] sm:$0xf]
        %v2672 = vld [vmem:[%s2665 + $0x18] sm:$0xf]
        %v2673 = vld [vmem:[%s2665 + $0x1c] sm:$0xf]
        %v2674 = vld [vmem:[%s2665 + $0x20] sm:$0xf]
        %v2675 = vld [vmem:[%s2665 + $0x24] sm:$0xf]
        %v2676 = vld [vmem:[%s2665 + $0x28] sm:$0xf]
        %v2677 = vld [vmem:[%s2665 + $0x2c] sm:$0xf]
        %v2678 = vld [vmem:[%s2665 + $0x30] sm:$0xf]
        %v2679 = vld [vmem:[%s2665 + $0x34] sm:$0xf]
        %v2680 = vld [vmem:[%s2665 + $0x38] sm:$0xf]
        %v2681 = vld [vmem:[%s2665 + $0x3c] sm:$0xf]
        %v2684 = vunpack.c.l.b16 %v2663
        %v2685 = vunpack.c.l.b16 %v2664
        %v2686 = vpack.c.b16 %v2685, %v2684
        %v2688 = vshrl.u32 %v2686, 16
        %v2690 = vshll.u32 %v2686, 16
        %v2692 = vrot.slane %v2690, 1
        %v2693 = vor.u32 %v2688, %v2692
        %v2711 = vunpack.c.l.b16 %v2666
        %v2712 = vunpack.c.l.b16 %v2667
        %v2713 = vunpack.c.l.b16 %v2668
        %v2714 = vunpack.c.l.b16 %v2669
        %v2715 = vunpack.c.l.b16 %v2670
        %v2716 = vunpack.c.l.b16 %v2671
        %v2717 = vunpack.c.l.b16 %v2672
        %v2718 = vunpack.c.l.b16 %v2673
        %v2719 = vunpack.c.l.b16 %v2674
        %v2720 = vunpack.c.l.b16 %v2675
        %v2721 = vunpack.c.l.b16 %v2676
        %v2722 = vunpack.c.l.b16 %v2677
        %v2723 = vunpack.c.l.b16 %v2678
        %v2724 = vunpack.c.l.b16 %v2679
        %v2725 = vunpack.c.l.b16 %v2680
        %v2726 = vunpack.c.l.b16 %v2681
        %v2727 = vpack.c.b16 %v2712, %v2711
        %v2728 = vpack.c.b16 %v2714, %v2713
        %v2729 = vpack.c.b16 %v2716, %v2715
        %v2730 = vpack.c.b16 %v2718, %v2717
        %v2731 = vpack.c.b16 %v2720, %v2719
        %v2732 = vpack.c.b16 %v2722, %v2721
        %v2733 = vpack.c.b16 %v2724, %v2723
        %v2734 = vpack.c.b16 %v2726, %v2725
        %2743 = vmatprep.subr.bf16.mxu0 0
        %2744 = vmatpush1.bf16.msra.mxu0 %v2727
        %2745 = vmatprep.subr.bf16.mxu0 0
        %2746 = vmatpush1.bf16.msra.mxu0 %v2728
        %2747 = vmatprep.subr.bf16.mxu0 0
        %2748 = vmatpush1.bf16.msra.mxu0 %v2729
        %2749 = vmatprep.subr.bf16.mxu0 0
        %2750 = vmatpush1.bf16.msra.mxu0 %v2730
        %2751 = vmatprep.subr.bf16.mxu0 0
        %2752 = vmatpush1.bf16.msra.mxu0 %v2731
        %2753 = vmatprep.subr.bf16.mxu0 0
        %2754 = vmatpush1.bf16.msra.mxu0 %v2732
        %2755 = vmatprep.subr.bf16.mxu0 0
        %2756 = vmatpush1.bf16.msra.mxu0 %v2733
        %2757 = vmatprep.subr.bf16.mxu0 0
        %2758 = vmatpush1.bf16.msra.mxu0 %v2734
        %2759 = vmatprep.subr.bf16.mxu0 0
        %2760 = vmatpush1.bf16.msra.mxu0 0
        %2761 = vmatprep.subr.bf16.mxu0 0
        %2762 = vmatpush1.bf16.msra.mxu0 0
        %2763 = vmatprep.subr.bf16.mxu0 0
        %2764 = vmatpush1.bf16.msra.mxu0 0
        %2765 = vmatprep.subr.bf16.mxu0 0
        %2766 = vmatpush1.bf16.msra.mxu0 0
        %2767 = vmatprep.subr.bf16.mxu0 0
        %2768 = vmatpush1.bf16.msra.mxu0 0
        %2769 = vmatprep.subr.bf16.mxu0 0
        %2770 = vmatpush1.bf16.msra.mxu0 0
        %2771 = vmatprep.subr.bf16.mxu0 0
        %2772 = vmatpush1.bf16.msra.mxu0 0
        %2773 = vmatprep.subr.bf16.mxu0 0
        %2774 = vmatpush1.bf16.msra.mxu0 0
        %2775 = vmatprep.mubr.bf16.mxu0 0
        %2776 = vmatmul.mubr.bf16.gmra.mrb[0].mxu0 %v2693
        %v2777 = vpop.f32.mrb[0].mxu0
        %v2778 = vadd.f32 0.0, %v2777
        %v2779 = vpop.f32.mrb[0].mxu0
        %v2780 = vpop.f32.mrb[0].mxu0
        %v2781 = vpop.f32.mrb[0].mxu0
        %2782 = vdwg.mxu0
        %v2783 = vadd.f32 %v2658, %v2778
        %v2784 = vld [vmem:[#allocation6] sm:$0x8]
        %v2785 = vld [vmem:[#allocation6 + $0x4] sm:$0xf]
        %v2786 = vld [vmem:[%s5] sm:$0xf]
        %v2787 = vld [vmem:[%s5 + $0x4] sm:$0xf]
        %v2788 = vld [vmem:[%s5 + $0x8] sm:$0xf]
        %v2789 = vld [vmem:[%s5 + $0xc] sm:$0xf]
        %v2790 = vld [vmem:[%s5 + $0x10] sm:$0xf]
        %v2791 = vld [vmem:[%s5 + $0x14] sm:$0xf]
        %v2792 = vld [vmem:[%s5 + $0x18] sm:$0xf]
        %v2793 = vld [vmem:[%s5 + $0x1c] sm:$0xf]
        %v2794 = vld [vmem:[%s5 + $0x20] sm:$0xf]
        %v2795 = vld [vmem:[%s5 + $0x24] sm:$0xf]
        %v2796 = vld [vmem:[%s5 + $0x28] sm:$0xf]
        %v2797 = vld [vmem:[%s5 + $0x2c] sm:$0xf]
        %v2798 = vld [vmem:[%s5 + $0x30] sm:$0xf]
        %v2799 = vld [vmem:[%s5 + $0x34] sm:$0xf]
        %v2800 = vld [vmem:[%s5 + $0x38] sm:$0xf]
        %v2801 = vld [vmem:[%s5 + $0x3c] sm:$0xf]
        %s2802 = scalar_lea.vmem %s5, 64
        %v2803 = vld [vmem:[%s2802] sm:$0xf]
        %v2804 = vld [vmem:[%s2802 + $0x4] sm:$0xf]
        %v2805 = vld [vmem:[%s2802 + $0x8] sm:$0xf]
        %v2806 = vld [vmem:[%s2802 + $0xc] sm:$0xf]
        %v2807 = vld [vmem:[%s2802 + $0x10] sm:$0xf]
        %v2808 = vld [vmem:[%s2802 + $0x14] sm:$0xf]
        %v2809 = vld [vmem:[%s2802 + $0x18] sm:$0xf]
        %v2810 = vld [vmem:[%s2802 + $0x1c] sm:$0xf]
        %v2811 = vld [vmem:[%s2802 + $0x20] sm:$0xf]
        %v2812 = vld [vmem:[%s2802 + $0x24] sm:$0xf]
        %v2813 = vld [vmem:[%s2802 + $0x28] sm:$0xf]
        %v2814 = vld [vmem:[%s2802 + $0x2c] sm:$0xf]
        %v2815 = vld [vmem:[%s2802 + $0x30] sm:$0xf]
        %v2816 = vld [vmem:[%s2802 + $0x34] sm:$0xf]
        %v2817 = vld [vmem:[%s2802 + $0x38] sm:$0xf]
        %v2818 = vld [vmem:[%s2802 + $0x3c] sm:$0xf]
        %v2835 = vunpack.c.l.b16 %v2803
        %v2836 = vunpack.c.l.b16 %v2804
        %v2837 = vunpack.c.l.b16 %v2805
        %v2838 = vunpack.c.l.b16 %v2806
        %v2839 = vunpack.c.l.b16 %v2807
        %v2840 = vunpack.c.l.b16 %v2808
        %v2841 = vunpack.c.l.b16 %v2809
        %v2842 = vunpack.c.l.b16 %v2810
        %v2843 = vunpack.c.l.b16 %v2811
        %v2844 = vunpack.c.l.b16 %v2812
        %v2845 = vunpack.c.l.b16 %v2813
        %v2846 = vunpack.c.l.b16 %v2814
        %v2847 = vunpack.c.l.b16 %v2815
        %v2848 = vunpack.c.l.b16 %v2816
        %v2849 = vunpack.c.l.b16 %v2817
        %v2850 = vunpack.c.l.b16 %v2818
        %v2851 = vpack.c.b16 %v2836, %v2835
        %v2852 = vpack.c.b16 %v2838, %v2837
        %v2853 = vpack.c.b16 %v2840, %v2839
        %v2854 = vpack.c.b16 %v2842, %v2841
        %v2855 = vpack.c.b16 %v2844, %v2843
        %v2856 = vpack.c.b16 %v2846, %v2845
        %v2857 = vpack.c.b16 %v2848, %v2847
        %v2858 = vpack.c.b16 %v2850, %v2849
        %2867 = vmatprep.subr.bf16.mxu0 0
        %2868 = vmatpush1.bf16.msra.mxu0 %v2851
        %2869 = vmatprep.subr.bf16.mxu0 0
        %2870 = vmatpush1.bf16.msra.mxu0 %v2852
        %2871 = vmatprep.subr.bf16.mxu0 0
        %2872 = vmatpush1.bf16.msra.mxu0 %v2853
        %2873 = vmatprep.subr.bf16.mxu0 0
        %2874 = vmatpush1.bf16.msra.mxu0 %v2854
        %2875 = vmatprep.subr.bf16.mxu0 0
        %2876 = vmatpush1.bf16.msra.mxu0 %v2855
        %2877 = vmatprep.subr.bf16.mxu0 0
        %2878 = vmatpush1.bf16.msra.mxu0 %v2856
        %2879 = vmatprep.subr.bf16.mxu0 0
        %2880 = vmatpush1.bf16.msra.mxu0 %v2857
        %2881 = vmatprep.subr.bf16.mxu0 0
        %2882 = vmatpush1.bf16.msra.mxu0 %v2858
        %2883 = vmatprep.subr.bf16.mxu0 0
        %2884 = vmatpush1.bf16.msra.mxu0 0
        %2885 = vmatprep.subr.bf16.mxu0 0
        %2886 = vmatpush1.bf16.msra.mxu0 0
        %2887 = vmatprep.subr.bf16.mxu0 0
        %2888 = vmatpush1.bf16.msra.mxu0 0
        %2889 = vmatprep.subr.bf16.mxu0 0
        %2890 = vmatpush1.bf16.msra.mxu0 0
        %2891 = vmatprep.subr.bf16.mxu0 0
        %2892 = vmatpush1.bf16.msra.mxu0 0
        %2893 = vmatprep.subr.bf16.mxu0 0
        %2894 = vmatpush1.bf16.msra.mxu0 0
        %2895 = vmatprep.subr.bf16.mxu0 0
        %2896 = vmatpush1.bf16.msra.mxu0 0
        %2897 = vmatprep.subr.bf16.mxu0 0
        %2898 = vmatpush1.bf16.msra.mxu0 0
        %2899 = vmatprep.mubr.bf16.mxu0 0
        %2900 = vmatmul.mubr.bf16.gmra.mrb[0].mxu0 %v2785
        %v2901 = vpop.f32.mrb[0].mxu0
        %v2902 = vadd.f32 0.0, %v2901
        %v2903 = vpop.f32.mrb[0].mxu0
        %v2904 = vpop.f32.mrb[0].mxu0
        %v2905 = vpop.f32.mrb[0].mxu0
        %2906 = vdwg.mxu0
        %v2909 = vunpack.c.l.b16 %v2784
        %v2910 = vunpack.c.l.b16 %v2785
        %v2911 = vpack.c.b16 %v2910, %v2909
        %v2913 = vshrl.u32 %v2911, 16
        %v2915 = vrot.slane %v2913, 3
        %v2916 = vshll.u32 %v2911, 16
        %v2918 = vrot.slane %v2916, 4
        %v2919 = vor.u32 %v2915, %v2918
        %v2937 = vunpack.c.l.b16 %v2786
        %v2938 = vunpack.c.l.b16 %v2787
        %v2939 = vunpack.c.l.b16 %v2788
        %v2940 = vunpack.c.l.b16 %v2789
        %v2941 = vunpack.c.l.b16 %v2790
        %v2942 = vunpack.c.l.b16 %v2791
        %v2943 = vunpack.c.l.b16 %v2792
        %v2944 = vunpack.c.l.b16 %v2793
        %v2945 = vunpack.c.l.b16 %v2794
        %v2946 = vunpack.c.l.b16 %v2795
        %v2947 = vunpack.c.l.b16 %v2796
        %v2948 = vunpack.c.l.b16 %v2797
        %v2949 = vunpack.c.l.b16 %v2798
        %v2950 = vunpack.c.l.b16 %v2799
        %v2951 = vunpack.c.l.b16 %v2800
        %v2952 = vunpack.c.l.b16 %v2801
        %v2953 = vpack.c.b16 %v2938, %v2937
        %v2954 = vpack.c.b16 %v2940, %v2939
        %v2955 = vpack.c.b16 %v2942, %v2941
        %v2956 = vpack.c.b16 %v2944, %v2943
        %v2957 = vpack.c.b16 %v2946, %v2945
        %v2958 = vpack.c.b16 %v2948, %v2947
        %v2959 = vpack.c.b16 %v2950, %v2949
        %v2960 = vpack.c.b16 %v2952, %v2951
        %2969 = vmatprep.subr.bf16.mxu0 0
        %2970 = vmatpush1.bf16.msra.mxu0 %v2953
        %2971 = vmatprep.subr.bf16.mxu0 0
        %2972 = vmatpush1.bf16.msra.mxu0 %v2954
        %2973 = vmatprep.subr.bf16.mxu0 0
        %2974 = vmatpush1.bf16.msra.mxu0 %v2955
        %2975 = vmatprep.subr.bf16.mxu0 0
        %2976 = vmatpush1.bf16.msra.mxu0 %v2956
        %2977 = vmatprep.subr.bf16.mxu0 0
        %2978 = vmatpush1.bf16.msra.mxu0 %v2957
        %2979 = vmatprep.subr.bf16.mxu0 0
        %2980 = vmatpush1.bf16.msra.mxu0 %v2958
        %2981 = vmatprep.subr.bf16.mxu0 0
        %2982 = vmatpush1.bf16.msra.mxu0 %v2959
        %2983 = vmatprep.subr.bf16.mxu0 0
        %2984 = vmatpush1.bf16.msra.mxu0 %v2960
        %2985 = vmatprep.subr.bf16.mxu0 0
        %2986 = vmatpush1.bf16.msra.mxu0 0
        %2987 = vmatprep.subr.bf16.mxu0 0
        %2988 = vmatpush1.bf16.msra.mxu0 0
        %2989 = vmatprep.subr.bf16.mxu0 0
        %2990 = vmatpush1.bf16.msra.mxu0 0
        %2991 = vmatprep.subr.bf16.mxu0 0
        %2992 = vmatpush1.bf16.msra.mxu0 0
        %2993 = vmatprep.subr.bf16.mxu0 0
        %2994 = vmatpush1.bf16.msra.mxu0 0
        %2995 = vmatprep.subr.bf16.mxu0 0
        %2996 = vmatpush1.bf16.msra.mxu0 0
        %2997 = vmatprep.subr.bf16.mxu0 0
        %2998 = vmatpush1.bf16.msra.mxu0 0
        %2999 = vmatprep.subr.bf16.mxu0 0
        %3000 = vmatpush1.bf16.msra.mxu0 0
        %3001 = vmatprep.mubr.bf16.mxu0 0
        %3002 = vmatmul.mubr.bf16.gmra.mrb[0].mxu0 %v2919
        %v3003 = vpop.f32.mrb[0].mxu0
        %v3004 = vadd.f32 %v2902, %v3003
        %v3005 = vpop.f32.mrb[0].mxu0
        %v3006 = vpop.f32.mrb[0].mxu0
        %v3007 = vpop.f32.mrb[0].mxu0
        %3008 = vdwg.mxu0
        %v3009 = vld [vmem:[#allocation6 + $0x4] sm:$0xf]
        %v3010 = vld [vmem:[#allocation6 + $0x8] sm:$0x1]
        %s3011 = scalar_lea.vmem %s5, 128
        %v3012 = vld [vmem:[%s3011] sm:$0xf]
        %v3013 = vld [vmem:[%s3011 + $0x4] sm:$0xf]
        %v3014 = vld [vmem:[%s3011 + $0x8] sm:$0xf]
        %v3015 = vld [vmem:[%s3011 + $0xc] sm:$0xf]
        %v3016 = vld [vmem:[%s3011 + $0x10] sm:$0xf]
        %v3017 = vld [vmem:[%s3011 + $0x14] sm:$0xf]
        %v3018 = vld [vmem:[%s3011 + $0x18] sm:$0xf]
        %v3019 = vld [vmem:[%s3011 + $0x1c] sm:$0xf]
        %v3020 = vld [vmem:[%s3011 + $0x20] sm:$0xf]
        %v3021 = vld [vmem:[%s3011 + $0x24] sm:$0xf]
        %v3022 = vld [vmem:[%s3011 + $0x28] sm:$0xf]
        %v3023 = vld [vmem:[%s3011 + $0x2c] sm:$0xf]
        %v3024 = vld [vmem:[%s3011 + $0x30] sm:$0xf]
        %v3025 = vld [vmem:[%s3011 + $0x34] sm:$0xf]
        %v3026 = vld [vmem:[%s3011 + $0x38] sm:$0xf]
        %v3027 = vld [vmem:[%s3011 + $0x3c] sm:$0xf]
        %v3030 = vunpack.c.l.b16 %v3009
        %v3031 = vunpack.c.l.b16 %v3010
        %v3032 = vpack.c.b16 %v3031, %v3030
        %v3034 = vshrl.u32 %v3032, 16
        %v3036 = vshll.u32 %v3032, 16
        %v3038 = vrot.slane %v3036, 1
        %v3039 = vor.u32 %v3034, %v3038
        %v3057 = vunpack.c.l.b16 %v3012
        %v3058 = vunpack.c.l.b16 %v3013
        %v3059 = vunpack.c.l.b16 %v3014
        %v3060 = vunpack.c.l.b16 %v3015
        %v3061 = vunpack.c.l.b16 %v3016
        %v3062 = vunpack.c.l.b16 %v3017
        %v3063 = vunpack.c.l.b16 %v3018
        %v3064 = vunpack.c.l.b16 %v3019
        %v3065 = vunpack.c.l.b16 %v3020
        %v3066 = vunpack.c.l.b16 %v3021
        %v3067 = vunpack.c.l.b16 %v3022
        %v3068 = vunpack.c.l.b16 %v3023
        %v3069 = vunpack.c.l.b16 %v3024
        %v3070 = vunpack.c.l.b16 %v3025
        %v3071 = vunpack.c.l.b16 %v3026
        %v3072 = vunpack.c.l.b16 %v3027
        %v3073 = vpack.c.b16 %v3058, %v3057
        %v3074 = vpack.c.b16 %v3060, %v3059
        %v3075 = vpack.c.b16 %v3062, %v3061
        %v3076 = vpack.c.b16 %v3064, %v3063
        %v3077 = vpack.c.b16 %v3066, %v3065
        %v3078 = vpack.c.b16 %v3068, %v3067
        %v3079 = vpack.c.b16 %v3070, %v3069
        %v3080 = vpack.c.b16 %v3072, %v3071
        %3089 = vmatprep.subr.bf16.mxu0 0
        %3090 = vmatpush1.bf16.msra.mxu0 %v3073
        %3091 = vmatprep.subr.bf16.mxu0 0
        %3092 = vmatpush1.bf16.msra.mxu0 %v3074
        %3093 = vmatprep.subr.bf16.mxu0 0
        %3094 = vmatpush1.bf16.msra.mxu0 %v3075
        %3095 = vmatprep.subr.bf16.mxu0 0
        %3096 = vmatpush1.bf16.msra.mxu0 %v3076
        %3097 = vmatprep.subr.bf16.mxu0 0
        %3098 = vmatpush1.bf16.msra.mxu0 %v3077
        %3099 = vmatprep.subr.bf16.mxu0 0
        %3100 = vmatpush1.bf16.msra.mxu0 %v3078
        %3101 = vmatprep.subr.bf16.mxu0 0
        %3102 = vmatpush1.bf16.msra.mxu0 %v3079
        %3103 = vmatprep.subr.bf16.mxu0 0
        %3104 = vmatpush1.bf16.msra.mxu0 %v3080
        %3105 = vmatprep.subr.bf16.mxu0 0
        %3106 = vmatpush1.bf16.msra.mxu0 0
        %3107 = vmatprep.subr.bf16.mxu0 0
        %3108 = vmatpush1.bf16.msra.mxu0 0
        %3109 = vmatprep.subr.bf16.mxu0 0
        %3110 = vmatpush1.bf16.msra.mxu0 0
        %3111 = vmatprep.subr.bf16.mxu0 0
        %3112 = vmatpush1.bf16.msra.mxu0 0
        %3113 = vmatprep.subr.bf16.mxu0 0
        %3114 = vmatpush1.bf16.msra.mxu0 0
        %3115 = vmatprep.subr.bf16.mxu0 0
        %3116 = vmatpush1.bf16.msra.mxu0 0
        %3117 = vmatprep.subr.bf16.mxu0 0
        %3118 = vmatpush1.bf16.msra.mxu0 0
        %3119 = vmatprep.subr.bf16.mxu0 0
        %3120 = vmatpush1.bf16.msra.mxu0 0
        %3121 = vmatprep.mubr.bf16.mxu0 0
        %3122 = vmatmul.mubr.bf16.gmra.mrb[0].mxu0 %v3039
        %v3123 = vpop.f32.mrb[0].mxu0
        %v3124 = vadd.f32 0.0, %v3123
        %v3125 = vpop.f32.mrb[0].mxu0
        %v3126 = vpop.f32.mrb[0].mxu0
        %v3127 = vpop.f32.mrb[0].mxu0
        %3128 = vdwg.mxu0
        %v3129 = vadd.f32 %v3004, %v3124
        %v3130 = vadd.f32 %v2783, %v3129
        %v3131 = vld [vmem:[#allocation12 + $0x3] sm:$0x1]
        %v3132 = vlaneseq
        %v3133 = vshrl.u32 %v3132, 7
        %v3134 = vsub.s32 0, %v3133
        %v3135 = vrot.slane %v3131, %v3134
        %v3136 = vmul.f32 %v3130, %v3135
        %v3137 = vld [vmem:[#allocation14 + $0x3] sm:$0x1]
        %v3138 = vlaneseq
        %v3139 = vshrl.u32 %v3138, 7
        %v3140 = vsub.s32 0, %v3139
        %v3141 = vrot.slane %v3137, %v3140
        %v3142 = vadd.f32 %v3136, %v3141
        %v3143 = vmax.f32 %v3142, 0.0
        %v3144 = vpack.c.bf16 %v3143, %v3143
        %v3145 = vld [vmem:[%s19] sm:$0xf]
        %v3146 = vld [vmem:[%s19 + $0x4] sm:$0xf]
        %v3149 = vunpack.c.l.b16 %v3145
        %v3150 = vunpack.c.l.b16 %v3146
        %v3151 = vpack.c.b16 %v3150, %v3149
        %v3153 = vsel %vm1892, %v3151, 0
        %v3156 = vsel %vm1896, %v3144, 0
        %3158 = vmatprep.subr.bf16.mxu0 0
        %3159 = vmatpush1.bf16.msra.mxu0 %v3156
        %3160 = vmatprep.subr.bf16.mxu0 0
        %3161 = vmatpush1.bf16.msra.mxu0 0
        %3162 = vmatprep.subr.bf16.mxu0 0
        %3163 = vmatpush1.bf16.msra.mxu0 0
        %3164 = vmatprep.subr.bf16.mxu0 0
        %3165 = vmatpush1.bf16.msra.mxu0 0
        %3166 = vmatprep.subr.bf16.mxu0 0
        %3167 = vmatpush1.bf16.msra.mxu0 0
        %3168 = vmatprep.subr.bf16.mxu0 0
        %3169 = vmatpush1.bf16.msra.mxu0 0
        %3170 = vmatprep.subr.bf16.mxu0 0
        %3171 = vmatpush1.bf16.msra.mxu0 0
        %3172 = vmatprep.subr.bf16.mxu0 0
        %3173 = vmatpush1.bf16.msra.mxu0 0
        %3174 = vmatprep.subr.bf16.mxu0 0
        %3175 = vmatpush1.bf16.msra.mxu0 0
        %3176 = vmatprep.subr.bf16.mxu0 0
        %3177 = vmatpush1.bf16.msra.mxu0 0
        %3178 = vmatprep.subr.bf16.mxu0 0
        %3179 = vmatpush1.bf16.msra.mxu0 0
        %3180 = vmatprep.subr.bf16.mxu0 0
        %3181 = vmatpush1.bf16.msra.mxu0 0
        %3182 = vmatprep.subr.bf16.mxu0 0
        %3183 = vmatpush1.bf16.msra.mxu0 0
        %3184 = vmatprep.subr.bf16.mxu0 0
        %3185 = vmatpush1.bf16.msra.mxu0 0
        %3186 = vmatprep.subr.bf16.mxu0 0
        %3187 = vmatpush1.bf16.msra.mxu0 0
        %3188 = vmatprep.subr.bf16.mxu0 0
        %3189 = vmatpush1.bf16.msra.mxu0 0
        %3190 = vmatprep.mubr.bf16.mxu0 0
        %3191 = vmatmul.mubr.bf16.gmra.mrb[0].mxu0 %v3153
        %v3192 = vpop.f32.mrb[0].mxu0
        %v3193 = vadd.f32 0.0, %v3192
        %v3194 = vpop.f32.mrb[0].mxu0
        %v3195 = vpop.f32.mrb[0].mxu0
        %v3196 = vadd.f32 0.0, %v3195
        %v3197 = vpop.f32.mrb[0].mxu0
        %3198 = vdwg.mxu0
        %v3199 = vpack.c.bf16 %v3196, %v3193
        %v3200 = vld [vmem:[#allocation7] sm:$0x8]
        %v3201 = vsel %vm1070, 0, %v3200
        %3202 = vst [vmem:[#allocation7] sm:$0x8] %v3201
        %v3204 = vrot.slane %v3199, 4
        %3206 = vst [vmem:[#allocation7] sm:$0xf0] %v3204
        %3207 = vst [vmem:[#allocation7 + $0x8] sm:$0xf] %v3204
        %v3208 = vld [vmem:[#allocation7 + $0x8] sm:$0x10]
        %v3209 = vsel %vm1080, 0, %v3208
        %3210 = vst [vmem:[#allocation7 + $0x8] sm:$0x10] %v3209
        %v3211 = vld [vmem:[#allocation7] sm:$0xf8]
        %v3212 = vld [vmem:[#allocation7 + $0x8] sm:$0xf]
        %v3213 = vld [vmem:[%s6] sm:$0xf]
        %v3214 = vld [vmem:[%s6 + $0x4] sm:$0xf]
        %v3215 = vld [vmem:[%s6 + $0x8] sm:$0xf]
        %v3216 = vld [vmem:[%s6 + $0xc] sm:$0xf]
        %v3217 = vld [vmem:[%s6 + $0x10] sm:$0xf]
        %v3218 = vld [vmem:[%s6 + $0x14] sm:$0xf]
        %v3219 = vld [vmem:[%s6 + $0x18] sm:$0xf]
        %v3220 = vld [vmem:[%s6 + $0x1c] sm:$0xf]
        %v3221 = vld [vmem:[%s6 + $0x20] sm:$0xf]
        %v3222 = vld [vmem:[%s6 + $0x24] sm:$0xf]
        %v3223 = vld [vmem:[%s6 + $0x28] sm:$0xf]
        %v3224 = vld [vmem:[%s6 + $0x2c] sm:$0xf]
        %v3225 = vld [vmem:[%s6 + $0x30] sm:$0xf]
        %v3226 = vld [vmem:[%s6 + $0x34] sm:$0xf]
        %v3227 = vld [vmem:[%s6 + $0x38] sm:$0xf]
        %v3228 = vld [vmem:[%s6 + $0x3c] sm:$0xf]
        %v3229 = vld [vmem:[#allocation7] sm:$0xf0]
        %s3230 = scalar_lea.vmem %s6, 64
        %v3231 = vld [vmem:[%s3230] sm:$0xf]
        %v3232 = vld [vmem:[%s3230 + $0x4] sm:$0xf]
        %v3233 = vld [vmem:[%s3230 + $0x8] sm:$0xf]
        %v3234 = vld [vmem:[%s3230 + $0xc] sm:$0xf]
        %v3235 = vld [vmem:[%s3230 + $0x10] sm:$0xf]
        %v3236 = vld [vmem:[%s3230 + $0x14] sm:$0xf]
        %v3237 = vld [vmem:[%s3230 + $0x18] sm:$0xf]
        %v3238 = vld [vmem:[%s3230 + $0x1c] sm:$0xf]
        %v3239 = vld [vmem:[%s3230 + $0x20] sm:$0xf]
        %v3240 = vld [vmem:[%s3230 + $0x24] sm:$0xf]
        %v3241 = vld [vmem:[%s3230 + $0x28] sm:$0xf]
        %v3242 = vld [vmem:[%s3230 + $0x2c] sm:$0xf]
        %v3243 = vld [vmem:[%s3230 + $0x30] sm:$0xf]
        %v3244 = vld [vmem:[%s3230 + $0x34] sm:$0xf]
        %v3245 = vld [vmem:[%s3230 + $0x38] sm:$0xf]
        %v3246 = vld [vmem:[%s3230 + $0x3c] sm:$0xf]
        %v3249 = vrot.slane %v3229, 4
        %v3250 = vrot.slane %v3212, 4
        %v3251 = vsel %vm796, %v3249, %v3250
        %v3269 = vunpack.c.l.b16 %v3231
        %v3270 = vunpack.c.l.b16 %v3232
        %v3271 = vunpack.c.l.b16 %v3233
        %v3272 = vunpack.c.l.b16 %v3234
        %v3273 = vunpack.c.l.b16 %v3235
        %v3274 = vunpack.c.l.b16 %v3236
        %v3275 = vunpack.c.l.b16 %v3237
        %v3276 = vunpack.c.l.b16 %v3238
        %v3277 = vunpack.c.l.b16 %v3239
        %v3278 = vunpack.c.l.b16 %v3240
        %v3279 = vunpack.c.l.b16 %v3241
        %v3280 = vunpack.c.l.b16 %v3242
        %v3281 = vunpack.c.l.b16 %v3243
        %v3282 = vunpack.c.l.b16 %v3244
        %v3283 = vunpack.c.l.b16 %v3245
        %v3284 = vunpack.c.l.b16 %v3246
        %v3285 = vpack.c.b16 %v3270, %v3269
        %v3286 = vpack.c.b16 %v3272, %v3271
        %v3287 = vpack.c.b16 %v3274, %v3273
        %v3288 = vpack.c.b16 %v3276, %v3275
        %v3289 = vpack.c.b16 %v3278, %v3277
        %v3290 = vpack.c.b16 %v3280, %v3279
        %v3291 = vpack.c.b16 %v3282, %v3281
        %v3292 = vpack.c.b16 %v3284, %v3283
        %3301 = vmatprep.subr.bf16.mxu0 0
        %3302 = vmatpush1.bf16.msra.mxu0 %v3285
        %3303 = vmatprep.subr.bf16.mxu0 0
        %3304 = vmatpush1.bf16.msra.mxu0 %v3286
        %3305 = vmatprep.subr.bf16.mxu0 0
        %3306 = vmatpush1.bf16.msra.mxu0 %v3287
        %3307 = vmatprep.subr.bf16.mxu0 0
        %3308 = vmatpush1.bf16.msra.mxu0 %v3288
        %3309 = vmatprep.subr.bf16.mxu0 0
        %3310 = vmatpush1.bf16.msra.mxu0 %v3289
        %3311 = vmatprep.subr.bf16.mxu0 0
        %3312 = vmatpush1.bf16.msra.mxu0 %v3290
        %3313 = vmatprep.subr.bf16.mxu0 0
        %3314 = vmatpush1.bf16.msra.mxu0 %v3291
        %3315 = vmatprep.subr.bf16.mxu0 0
        %3316 = vmatpush1.bf16.msra.mxu0 %v3292
        %3317 = vmatprep.subr.bf16.mxu0 0
        %3318 = vmatpush1.bf16.msra.mxu0 0
        %3319 = vmatprep.subr.bf16.mxu0 0
        %3320 = vmatpush1.bf16.msra.mxu0 0
        %3321 = vmatprep.subr.bf16.mxu0 0
        %3322 = vmatpush1.bf16.msra.mxu0 0
        %3323 = vmatprep.subr.bf16.mxu0 0
        %3324 = vmatpush1.bf16.msra.mxu0 0
        %3325 = vmatprep.subr.bf16.mxu0 0
        %3326 = vmatpush1.bf16.msra.mxu0 0
        %3327 = vmatprep.subr.bf16.mxu0 0
        %3328 = vmatpush1.bf16.msra.mxu0 0
        %3329 = vmatprep.subr.bf16.mxu0 0
        %3330 = vmatpush1.bf16.msra.mxu0 0
        %3331 = vmatprep.subr.bf16.mxu0 0
        %3332 = vmatpush1.bf16.msra.mxu0 0
        %3333 = vmatprep.mubr.bf16.mxu0 0
        %3334 = vmatmul.mubr.bf16.gmra.mrb[0].mxu0 %v3251
        %v3335 = vpop.f32.mrb[0].mxu0
        %v3336 = vadd.f32 0.0, %v3335
        %v3337 = vpop.f32.mrb[0].mxu0
        %v3338 = vpop.f32.mrb[0].mxu0
        %v3339 = vadd.f32 0.0, %v3338
        %v3340 = vpop.f32.mrb[0].mxu0
        %3341 = vdwg.mxu0
        %v3343 = vshrl.u32 %v3211, 16
        %v3345 = vrot.slane %v3343, 3
        %v3346 = vshll.u32 %v3211, 16
        %v3348 = vrot.slane %v3346, 4
        %v3349 = vor.u32 %v3345, %v3348
        %v3351 = vshrl.u32 %v3212, 16
        %v3353 = vrot.slane %v3351, 3
        %v3354 = vshll.u32 %v3212, 16
        %v3356 = vrot.slane %v3354, 4
        %v3357 = vor.u32 %v3353, %v3356
        %v3358 = vsel %vm769, %v3349, %v3357
        %v3376 = vunpack.c.l.b16 %v3213
        %v3377 = vunpack.c.l.b16 %v3214
        %v3378 = vunpack.c.l.b16 %v3215
        %v3379 = vunpack.c.l.b16 %v3216
        %v3380 = vunpack.c.l.b16 %v3217
        %v3381 = vunpack.c.l.b16 %v3218
        %v3382 = vunpack.c.l.b16 %v3219
        %v3383 = vunpack.c.l.b16 %v3220
        %v3384 = vunpack.c.l.b16 %v3221
        %v3385 = vunpack.c.l.b16 %v3222
        %v3386 = vunpack.c.l.b16 %v3223
        %v3387 = vunpack.c.l.b16 %v3224
        %v3388 = vunpack.c.l.b16 %v3225
        %v3389 = vunpack.c.l.b16 %v3226
        %v3390 = vunpack.c.l.b16 %v3227
        %v3391 = vunpack.c.l.b16 %v3228
        %v3392 = vpack.c.b16 %v3377, %v3376
        %v3393 = vpack.c.b16 %v3379, %v3378
        %v3394 = vpack.c.b16 %v3381, %v3380
        %v3395 = vpack.c.b16 %v3383, %v3382
        %v3396 = vpack.c.b16 %v3385, %v3384
        %v3397 = vpack.c.b16 %v3387, %v3386
        %v3398 = vpack.c.b16 %v3389, %v3388
        %v3399 = vpack.c.b16 %v3391, %v3390
        %3408 = vmatprep.subr.bf16.mxu0 0
        %3409 = vmatpush1.bf16.msra.mxu0 %v3392
        %3410 = vmatprep.subr.bf16.mxu0 0
        %3411 = vmatpush1.bf16.msra.mxu0 %v3393
        %3412 = vmatprep.subr.bf16.mxu0 0
        %3413 = vmatpush1.bf16.msra.mxu0 %v3394
        %3414 = vmatprep.subr.bf16.mxu0 0
        %3415 = vmatpush1.bf16.msra.mxu0 %v3395
        %3416 = vmatprep.subr.bf16.mxu0 0
        %3417 = vmatpush1.bf16.msra.mxu0 %v3396
        %3418 = vmatprep.subr.bf16.mxu0 0
        %3419 = vmatpush1.bf16.msra.mxu0 %v3397
        %3420 = vmatprep.subr.bf16.mxu0 0
        %3421 = vmatpush1.bf16.msra.mxu0 %v3398
        %3422 = vmatprep.subr.bf16.mxu0 0
        %3423 = vmatpush1.bf16.msra.mxu0 %v3399
        %3424 = vmatprep.subr.bf16.mxu0 0
        %3425 = vmatpush1.bf16.msra.mxu0 0
        %3426 = vmatprep.subr.bf16.mxu0 0
        %3427 = vmatpush1.bf16.msra.mxu0 0
        %3428 = vmatprep.subr.bf16.mxu0 0
        %3429 = vmatpush1.bf16.msra.mxu0 0
        %3430 = vmatprep.subr.bf16.mxu0 0
        %3431 = vmatpush1.bf16.msra.mxu0 0
        %3432 = vmatprep.subr.bf16.mxu0 0
        %3433 = vmatpush1.bf16.msra.mxu0 0
        %3434 = vmatprep.subr.bf16.mxu0 0
        %3435 = vmatpush1.bf16.msra.mxu0 0
        %3436 = vmatprep.subr.bf16.mxu0 0
        %3437 = vmatpush1.bf16.msra.mxu0 0
        %3438 = vmatprep.subr.bf16.mxu0 0
        %3439 = vmatpush1.bf16.msra.mxu0 0
        %3440 = vmatprep.mubr.bf16.mxu0 0
        %3441 = vmatmul.mubr.bf16.gmra.mrb[0].mxu0 %v3358
        %v3442 = vpop.f32.mrb[0].mxu0
        %v3443 = vadd.f32 %v3336, %v3442
        %v3444 = vpop.f32.mrb[0].mxu0
        %v3445 = vpop.f32.mrb[0].mxu0
        %v3446 = vadd.f32 %v3339, %v3445
        %v3447 = vpop.f32.mrb[0].mxu0
        %3448 = vdwg.mxu0
        %v3449 = vld [vmem:[#allocation7 + $0x8] sm:$0x1f]
        %s3450 = scalar_lea.vmem %s6, 128
        %v3451 = vld [vmem:[%s3450] sm:$0xf]
        %v3452 = vld [vmem:[%s3450 + $0x4] sm:$0xf]
        %v3453 = vld [vmem:[%s3450 + $0x8] sm:$0xf]
        %v3454 = vld [vmem:[%s3450 + $0xc] sm:$0xf]
        %v3455 = vld [vmem:[%s3450 + $0x10] sm:$0xf]
        %v3456 = vld [vmem:[%s3450 + $0x14] sm:$0xf]
        %v3457 = vld [vmem:[%s3450 + $0x18] sm:$0xf]
        %v3458 = vld [vmem:[%s3450 + $0x1c] sm:$0xf]
        %v3459 = vld [vmem:[%s3450 + $0x20] sm:$0xf]
        %v3460 = vld [vmem:[%s3450 + $0x24] sm:$0xf]
        %v3461 = vld [vmem:[%s3450 + $0x28] sm:$0xf]
        %v3462 = vld [vmem:[%s3450 + $0x2c] sm:$0xf]
        %v3463 = vld [vmem:[%s3450 + $0x30] sm:$0xf]
        %v3464 = vld [vmem:[%s3450 + $0x34] sm:$0xf]
        %v3465 = vld [vmem:[%s3450 + $0x38] sm:$0xf]
        %v3466 = vld [vmem:[%s3450 + $0x3c] sm:$0xf]
        %v3468 = vshrl.u32 %v3229, 16
        %v3470 = vrot.slane %v3468, 4
        %v3471 = vshll.u32 %v3229, 16
        %v3473 = vrot.slane %v3471, 5
        %v3474 = vor.u32 %v3470, %v3473
        %v3476 = vshrl.u32 %v3449, 16
        %v3478 = vrot.slane %v3476, 4
        %v3479 = vshll.u32 %v3449, 16
        %v3481 = vrot.slane %v3479, 5
        %v3482 = vor.u32 %v3478, %v3481
        %v3483 = vsel %vm964, %v3474, %v3482
        %v3501 = vunpack.c.l.b16 %v3451
        %v3502 = vunpack.c.l.b16 %v3452
        %v3503 = vunpack.c.l.b16 %v3453
        %v3504 = vunpack.c.l.b16 %v3454
        %v3505 = vunpack.c.l.b16 %v3455
        %v3506 = vunpack.c.l.b16 %v3456
        %v3507 = vunpack.c.l.b16 %v3457
        %v3508 = vunpack.c.l.b16 %v3458
        %v3509 = vunpack.c.l.b16 %v3459
        %v3510 = vunpack.c.l.b16 %v3460
        %v3511 = vunpack.c.l.b16 %v3461
        %v3512 = vunpack.c.l.b16 %v3462
        %v3513 = vunpack.c.l.b16 %v3463
        %v3514 = vunpack.c.l.b16 %v3464
        %v3515 = vunpack.c.l.b16 %v3465
        %v3516 = vunpack.c.l.b16 %v3466
        %v3517 = vpack.c.b16 %v3502, %v3501
        %v3518 = vpack.c.b16 %v3504, %v3503
        %v3519 = vpack.c.b16 %v3506, %v3505
        %v3520 = vpack.c.b16 %v3508, %v3507
        %v3521 = vpack.c.b16 %v3510, %v3509
        %v3522 = vpack.c.b16 %v3512, %v3511
        %v3523 = vpack.c.b16 %v3514, %v3513
        %v3524 = vpack.c.b16 %v3516, %v3515
        %3533 = vmatprep.subr.bf16.mxu0 0
        %3534 = vmatpush1.bf16.msra.mxu0 %v3517
        %3535 = vmatprep.subr.bf16.mxu0 0
        %3536 = vmatpush1.bf16.msra.mxu0 %v3518
        %3537 = vmatprep.subr.bf16.mxu0 0
        %3538 = vmatpush1.bf16.msra.mxu0 %v3519
        %3539 = vmatprep.subr.bf16.mxu0 0
        %3540 = vmatpush1.bf16.msra.mxu0 %v3520
        %3541 = vmatprep.subr.bf16.mxu0 0
        %3542 = vmatpush1.bf16.msra.mxu0 %v3521
        %3543 = vmatprep.subr.bf16.mxu0 0
        %3544 = vmatpush1.bf16.msra.mxu0 %v3522
        %3545 = vmatprep.subr.bf16.mxu0 0
        %3546 = vmatpush1.bf16.msra.mxu0 %v3523
        %3547 = vmatprep.subr.bf16.mxu0 0
        %3548 = vmatpush1.bf16.msra.mxu0 %v3524
        %3549 = vmatprep.subr.bf16.mxu0 0
        %3550 = vmatpush1.bf16.msra.mxu0 0
        %3551 = vmatprep.subr.bf16.mxu0 0
        %3552 = vmatpush1.bf16.msra.mxu0 0
        %3553 = vmatprep.subr.bf16.mxu0 0
        %3554 = vmatpush1.bf16.msra.mxu0 0
        %3555 = vmatprep.subr.bf16.mxu0 0
        %3556 = vmatpush1.bf16.msra.mxu0 0
        %3557 = vmatprep.subr.bf16.mxu0 0
        %3558 = vmatpush1.bf16.msra.mxu0 0
        %3559 = vmatprep.subr.bf16.mxu0 0
        %3560 = vmatpush1.bf16.msra.mxu0 0
        %3561 = vmatprep.subr.bf16.mxu0 0
        %3562 = vmatpush1.bf16.msra.mxu0 0
        %3563 = vmatprep.subr.bf16.mxu0 0
        %3564 = vmatpush1.bf16.msra.mxu0 0
        %3565 = vmatprep.mubr.bf16.mxu0 0
        %3566 = vmatmul.mubr.bf16.gmra.mrb[0].mxu0 %v3483
        %v3567 = vpop.f32.mrb[0].mxu0
        %v3568 = vadd.f32 0.0, %v3567
        %v3569 = vpop.f32.mrb[0].mxu0
        %v3570 = vpop.f32.mrb[0].mxu0
        %v3571 = vadd.f32 0.0, %v3570
        %v3572 = vpop.f32.mrb[0].mxu0
        %3573 = vdwg.mxu0
        %v3574 = vadd.f32 %v3443, %v3568
        %v3575 = vadd.f32 %v3446, %v3571
        %v3576 = vld [vmem:[#allocation8] sm:$0xf8]
        %v3577 = vld [vmem:[#allocation8 + $0x8] sm:$0xf]
        %v3578 = vld [vmem:[%s7] sm:$0xf]
        %v3579 = vld [vmem:[%s7 + $0x4] sm:$0xf]
        %v3580 = vld [vmem:[%s7 + $0x8] sm:$0xf]
        %v3581 = vld [vmem:[%s7 + $0xc] sm:$0xf]
        %v3582 = vld [vmem:[%s7 + $0x10] sm:$0xf]
        %v3583 = vld [vmem:[%s7 + $0x14] sm:$0xf]
        %v3584 = vld [vmem:[%s7 + $0x18] sm:$0xf]
        %v3585 = vld [vmem:[%s7 + $0x1c] sm:$0xf]
        %v3586 = vld [vmem:[%s7 + $0x20] sm:$0xf]
        %v3587 = vld [vmem:[%s7 + $0x24] sm:$0xf]
        %v3588 = vld [vmem:[%s7 + $0x28] sm:$0xf]
        %v3589 = vld [vmem:[%s7 + $0x2c] sm:$0xf]
        %v3590 = vld [vmem:[%s7 + $0x30] sm:$0xf]
        %v3591 = vld [vmem:[%s7 + $0x34] sm:$0xf]
        %v3592 = vld [vmem:[%s7 + $0x38] sm:$0xf]
        %v3593 = vld [vmem:[%s7 + $0x3c] sm:$0xf]
        %v3594 = vld [vmem:[#allocation8] sm:$0xf0]
        %s3595 = scalar_lea.vmem %s7, 64
        %v3596 = vld [vmem:[%s3595] sm:$0xf]
        %v3597 = vld [vmem:[%s3595 + $0x4] sm:$0xf]
        %v3598 = vld [vmem:[%s3595 + $0x8] sm:$0xf]
        %v3599 = vld [vmem:[%s3595 + $0xc] sm:$0xf]
        %v3600 = vld [vmem:[%s3595 + $0x10] sm:$0xf]
        %v3601 = vld [vmem:[%s3595 + $0x14] sm:$0xf]
        %v3602 = vld [vmem:[%s3595 + $0x18] sm:$0xf]
        %v3603 = vld [vmem:[%s3595 + $0x1c] sm:$0xf]
        %v3604 = vld [vmem:[%s3595 + $0x20] sm:$0xf]
        %v3605 = vld [vmem:[%s3595 + $0x24] sm:$0xf]
        %v3606 = vld [vmem:[%s3595 + $0x28] sm:$0xf]
        %v3607 = vld [vmem:[%s3595 + $0x2c] sm:$0xf]
        %v3608 = vld [vmem:[%s3595 + $0x30] sm:$0xf]
        %v3609 = vld [vmem:[%s3595 + $0x34] sm:$0xf]
        %v3610 = vld [vmem:[%s3595 + $0x38] sm:$0xf]
        %v3611 = vld [vmem:[%s3595 + $0x3c] sm:$0xf]
        %v3614 = vrot.slane %v3594, 4
        %v3615 = vrot.slane %v3577, 4
        %v3616 = vsel %vm796, %v3614, %v3615
        %v3634 = vunpack.c.l.b16 %v3596
        %v3635 = vunpack.c.l.b16 %v3597
        %v3636 = vunpack.c.l.b16 %v3598
        %v3637 = vunpack.c.l.b16 %v3599
        %v3638 = vunpack.c.l.b16 %v3600
        %v3639 = vunpack.c.l.b16 %v3601
        %v3640 = vunpack.c.l.b16 %v3602
        %v3641 = vunpack.c.l.b16 %v3603
        %v3642 = vunpack.c.l.b16 %v3604
        %v3643 = vunpack.c.l.b16 %v3605
        %v3644 = vunpack.c.l.b16 %v3606
        %v3645 = vunpack.c.l.b16 %v3607
        %v3646 = vunpack.c.l.b16 %v3608
        %v3647 = vunpack.c.l.b16 %v3609
        %v3648 = vunpack.c.l.b16 %v3610
        %v3649 = vunpack.c.l.b16 %v3611
        %v3650 = vpack.c.b16 %v3635, %v3634
        %v3651 = vpack.c.b16 %v3637, %v3636
        %v3652 = vpack.c.b16 %v3639, %v3638
        %v3653 = vpack.c.b16 %v3641, %v3640
        %v3654 = vpack.c.b16 %v3643, %v3642
        %v3655 = vpack.c.b16 %v3645, %v3644
        %v3656 = vpack.c.b16 %v3647, %v3646
        %v3657 = vpack.c.b16 %v3649, %v3648
        %3666 = vmatprep.subr.bf16.mxu0 0
        %3667 = vmatpush1.bf16.msra.mxu0 %v3650
        %3668 = vmatprep.subr.bf16.mxu0 0
        %3669 = vmatpush1.bf16.msra.mxu0 %v3651
        %3670 = vmatprep.subr.bf16.mxu0 0
        %3671 = vmatpush1.bf16.msra.mxu0 %v3652
        %3672 = vmatprep.subr.bf16.mxu0 0
        %3673 = vmatpush1.bf16.msra.mxu0 %v3653
        %3674 = vmatprep.subr.bf16.mxu0 0
        %3675 = vmatpush1.bf16.msra.mxu0 %v3654
        %3676 = vmatprep.subr.bf16.mxu0 0
        %3677 = vmatpush1.bf16.msra.mxu0 %v3655
        %3678 = vmatprep.subr.bf16.mxu0 0
        %3679 = vmatpush1.bf16.msra.mxu0 %v3656
        %3680 = vmatprep.subr.bf16.mxu0 0
        %3681 = vmatpush1.bf16.msra.mxu0 %v3657
        %3682 = vmatprep.subr.bf16.mxu0 0
        %3683 = vmatpush1.bf16.msra.mxu0 0
        %3684 = vmatprep.subr.bf16.mxu0 0
        %3685 = vmatpush1.bf16.msra.mxu0 0
        %3686 = vmatprep.subr.bf16.mxu0 0
        %3687 = vmatpush1.bf16.msra.mxu0 0
        %3688 = vmatprep.subr.bf16.mxu0 0
        %3689 = vmatpush1.bf16.msra.mxu0 0
        %3690 = vmatprep.subr.bf16.mxu0 0
        %3691 = vmatpush1.bf16.msra.mxu0 0
        %3692 = vmatprep.subr.bf16.mxu0 0
        %3693 = vmatpush1.bf16.msra.mxu0 0
        %3694 = vmatprep.subr.bf16.mxu0 0
        %3695 = vmatpush1.bf16.msra.mxu0 0
        %3696 = vmatprep.subr.bf16.mxu0 0
        %3697 = vmatpush1.bf16.msra.mxu0 0
        %3698 = vmatprep.mubr.bf16.mxu0 0
        %3699 = vmatmul.mubr.bf16.gmra.mrb[0].mxu0 %v3616
        %v3700 = vpop.f32.mrb[0].mxu0
        %v3701 = vadd.f32 0.0, %v3700
        %v3702 = vpop.f32.mrb[0].mxu0
        %v3703 = vpop.f32.mrb[0].mxu0
        %v3704 = vadd.f32 0.0, %v3703
        %v3705 = vpop.f32.mrb[0].mxu0
        %3706 = vdwg.mxu0
        %v3708 = vshrl.u32 %v3576, 16
        %v3710 = vrot.slane %v3708, 3
        %v3711 = vshll.u32 %v3576, 16
        %v3713 = vrot.slane %v3711, 4
        %v3714 = vor.u32 %v3710, %v3713
        %v3716 = vshrl.u32 %v3577, 16
        %v3718 = vrot.slane %v3716, 3
        %v3719 = vshll.u32 %v3577, 16
        %v3721 = vrot.slane %v3719, 4
        %v3722 = vor.u32 %v3718, %v3721
        %v3723 = vsel %vm769, %v3714, %v3722
        %v3741 = vunpack.c.l.b16 %v3578
        %v3742 = vunpack.c.l.b16 %v3579
        %v3743 = vunpack.c.l.b16 %v3580
        %v3744 = vunpack.c.l.b16 %v3581
        %v3745 = vunpack.c.l.b16 %v3582
        %v3746 = vunpack.c.l.b16 %v3583
        %v3747 = vunpack.c.l.b16 %v3584
        %v3748 = vunpack.c.l.b16 %v3585
        %v3749 = vunpack.c.l.b16 %v3586
        %v3750 = vunpack.c.l.b16 %v3587
        %v3751 = vunpack.c.l.b16 %v3588
        %v3752 = vunpack.c.l.b16 %v3589
        %v3753 = vunpack.c.l.b16 %v3590
        %v3754 = vunpack.c.l.b16 %v3591
        %v3755 = vunpack.c.l.b16 %v3592
        %v3756 = vunpack.c.l.b16 %v3593
        %v3757 = vpack.c.b16 %v3742, %v3741
        %v3758 = vpack.c.b16 %v3744, %v3743
        %v3759 = vpack.c.b16 %v3746, %v3745
        %v3760 = vpack.c.b16 %v3748, %v3747
        %v3761 = vpack.c.b16 %v3750, %v3749
        %v3762 = vpack.c.b16 %v3752, %v3751
        %v3763 = vpack.c.b16 %v3754, %v3753
        %v3764 = vpack.c.b16 %v3756, %v3755
        %3773 = vmatprep.subr.bf16.mxu0 0
        %3774 = vmatpush1.bf16.msra.mxu0 %v3757
        %3775 = vmatprep.subr.bf16.mxu0 0
        %3776 = vmatpush1.bf16.msra.mxu0 %v3758
        %3777 = vmatprep.subr.bf16.mxu0 0
        %3778 = vmatpush1.bf16.msra.mxu0 %v3759
        %3779 = vmatprep.subr.bf16.mxu0 0
        %3780 = vmatpush1.bf16.msra.mxu0 %v3760
        %3781 = vmatprep.subr.bf16.mxu0 0
        %3782 = vmatpush1.bf16.msra.mxu0 %v3761
        %3783 = vmatprep.subr.bf16.mxu0 0
        %3784 = vmatpush1.bf16.msra.mxu0 %v3762
        %3785 = vmatprep.subr.bf16.mxu0 0
        %3786 = vmatpush1.bf16.msra.mxu0 %v3763
        %3787 = vmatprep.subr.bf16.mxu0 0
        %3788 = vmatpush1.bf16.msra.mxu0 %v3764
        %3789 = vmatprep.subr.bf16.mxu0 0
        %3790 = vmatpush1.bf16.msra.mxu0 0
        %3791 = vmatprep.subr.bf16.mxu0 0
        %3792 = vmatpush1.bf16.msra.mxu0 0
        %3793 = vmatprep.subr.bf16.mxu0 0
        %3794 = vmatpush1.bf16.msra.mxu0 0
        %3795 = vmatprep.subr.bf16.mxu0 0
        %3796 = vmatpush1.bf16.msra.mxu0 0
        %3797 = vmatprep.subr.bf16.mxu0 0
        %3798 = vmatpush1.bf16.msra.mxu0 0
        %3799 = vmatprep.subr.bf16.mxu0 0
        %3800 = vmatpush1.bf16.msra.mxu0 0
        %3801 = vmatprep.subr.bf16.mxu0 0
        %3802 = vmatpush1.bf16.msra.mxu0 0
        %3803 = vmatprep.subr.bf16.mxu0 0
        %3804 = vmatpush1.bf16.msra.mxu0 0
        %3805 = vmatprep.mubr.bf16.mxu0 0
        %3806 = vmatmul.mubr.bf16.gmra.mrb[0].mxu0 %v3723
        %v3807 = vpop.f32.mrb[0].mxu0
        %v3808 = vadd.f32 %v3701, %v3807
        %v3809 = vpop.f32.mrb[0].mxu0
        %v3810 = vpop.f32.mrb[0].mxu0
        %v3811 = vadd.f32 %v3704, %v3810
        %v3812 = vpop.f32.mrb[0].mxu0
        %3813 = vdwg.mxu0
        %v3814 = vld [vmem:[#allocation8 + $0x8] sm:$0x1f]
        %s3815 = scalar_lea.vmem %s7, 128
        %v3816 = vld [vmem:[%s3815] sm:$0xf]
        %v3817 = vld [vmem:[%s3815 + $0x4] sm:$0xf]
        %v3818 = vld [vmem:[%s3815 + $0x8] sm:$0xf]
        %v3819 = vld [vmem:[%s3815 + $0xc] sm:$0xf]
        %v3820 = vld [vmem:[%s3815 + $0x10] sm:$0xf]
        %v3821 = vld [vmem:[%s3815 + $0x14] sm:$0xf]
        %v3822 = vld [vmem:[%s3815 + $0x18] sm:$0xf]
        %v3823 = vld [vmem:[%s3815 + $0x1c] sm:$0xf]
        %v3824 = vld [vmem:[%s3815 + $0x20] sm:$0xf]
        %v3825 = vld [vmem:[%s3815 + $0x24] sm:$0xf]
        %v3826 = vld [vmem:[%s3815 + $0x28] sm:$0xf]
        %v3827 = vld [vmem:[%s3815 + $0x2c] sm:$0xf]
        %v3828 = vld [vmem:[%s3815 + $0x30] sm:$0xf]
        %v3829 = vld [vmem:[%s3815 + $0x34] sm:$0xf]
        %v3830 = vld [vmem:[%s3815 + $0x38] sm:$0xf]
        %v3831 = vld [vmem:[%s3815 + $0x3c] sm:$0xf]
        %v3833 = vshrl.u32 %v3594, 16
        %v3835 = vrot.slane %v3833, 4
        %v3836 = vshll.u32 %v3594, 16
        %v3838 = vrot.slane %v3836, 5
        %v3839 = vor.u32 %v3835, %v3838
        %v3841 = vshrl.u32 %v3814, 16
        %v3843 = vrot.slane %v3841, 4
        %v3844 = vshll.u32 %v3814, 16
        %v3846 = vrot.slane %v3844, 5
        %v3847 = vor.u32 %v3843, %v3846
        %v3848 = vsel %vm964, %v3839, %v3847
        %v3866 = vunpack.c.l.b16 %v3816
        %v3867 = vunpack.c.l.b16 %v3817
        %v3868 = vunpack.c.l.b16 %v3818
        %v3869 = vunpack.c.l.b16 %v3819
        %v3870 = vunpack.c.l.b16 %v3820
        %v3871 = vunpack.c.l.b16 %v3821
        %v3872 = vunpack.c.l.b16 %v3822
        %v3873 = vunpack.c.l.b16 %v3823
        %v3874 = vunpack.c.l.b16 %v3824
        %v3875 = vunpack.c.l.b16 %v3825
        %v3876 = vunpack.c.l.b16 %v3826
        %v3877 = vunpack.c.l.b16 %v3827
        %v3878 = vunpack.c.l.b16 %v3828
        %v3879 = vunpack.c.l.b16 %v3829
        %v3880 = vunpack.c.l.b16 %v3830
        %v3881 = vunpack.c.l.b16 %v3831
        %v3882 = vpack.c.b16 %v3867, %v3866
        %v3883 = vpack.c.b16 %v3869, %v3868
        %v3884 = vpack.c.b16 %v3871, %v3870
        %v3885 = vpack.c.b16 %v3873, %v3872
        %v3886 = vpack.c.b16 %v3875, %v3874
        %v3887 = vpack.c.b16 %v3877, %v3876
        %v3888 = vpack.c.b16 %v3879, %v3878
        %v3889 = vpack.c.b16 %v3881, %v3880
        %3898 = vmatprep.subr.bf16.mxu0 0
        %3899 = vmatpush1.bf16.msra.mxu0 %v3882
        %3900 = vmatprep.subr.bf16.mxu0 0
        %3901 = vmatpush1.bf16.msra.mxu0 %v3883
        %3902 = vmatprep.subr.bf16.mxu0 0
        %3903 = vmatpush1.bf16.msra.mxu0 %v3884
        %3904 = vmatprep.subr.bf16.mxu0 0
        %3905 = vmatpush1.bf16.msra.mxu0 %v3885
        %3906 = vmatprep.subr.bf16.mxu0 0
        %3907 = vmatpush1.bf16.msra.mxu0 %v3886
        %3908 = vmatprep.subr.bf16.mxu0 0
        %3909 = vmatpush1.bf16.msra.mxu0 %v3887
        %3910 = vmatprep.subr.bf16.mxu0 0
        %3911 = vmatpush1.bf16.msra.mxu0 %v3888
        %3912 = vmatprep.subr.bf16.mxu0 0
        %3913 = vmatpush1.bf16.msra.mxu0 %v3889
        %3914 = vmatprep.subr.bf16.mxu0 0
        %3915 = vmatpush1.bf16.msra.mxu0 0
        %3916 = vmatprep.subr.bf16.mxu0 0
        %3917 = vmatpush1.bf16.msra.mxu0 0
        %3918 = vmatprep.subr.bf16.mxu0 0
        %3919 = vmatpush1.bf16.msra.mxu0 0
        %3920 = vmatprep.subr.bf16.mxu0 0
        %3921 = vmatpush1.bf16.msra.mxu0 0
        %3922 = vmatprep.subr.bf16.mxu0 0
        %3923 = vmatpush1.bf16.msra.mxu0 0
        %3924 = vmatprep.subr.bf16.mxu0 0
        %3925 = vmatpush1.bf16.msra.mxu0 0
        %3926 = vmatprep.subr.bf16.mxu0 0
        %3927 = vmatpush1.bf16.msra.mxu0 0
        %3928 = vmatprep.subr.bf16.mxu0 0
        %3929 = vmatpush1.bf16.msra.mxu0 0
        %3930 = vmatprep.mubr.bf16.mxu0 0
        %3931 = vmatmul.mubr.bf16.gmra.mrb[0].mxu0 %v3848
        %v3932 = vpop.f32.mrb[0].mxu0
        %v3933 = vadd.f32 0.0, %v3932
        %v3934 = vpop.f32.mrb[0].mxu0
        %v3935 = vpop.f32.mrb[0].mxu0
        %v3936 = vadd.f32 0.0, %v3935
        %v3937 = vpop.f32.mrb[0].mxu0
        %3938 = vdwg.mxu0
        %v3939 = vadd.f32 %v3808, %v3933
        %v3940 = vadd.f32 %v3811, %v3936
        %v3941 = vadd.f32 %v3574, %v3939
        %v3942 = vadd.f32 %v3575, %v3940
        %v3943 = vld [vmem:[#allocation12 + $0x4] sm:$0x1]
        %v3944 = vlaneseq
        %v3945 = vshrl.u32 %v3944, 7
        %v3946 = vsub.s32 0, %v3945
        %v3947 = vrot.slane %v3943, %v3946
        %v3948 = vmul.f32 %v3941, %v3947
        %v3949 = vmul.f32 %v3942, %v3947
        %v3950 = vld [vmem:[#allocation14 + $0x4] sm:$0x1]
        %v3951 = vlaneseq
        %v3952 = vshrl.u32 %v3951, 7
        %v3953 = vsub.s32 0, %v3952
        %v3954 = vrot.slane %v3950, %v3953
        %v3955 = vadd.f32 %v3948, %v3954
        %v3956 = vadd.f32 %v3949, %v3954
        %v3957 = vmax.f32 %v3955, 0.0
        %v3958 = vmax.f32 %v3956, 0.0
        %v3959 = vpack.c.bf16 %v3958, %v3957
        %v3960 = vld [vmem:[%s8] sm:$0xf]
        %v3961 = vld [vmem:[%s8 + $0x4] sm:$0xf]
        %v3962 = vld [vmem:[%s8 + $0x8] sm:$0xf]
        %v3963 = vld [vmem:[%s8 + $0xc] sm:$0xf]
        %v3964 = vld [vmem:[%s8 + $0x10] sm:$0xf]
        %v3965 = vld [vmem:[%s8 + $0x14] sm:$0xf]
        %v3966 = vld [vmem:[%s8 + $0x18] sm:$0xf]
        %v3967 = vld [vmem:[%s8 + $0x1c] sm:$0xf]
        %v3968 = vld [vmem:[%s8 + $0x20] sm:$0xf]
        %v3969 = vld [vmem:[%s8 + $0x24] sm:$0xf]
        %v3970 = vld [vmem:[%s8 + $0x28] sm:$0xf]
        %v3971 = vld [vmem:[%s8 + $0x2c] sm:$0xf]
        %v3972 = vld [vmem:[%s8 + $0x30] sm:$0xf]
        %v3973 = vld [vmem:[%s8 + $0x34] sm:$0xf]
        %v3974 = vld [vmem:[%s8 + $0x38] sm:$0xf]
        %v3975 = vld [vmem:[%s8 + $0x3c] sm:$0xf]
        %v3976 = vld [vmem:[#allocation15] sm:$0x1]
        %v3978 = vlaneseq
        %v3979 = vshrl.u32 %v3978, 7
        %v3980 = vsub.s32 0, %v3979
        %v3981 = vrot.slane %v3976, %v3980
        %v3999 = vunpack.c.l.b16 %v3960
        %v4000 = vunpack.c.l.b16 %v3961
        %v4001 = vunpack.c.l.b16 %v3962
        %v4002 = vunpack.c.l.b16 %v3963
        %v4003 = vunpack.c.l.b16 %v3964
        %v4004 = vunpack.c.l.b16 %v3965
        %v4005 = vunpack.c.l.b16 %v3966
        %v4006 = vunpack.c.l.b16 %v3967
        %v4007 = vunpack.c.l.b16 %v3968
        %v4008 = vunpack.c.l.b16 %v3969
        %v4009 = vunpack.c.l.b16 %v3970
        %v4010 = vunpack.c.l.b16 %v3971
        %v4011 = vunpack.c.l.b16 %v3972
        %v4012 = vunpack.c.l.b16 %v3973
        %v4013 = vunpack.c.l.b16 %v3974
        %v4014 = vunpack.c.l.b16 %v3975
        %v4015 = vpack.c.b16 %v4000, %v3999
        %v4016 = vpack.c.b16 %v4002, %v4001
        %v4017 = vpack.c.b16 %v4004, %v4003
        %v4018 = vpack.c.b16 %v4006, %v4005
        %v4019 = vpack.c.b16 %v4008, %v4007
        %v4020 = vpack.c.b16 %v4010, %v4009
        %v4021 = vpack.c.b16 %v4012, %v4011
        %v4022 = vpack.c.b16 %v4014, %v4013
        %4031 = vmatprep.subr.bf16.mxu0 0
        %4032 = vmatpush1.bf16.msra.mxu0 %v4015
        %4033 = vmatprep.subr.bf16.mxu0 0
        %4034 = vmatpush1.bf16.msra.mxu0 %v4016
        %4035 = vmatprep.subr.bf16.mxu0 0
        %4036 = vmatpush1.bf16.msra.mxu0 %v4017
        %4037 = vmatprep.subr.bf16.mxu0 0
        %4038 = vmatpush1.bf16.msra.mxu0 %v4018
        %4039 = vmatprep.subr.bf16.mxu0 0
        %4040 = vmatpush1.bf16.msra.mxu0 %v4019
        %4041 = vmatprep.subr.bf16.mxu0 0
        %4042 = vmatpush1.bf16.msra.mxu0 %v4020
        %4043 = vmatprep.subr.bf16.mxu0 0
        %4044 = vmatpush1.bf16.msra.mxu0 %v4021
        %4045 = vmatprep.subr.bf16.mxu0 0
        %4046 = vmatpush1.bf16.msra.mxu0 %v4022
        %4047 = vmatprep.subr.bf16.mxu0 0
        %4048 = vmatpush1.bf16.msra.mxu0 0
        %4049 = vmatprep.subr.bf16.mxu0 0
        %4050 = vmatpush1.bf16.msra.mxu0 0
        %4051 = vmatprep.subr.bf16.mxu0 0
        %4052 = vmatpush1.bf16.msra.mxu0 0
        %4053 = vmatprep.subr.bf16.mxu0 0
        %4054 = vmatpush1.bf16.msra.mxu0 0
        %4055 = vmatprep.subr.bf16.mxu0 0
        %4056 = vmatpush1.bf16.msra.mxu0 0
        %4057 = vmatprep.subr.bf16.mxu0 0
        %4058 = vmatpush1.bf16.msra.mxu0 0
        %4059 = vmatprep.subr.bf16.mxu0 0
        %4060 = vmatpush1.bf16.msra.mxu0 0
        %4061 = vmatprep.subr.bf16.mxu0 0
        %4062 = vmatpush1.bf16.msra.mxu0 0
        %4063 = vmatprep.mubr.bf16.mxu0 0
        %4064 = vmatmul.mubr.bf16.gmra.mrb[0].mxu0 %v3959
        %v4065 = vpop.f32.mrb[0].mxu0
        %v4066 = vadd.f32 %v3981, %v4065
        %v4067 = vpop.f32.mrb[0].mxu0
        %v4068 = vpop.f32.mrb[0].mxu0
        %v4069 = vadd.f32 %v3981, %v4068
        %v4070 = vpop.f32.mrb[0].mxu0
        %4071 = vdwg.mxu0
        %vm4072 = vcmask 261120
        %4073 = vst.msk [vmem:[%s746] sm:$0xff] %vm4072, %v4066
        %4074 = vst.msk [vmem:[%s746 + $0x8] sm:$0xff] %vm4072, %v4069
        %p4075 = scmp.lt.s32.totalorder %s40, 1
        %s4076 = scalar_select %p4075, %s40, 1
        %s4077 = smul.addr %s4076, 2
        %s4078 = smul.addr %s4077, 8
        %s4079 = scalar_lea.vmem %s20, %s4078
        %s4080 = sand.u32 %s499, 1
        %s4081 = scalar_lea.sflag [#allocation11], %s4080
        %s4082 = sand.u32 %s499, 1
        %s4083 = scalar_lea.vmem [#allocation20], %s4082
        // Predicated region
        $region125: #{multiview_net_forward.1} parent=99 // pred_check
          %p4084 = pneg %p483
        $region126: #{multiview_net_forward.1} parent=99 // pred_check_branch
          %4086 = sbr.rel (%p4084) target = $region128
        $region127: #{multiview_net_forward.1} parent=99 // pred_region
          _
        $region128: #{multiview_net_forward.1} parent=99 // pred_fallthru
          _
        // Predicated region
        $region129: #{multiview_net_forward.1} parent=99 // pred_check
          %p4087 = pneg %p509
        $region130: #{multiview_net_forward.1} parent=99 // pred_check_branch
          %4089 = sbr.rel (%p4087) target = $region132
        $region131: #{multiview_net_forward.1} parent=99 // pred_region
          %s4091 = ssub.s32 16, 16
          %4092 = vsyncadd %s4081, %s4091
          %s4093 = smul.addr %s40, 16
          %s4094 = scalar_lea.hbm %s21, %s4093
          %s4096 = sshll.u32 %s4083, 4
          %s4097 = int_to_ptr.vmem [resolvable:$true] %s4096
          %4099 = dma.vmem_to_hbm [thread:$0]  %s4097, 16, %s4094, %s4081
        $region132: #{multiview_net_forward.1} parent=99 // pred_fallthru
          _
      $region100: #{multiview_net_forward.1} parent=5 // pred_fallthru
        _
      %p4100 = scmp.le.s32.totalorder 2, %s35
      // Predicated region
      $region133: #{multiview_net_forward.1} parent=5 // pred_check
        %p4101 = pneg %p4100
      $region134: #{multiview_net_forward.1} parent=5 // pred_check_branch
        %4103 = sbr.rel (%p4101) target = $region136
      $region135: #{multiview_net_forward.1} parent=5 // pred_region
        %s4104 = ssub.s32 %s35, 2
        // Predicated region
        $region137: #{multiview_net_forward.1} parent=135 // pred_check
          %p4105 = pneg %p489
        $region138: #{multiview_net_forward.1} parent=135 // pred_check_branch
          %4107 = sbr.rel (%p4105) target = $region140
        $region139: #{multiview_net_forward.1} parent=135 // pred_region
          %p4108 = scmp.lt.s32.totalorder %s41, 1
          %s4109 = scalar_select %p4108, %s41, 1
          %s4110 = smul.addr %s4109, 2
          %s4111 = smul.addr %s4110, 8
          %s4112 = scalar_lea.vmem %s20, %s4111
        $region140: #{multiview_net_forward.1} parent=135 // pred_fallthru
          _
        // Predicated region
        $region141: #{multiview_net_forward.1} parent=135 // pred_check
          %p4113 = pneg %p515
        $region142: #{multiview_net_forward.1} parent=135 // pred_check_branch
          %4115 = sbr.rel (%p4113) target = $region144
        $region143: #{multiview_net_forward.1} parent=135 // pred_region
          %s4116 = sand.u32 %s500, 1
          %s4117 = scalar_lea.sflag [#allocation11], %s4116
          %s4118 = sand.u32 %s500, 1
          %s4119 = scalar_lea.vmem [#allocation20], %s4118
          %4120 = dma.done %s4117, 16
        $region144: #{multiview_net_forward.1} parent=135 // pred_fallthru
          _
      $region136: #{multiview_net_forward.1} parent=5 // pred_fallthru
        _
    $region6: #{multiview_net_forward.1} parent=1 // loop_footer
      %s39 = sadd.s32 1, %s35
    $region7: #{multiview_net_forward.1} parent=1 // loop_footer_branch
      %34 = sbr.rel target = $region3
    $region8: #{multiview_net_forward.1} parent=1 // loop_exit
      _
    %4121 = vsyncpa [#allocation10], 1
    %s4122 = scalar_lea.sflag [#allocation10], 1
    %4123 = vsyncpa %s4122, 1
    %4124 = vsyncpa [#allocation13], 1
    %4125 = vsyncpa [#allocation16], 1
    %4126 = vsyncpa [#allocation19], 1
    %4127 = vsyncpa [#allocation11], 1
    %s4128 = scalar_lea.sflag [#allocation11], 1
    %4129 = vsyncpa %s4128, 1

</llo_original>
